<compile_context>
chip_gen: v7x
topology: tpu7x:2x2x1
jax: 0.10.0
libtpu: 0.0.40
codegen_flags: <defaults>
</compile_context>

<pallas_src>
import functools

import numpy as np
import jax
import jax.numpy as jnp
from jax import lax
from jax.experimental import pallas as pl
from jax.experimental.pallas import tpu as pltpu

_LANE = 128
_SUBLANE = 8
_SELU_ALPHA = 1.6732632423543772
_SELU_SCALE = 1.0507009873554805


def _round_up(x, m):
    return ((x + m - 1) // m) * m


def _selu(x):
    return _SELU_SCALE * jnp.where(x > 0, x, _SELU_ALPHA * (jnp.exp(x) - 1.0))


# -----------------------------------------------------------------------------
# Fused Pallas kernel: serial LSTM recurrence over one S-chunk + both MLP heads
# as an epilogue on that chunk's hidden states.
#
#   xg_ref : (chunk_s*Bp, 4*Hp) f32   x_t @ W_ih + (b_ih + b_hh), gate slabs
#                                     packed [i|f|o|g], each 128-lane aligned
#   whh_ref: (Hp, 4*Hp)        bf16   recurrent weights (padding rows/cols = 0)
#   w1..b3 :                   block-diagonal [loc | tim] head weights,
#                              every slab 128-lane padded, biases f32
#   lout_ref: (chunk_s*Bp, locp) f32  softmax probabilities (padded lanes = 0)
#   tout_ref: (chunk_s*Bp, 128)  f32  exp(time logit) in lane 0
#   hid_ref : VMEM scratch, hidden states of this chunk (never touches HBM)
#   h_scr/c_scr: VMEM carries across the sequential S-chunk grid
# -----------------------------------------------------------------------------
def _lstm_heads_kernel(xg_ref, whh_ref, w1_ref, b1_ref, w2_ref, b2_ref,
                       w3_ref, b3_ref, lout_ref, tout_ref,
                       hid_ref, h_scr, c_scr, *, bp, lp1, lp2, locp):
    rows, G = xg_ref.shape                   # rows = chunk_s * bp
    Hp = G // 4
    chunk_s = rows // bp

    @pl.when(pl.program_id(0) == 0)
    def _init():
        h_scr[...] = jnp.zeros_like(h_scr)
        c_scr[...] = jnp.zeros_like(c_scr)

    # ---- serial LSTM recurrence over this chunk ------------------------------
    def step(t, carry):
        h, c = carry
        off = pl.multiple_of(t * bp, bp)     # bp is a multiple of 8 -> aligned
        g = xg_ref[pl.ds(off, bp), :] + jnp.dot(
            h.astype(jnp.bfloat16), whh_ref[...],
            preferred_element_type=jnp.float32)
        # gate slabs packed [i | f | o | g]: one sigmoid over 3*Hp, one tanh.
        sig = jax.nn.sigmoid(g[:, :3 * Hp])
        g_g = jnp.tanh(g[:, 3 * Hp:])
        i_g = sig[:, 0 * Hp:1 * Hp]
        f_g = sig[:, 1 * Hp:2 * Hp]
        o_g = sig[:, 2 * Hp:3 * Hp]
        c_new = f_g * c + i_g * g_g
        h_new = o_g * jnp.tanh(c_new)
        hid_ref[pl.ds(off, bp), :] = h_new   # stays in VMEM; heads read it below
        return h_new, c_new

    # TODO(synk): keep W_hh resident in MXU weight registers across timesteps
    # (pltpu.matmul_push_rhs once + matmul_acc_lhs/matmul_pop per step).
    h_last, c_last = lax.fori_loop(0, chunk_s, step, (h_scr[...], c_scr[...]),
                                   unroll=(True if chunk_s <= 16 else 8))
    h_scr[...] = h_last
    c_scr[...] = c_last

    # ---- fused location/time heads over the whole chunk ----------------------
    hid = hid_ref[...].astype(jnp.bfloat16)                      # (rows, Hp)

    a1 = jnp.dot(hid, w1_ref[...], preferred_element_type=jnp.float32) + b1_ref[...]
    act1 = jnp.concatenate(
        [_selu(a1[:, :lp1]), jnp.maximum(a1[:, lp1:], 0.0)], axis=-1
    ).astype(jnp.bfloat16)

    a2 = jnp.dot(act1, w2_ref[...], preferred_element_type=jnp.float32) + b2_ref[...]
    act2 = jnp.concatenate(
        [_selu(a2[:, :lp2]), jnp.maximum(a2[:, lp2:], 0.0)], axis=-1
    ).astype(jnp.bfloat16)

    a3 = jnp.dot(act2, w3_ref[...], preferred_element_type=jnp.float32) + b3_ref[...]

    # location branch: exact, numerically stable softmax.  Padded logits carry
    # a -1e30 bias -> exp underflows to exactly 0, so real lanes sum to 1.
    logits = a3[:, :locp]
    m = jnp.max(logits, axis=-1, keepdims=True)
    e = jnp.exp(logits - m)
    lout_ref[...] = e / jnp.sum(e, axis=-1, keepdims=True)

    # time branch: exp of the last linear output (lane 0 of the tim slab).
    tout_ref[...] = jnp.exp(a3[:, locp:])
    # TODO(synk): for very large loc_size, tile the locp axis (two-pass softmax)
    # instead of materialising the full (rows, locp) block in VMEM.


def lstm_heads_fused(xg_flat, packed, chunk_s, bp):
    """xg_flat: (S_pad*Bp, 4*Hp) f32, row index = s*Bp + b."""
    rows_total, G = xg_flat.shape
    Hp = G // 4
    chunk_rows = chunk_s * bp
    lp1, lp2 = packed["lp1"], packed["lp2"]
    locp, toutp = packed["locp"], packed["toutp"]
    w_hh = packed["w_hh"]
    w1, b1, w2, b2, w3, b3 = (packed[k] for k in ("w1", "b1", "w2", "b2", "w3", "b3"))

    def const_spec(arr):
        # Full-array block, constant index -> stays VMEM-resident across chunks.
        return pl.BlockSpec(arr.shape, lambda i: (0, 0))

    kernel = functools.partial(_lstm_heads_kernel, bp=bp, lp1=lp1, lp2=lp2, locp=locp)
    grid = (rows_total // chunk_rows,)
    # TODO(synk): on v7x, add a leading core-parallel grid axis over the batch
    # (each TensorCore runs B/2 independent sequences) once B >= 16.
    return pl.pallas_call(
        kernel,
        out_shape=(jax.ShapeDtypeStruct((rows_total, locp), jnp.float32),
                   jax.ShapeDtypeStruct((rows_total, toutp), jnp.float32)),
        grid_spec=pltpu.PrefetchScalarGridSpec(
            num_scalar_prefetch=0,
            grid=grid,
            in_specs=[pl.BlockSpec((chunk_rows, G), lambda i: (i, 0)),
                      const_spec(w_hh),
                      const_spec(w1), const_spec(b1),
                      const_spec(w2), const_spec(b2),
                      const_spec(w3), const_spec(b3)],
            out_specs=(pl.BlockSpec((chunk_rows, locp), lambda i: (i, 0)),
                       pl.BlockSpec((chunk_rows, toutp), lambda i: (i, 0))),
            scratch_shapes=[pltpu.VMEM((chunk_rows, Hp), jnp.float32),
                            pltpu.VMEM((bp, Hp), jnp.float32),
                            pltpu.VMEM((bp, Hp), jnp.float32)]),
        compiler_params=pltpu.CompilerParams(
            dimension_semantics=("arbitrary",),          # h/c carry across chunks
            vmem_limit_bytes=64 * 1024 * 1024),
    )(xg_flat, w_hh, w1, b1, w2, b2, w3, b3)


# -----------------------------------------------------------------------------
# Glue: embeddings + sinusoidal absolute-time embedding (ABS_TIM_EMB semantics)
# -----------------------------------------------------------------------------
def abs_tim_emb_tm(x_tm, d_model):
    """x_tm: (S, B) float32 times (time-major).  Matches ABS_TIM_EMB.forward:
    sin on EVEN sequence positions, cos on ODD (reference slices dim 1 of
    (B, S, d_model), i.e. the sequence axis)."""
    a = jnp.floor(jnp.arange(d_model, dtype=jnp.float32) / 2.0) * 2.0
    freq = (2.0 * np.pi / 10080.0) * (a / d_model)                 # (d_model,)
    b = x_tm[:, :, None] * freq[None, None, :]                     # (S, B, d_model)
    s_even = (jnp.arange(x_tm.shape[0]) % 2 == 0)[:, None, None]
    return jnp.where(s_even, jnp.sin(b), jnp.cos(b))


def _embed_time_major(usr, loc, tim, params, cfg):
    usr_t = usr.T                                  # (S, B)
    loc_t = loc.T
    tim_t = tim.astype(jnp.float32).T
    userlist = params["USERLIST"]
    usr2id = jnp.argmax(usr_t[..., None] == userlist[None, None, :], axis=-1)
    usr_emb = jnp.take(params["emb_usr"], usr2id, axis=0)
    loc_emb = jnp.take(params["emb_loc"], loc_t, axis=0)
    tim_emb = abs_tim_emb_tm(tim_t, cfg["d_model"])
    # dropout -> identity (inference)
    return jnp.concatenate((tim_emb, usr_emb, loc_emb), axis=-1).astype(jnp.float32)


def lstmmodel_forward(usr, loc, tim, params, packed, cfg):
    z_tm = _embed_time_major(usr, loc, tim, params, cfg)           # (S, B, d_in)
    S, B, d_in = z_tm.shape
    Hp = packed["Hp"]

    # ---- hoisted input projection: one matmul over all S*B rows -------------
    xg = jnp.dot(z_tm.reshape(S * B, d_in).astype(jnp.bfloat16), packed["w_ih"],
                 preferred_element_type=jnp.float32) + packed["b_lstm"]
    xg_tm = xg.reshape(S, B, 4 * Hp)
    # TODO(synk): optionally store xg in bf16 to halve recurrence HBM traffic at
    # large S*B (validate the ~3-digit loss on gate preactivations first).

    # ---- pad batch to a sublane group, S to a whole number of chunks ---------
    Bp = _round_up(B, _SUBLANE)
    n_chunks = max(1, pl.cdiv(S, 32))
    chunk_s = pl.cdiv(S, n_chunks)
    S_pad = chunk_s * n_chunks
    xg_tm = jnp.pad(xg_tm, ((0, S_pad - S), (0, Bp - B), (0, 0)))
    xg_flat = xg_tm.reshape(S_pad * Bp, 4 * Hp)

    # ---- fused recurrence + heads (single Pallas call) -----------------------
    lout_flat, tout_flat = lstm_heads_fused(xg_flat, packed, chunk_s, Bp)

    loc_size = cfg["loc_size"]
    locp, toutp = packed["locp"], packed["toutp"]
    lout = lout_flat.reshape(S_pad, Bp, locp)[:S, :B, :loc_size].transpose(1, 0, 2)
    tout = tout_flat.reshape(S_pad, Bp, toutp)[:S, :B, 0].T        # squeeze(-1)
    return lout, tout


# -----------------------------------------------------------------------------
# Pure-JAX f32 reference (mirrors the PyTorch module, inference)
# -----------------------------------------------------------------------------
def reference_forward(usr, loc, tim, params, cfg):
    z = _embed_time_major(usr, loc, tim, params, cfg)              # (S, B, d_in)
    H = cfg["hidden"]
    B = usr.shape[0]
    w_ih, w_hh, b = params["w_ih"], params["w_hh"], params["b_lstm"]

    def step(carry, x_t):
        h, c = carry
        g = x_t @ w_ih + h @ w_hh + b                              # i,f,g,o
        i_g = jax.nn.sigmoid(g[:, 0 * H:1 * H])
        f_g = jax.nn.sigmoid(g[:, 1 * H:2 * H])
        g_g = jnp.tanh(g[:, 2 * H:3 * H])
        o_g = jax.nn.sigmoid(g[:, 3 * H:4 * H])
        c = f_g * c + i_g * g_g
        h = o_g * jnp.tanh(c)
        return (h, c), h

    init = (jnp.zeros((B, H), jnp.float32), jnp.zeros((B, H), jnp.float32))
    _, hid = lax.scan(step, init, z)                               # (S, B, H)

    l1 = _selu(hid @ params["wl1"] + params["bl1"])
    l2 = _selu(l1 @ params["wl2"] + params["bl2"])
    lout = jax.nn.softmax(l2 @ params["wl3"] + params["bl3"], axis=-1)
    t1 = jnp.maximum(hid @ params["wt1"] + params["bt1"], 0.0)
    t2 = jnp.maximum(t1 @ params["wt2"] + params["bt2"], 0.0)
    tout = jnp.exp(t2 @ params["wt3"] + params["bt3"])[..., 0]
    return lout.transpose(1, 0, 2), tout.T


# -----------------------------------------------------------------------------
# Deterministic parameter construction + packing into lane-padded kernel layout
# -----------------------------------------------------------------------------
def make_params(cfg, key):
    ks = iter(jax.random.split(key, 32))
    d_in = cfg["d_model"] + cfg["usr_emb_size"] + cfg["loc_emb_size"]
    H = cfg["hidden"]

    def rnd(shape, scale=0.1):
        return (scale * jax.random.normal(next(ks), shape)).astype(jnp.float32)

    p = {
        "USERLIST": jnp.asarray(np.append(-1, np.arange(cfg["usr_size"])), jnp.int32),
        "emb_usr": rnd((cfg["usr_size"] + 1, cfg["usr_emb_size"]), 1.0),
        "emb_loc": rnd((cfg["loc_size"], cfg["loc_emb_size"]), 1.0),
        # LSTM weights stored as (in, 4H), gate order i,f,g,o (PyTorch);
        # b = b_ih + b_hh merged.
        "w_ih": rnd((d_in, 4 * H)),
        "w_hh": rnd((H, 4 * H)),
        "b_lstm": rnd((1, 4 * H)),
        # Linear layers stored as (in, out) (PyTorch weight transposed).
        "wl1": rnd((H, cfg["loc_h1"])), "bl1": rnd((1, cfg["loc_h1"])),
        "wl2": rnd((cfg["loc_h1"], cfg["loc_h2"])), "bl2": rnd((1, cfg["loc_h2"])),
        "wl3": rnd((cfg["loc_h2"], cfg["loc_size"])), "bl3": rnd((1, cfg["loc_size"])),
        "wt1": rnd((H, cfg["tim_h1"])), "bt1": rnd((1, cfg["tim_h1"])),
        "wt2": rnd((cfg["tim_h1"], cfg["tim_h2"])), "bt2": rnd((1, cfg["tim_h2"])),
        "wt3": rnd((cfg["tim_h2"], 1)), "bt3": rnd((1, 1)),
    }
    # TODO(synk): PyTorch uses nn.init.orthogonal_ for Linear weights; synthetic
    # Gaussian init is used here (no checkpoint to convert).
    return p


def prepare_packed(params, cfg):
    """Pad/fuse weights into lane-aligned kernel layout (done once, host side)."""
    H = cfg["hidden"]
    Hp = _round_up(H, _LANE)
    d_in = cfg["d_model"] + cfg["usr_emb_size"] + cfg["loc_emb_size"]
    lh1, lh2 = cfg["loc_h1"], cfg["loc_h2"]
    th1, th2 = cfg["tim_h1"], cfg["tim_h2"]
    lp1, tp1 = _round_up(lh1, _LANE), _round_up(th1, _LANE)
    lp2, tp2 = _round_up(lh2, _LANE), _round_up(th2, _LANE)
    locp = _round_up(cfg["loc_size"], _LANE)
    toutp = _LANE

    def pad_gates(w, rows_in, rows_out):
        # (rows_in, 4*H) PyTorch gate order [i|f|g|o] -> (rows_out, 4*Hp) packed
        # order [i|f|o|g] (sigmoid gates contiguous), each gate slab 128-lane
        # aligned, zero padding (keeps padded h/c lanes at 0).
        w4 = w.reshape(rows_in, 4, H)[:, jnp.array([0, 1, 3, 2]), :]
        out = jnp.zeros((rows_out, 4, Hp), jnp.float32)
        out = out.at[:rows_in, :, :H].set(w4)
        return out.reshape(rows_out, 4 * Hp)

    w_ih_p = pad_gates(params["w_ih"], d_in, d_in)
    w_hh_p = pad_gates(params["w_hh"], H, Hp)
    b_p = pad_gates(params["b_lstm"], 1, 1)

    # Fused heads: block-diagonal [loc | tim], each slab padded to 128 lanes.
    w1 = jnp.zeros((Hp, lp1 + tp1), jnp.float32)
    w1 = w1.at[:H, :lh1].set(params["wl1"]).at[:H, lp1:lp1 + th1].set(params["wt1"])
    b1 = jnp.zeros((1, lp1 + tp1), jnp.float32)
    b1 = b1.at[:, :lh1].set(params["bl1"]).at[:, lp1:lp1 + th1].set(params["bt1"])

    w2 = jnp.zeros((lp1 + tp1, lp2 + tp2), jnp.float32)
    w2 = w2.at[:lh1, :lh2].set(params["wl2"])
    w2 = w2.at[lp1:lp1 + th1, lp2:lp2 + th2].set(params["wt2"])
    b2 = jnp.zeros((1, lp2 + tp2), jnp.float32)
    b2 = b2.at[:, :lh2].set(params["bl2"]).at[:, lp2:lp2 + th2].set(params["bt2"])

    w3 = jnp.zeros((lp2 + tp2, locp + toutp), jnp.float32)
    w3 = w3.at[:lh2, :cfg["loc_size"]].set(params["wl3"])
    w3 = w3.at[lp2:lp2 + th2, locp:locp + 1].set(params["wt3"])
    b3 = jnp.zeros((1, locp + toutp), jnp.float32)
    b3 = b3.at[:, :cfg["loc_size"]].set(params["bl3"])
    b3 = b3.at[:, cfg["loc_size"]:locp].set(-1e30)   # padded logits -> softmax 0
    b3 = b3.at[:, locp:locp + 1].set(params["bt3"])

    bf = jnp.bfloat16   # matmul operands in bf16; biases stay f32 (post-acc add)
    return {
        "Hp": Hp, "lp1": lp1, "lp2": lp2, "locp": locp, "toutp": toutp,
        "w_ih": w_ih_p.astype(bf), "w_hh": w_hh_p.astype(bf), "b_lstm": b_p,
        "w1": w1.astype(bf), "b1": b1,
        "w2": w2.astype(bf), "b2": b2,
        "w3": w3.astype(bf), "b3": b3,
    }


if __name__ == "__main__":
    cfg = dict(
        d_model=16, usr_emb_size=8, loc_emb_size=8,
        hidden=32,
        loc_h1=32, loc_h2=32, loc_size=64,
        tim_h1=16, tim_h2=16,
        usr_size=10,
    )
    B, S = 2, 8

    key = jax.random.PRNGKey(0)
    k_usr, k_loc, k_tim, k_par = jax.random.split(key, 4)
    usr = jax.random.randint(k_usr, (B, S), 0, cfg["usr_size"], dtype=jnp.int32)
    loc = jax.random.randint(k_loc, (B, S), 0, cfg["loc_size"], dtype=jnp.int32)
    tim = jax.random.uniform(k_tim, (B, S), minval=0.0, maxval=10080.0,
                             dtype=jnp.float32)

    params = make_params(cfg, k_par)
    packed = prepare_packed(params, cfg)

    fwd = jax.jit(lambda u, l, t: lstmmodel_forward(u, l, t, params, packed, cfg))
    lout, tout = fwd(usr, loc, tim)
    jax.block_until_ready((lout, tout))

    assert lout.shape == (B, S, cfg["loc_size"])
    assert tout.shape == (B, S)

    lout_np, tout_np = np.asarray(lout), np.asarray(tout)
    # Exact softmax normalisation inside the kernel -> rows sum to 1.
    assert np.allclose(lout_np.sum(-1), 1.0, atol=1e-3)
    assert np.all(tout_np > 0)

    # Pure-JAX f32 reference (kernel uses bf16 MXU operands -> relaxed tolerance).
    lref, tref = jax.jit(
        lambda u, l, t: reference_forward(u, l, t, params, cfg))(usr, loc, tim)
    jax.block_until_ready((lref, tref))
    assert np.allclose(lout_np, np.asarray(lref), atol=1e-2)
    assert np.allclose(tout_np, np.asarray(tref), rtol=5e-2, atol=1e-3)

    print("KERNEL_OK")
</pallas_src>

<mosaic_0001>
module attributes {stable_mosaic.version = 11 : i64} {
  func.func @_lstm_heads_kernel(%arg0: i32, %arg1: memref<64x512xf32, #tpu.memory_space<vmem>>, %arg2: memref<128x512xbf16, #tpu.memory_space<vmem>>, %arg3: memref<128x256xbf16, #tpu.memory_space<vmem>>, %arg4: memref<1x256xf32, #tpu.memory_space<vmem>>, %arg5: memref<256x256xbf16, #tpu.memory_space<vmem>>, %arg6: memref<1x256xf32, #tpu.memory_space<vmem>>, %arg7: memref<256x256xbf16, #tpu.memory_space<vmem>>, %arg8: memref<1x256xf32, #tpu.memory_space<vmem>>, %arg9: memref<64x128xf32, #tpu.memory_space<vmem>>, %arg10: memref<64x128xf32, #tpu.memory_space<vmem>>, %arg11: memref<64x128xf32, #tpu.memory_space<vmem>>, %arg12: memref<8x128xf32, #tpu.memory_space<vmem>>, %arg13: memref<8x128xf32, #tpu.memory_space<vmem>>) attributes {dimension_semantics = [#tpu.dimension_semantics<arbitrary>], iteration_bounds = array<i64: 1>, scalar_prefetch = 0 : i64, scratch_operands = 3 : i64, tpu.core_type = #tpu.core_type<tc>, window_params = [{transform_indices = @transform_0, window_bounds = array<i64: 64, 512>}, {pipeline_mode = #tpu.pipeline_mode<synchronous>, transform_indices = @transform_1, window_bounds = array<i64: 128, 512>}, {pipeline_mode = #tpu.pipeline_mode<synchronous>, transform_indices = @transform_2, window_bounds = array<i64: 128, 256>}, {pipeline_mode = #tpu.pipeline_mode<synchronous>, transform_indices = @transform_3, window_bounds = array<i64: 1, 256>}, {pipeline_mode = #tpu.pipeline_mode<synchronous>, transform_indices = @transform_4, window_bounds = array<i64: 256, 256>}, {pipeline_mode = #tpu.pipeline_mode<synchronous>, transform_indices = @transform_5, window_bounds = array<i64: 1, 256>}, {pipeline_mode = #tpu.pipeline_mode<synchronous>, transform_indices = @transform_6, window_bounds = array<i64: 256, 256>}, {pipeline_mode = #tpu.pipeline_mode<synchronous>, transform_indices = @transform_7, window_bounds = array<i64: 1, 256>}, {transform_indices = @transform_8, window_bounds = array<i64: 64, 128>}, {transform_indices = @transform_9, window_bounds = array<i64: 64, 128>}]} {
    %c0_i32 = arith.constant 0 : i32
    %0 = arith.cmpi eq, %arg0, %c0_i32 : i32
    %1 = arith.extui %0 : i1 to i32
    %c0_i32_0 = arith.constant 0 : i32
    %2 = arith.cmpi ne, %1, %c0_i32_0 : i32
    scf.if %2 {
      %cst_97 = arith.constant 0.000000e+00 : f32
      %278 = vector.broadcast %cst_97 : f32 to vector<8x128xf32>
      %c0_98 = arith.constant 0 : index
      %c0_99 = arith.constant 0 : index
      %279 = vector.load %arg12[%c0_98, %c0_99] : memref<8x128xf32, #tpu.memory_space<vmem>>, vector<8x128xf32>
      tpu.vector_store %arg12[%c0_98, %c0_99], %278 {strides = array<i32>} : memref<8x128xf32, #tpu.memory_space<vmem>>, vector<8x128xf32>,
      %cst_100 = arith.constant 0.000000e+00 : f32
      %280 = vector.broadcast %cst_100 : f32 to vector<8x128xf32>
      %c0_101 = arith.constant 0 : index
      %c0_102 = arith.constant 0 : index
      %281 = vector.load %arg13[%c0_101, %c0_102] : memref<8x128xf32, #tpu.memory_space<vmem>>, vector<8x128xf32>
      tpu.vector_store %arg13[%c0_101, %c0_102], %280 {strides = array<i32>} : memref<8x128xf32, #tpu.memory_space<vmem>>, vector<8x128xf32>,
    } else {
    }
    %c0 = arith.constant 0 : index
    %c0_1 = arith.constant 0 : index
    %3 = vector.load %arg12[%c0, %c0_1] : memref<8x128xf32, #tpu.memory_space<vmem>>, vector<8x128xf32>
    %c0_2 = arith.constant 0 : index
    %c0_3 = arith.constant 0 : index
    %4 = vector.load %arg13[%c0_2, %c0_3] : memref<8x128xf32, #tpu.memory_space<vmem>>, vector<8x128xf32>
    %c0_i32_4 = arith.constant 0 : i32
    %c8_i32 = arith.constant 8 : i32
    %5 = arith.muli %c0_i32_4, %c8_i32 : i32
    %6 = tpu.assume_multiple %5, 8 : i32
    %7 = arith.index_cast %6 : i32 to index
    %c0_5 = arith.constant 0 : index
    %8 = vector.load %arg1[%7, %c0_5] : memref<64x512xf32, #tpu.memory_space<vmem>>, vector<8x512xf32>
    %9 = arith.truncf %3 : vector<8x128xf32> to vector<8x128xbf16>
    %c0_6 = arith.constant 0 : index
    %c0_7 = arith.constant 0 : index
    %10 = vector.load %arg2[%c0_6, %c0_7] : memref<128x512xbf16, #tpu.memory_space<vmem>>, vector<128x512xbf16>
    %cst = arith.constant dense<0.000000e+00> : vector<8x512xf32>
    %11 = tpu.matmul %9, %10, %cst {dimension_numbers = #tpu.dot_dimension_numbers<[1], [0], [0], [1], [0, 0, 1, 1], [], []>} : vector<8x128xbf16>, vector<128x512xbf16>, vector<8x512xf32> -> vector<8x512xf32>
    %12 = arith.addf %8, %11 : vector<8x512xf32>
    %13 = vector.extract_strided_slice %12 {offsets = [0, 0], sizes = [8, 384], strides = [1, 1]} : vector<8x512xf32> to vector<8x384xf32>
    %14 = arith.negf %13 : vector<8x384xf32>
    %15 = math.exp %14 : vector<8x384xf32>
    %cst_8 = arith.constant 1.000000e+00 : f32
    %16 = vector.broadcast %cst_8 : f32 to vector<8x384xf32>
    %17 = arith.addf %16, %15 : vector<8x384xf32>
    %18 = arith.divf %16, %17 : vector<8x384xf32>
    %19 = vector.extract_strided_slice %12 {offsets = [0, 384], sizes = [8, 128], strides = [1, 1]} : vector<8x512xf32> to vector<8x128xf32>
    %20 = math.tanh %19 : vector<8x128xf32>
    %21 = vector.extract_strided_slice %18 {offsets = [0, 0], sizes = [8, 128], strides = [1, 1]} : vector<8x384xf32> to vector<8x128xf32>
    %22 = vector.extract_strided_slice %18 {offsets = [0, 128], sizes = [8, 128], strides = [1, 1]} : vector<8x384xf32> to vector<8x128xf32>
    %23 = vector.extract_strided_slice %18 {offsets = [0, 256], sizes = [8, 128], strides = [1, 1]} : vector<8x384xf32> to vector<8x128xf32>
    %24 = arith.mulf %22, %4 : vector<8x128xf32>
    %25 = arith.mulf %21, %20 : vector<8x128xf32>
    %26 = arith.addf %24, %25 : vector<8x128xf32>
    %27 = math.tanh %26 : vector<8x128xf32>
    %28 = arith.mulf %23, %27 : vector<8x128xf32>
    %29 = arith.index_cast %6 : i32 to index
    %c0_9 = arith.constant 0 : index
    %30 = vector.load %arg11[%29, %c0_9] : memref<64x128xf32, #tpu.memory_space<vmem>>, vector<8x128xf32>
    tpu.vector_store %arg11[%29, %c0_9], %28 {strides = array<i32>} : memref<64x128xf32, #tpu.memory_space<vmem>>, vector<8x128xf32>,
    %c1_i32 = arith.constant 1 : i32
    %c8_i32_10 = arith.constant 8 : i32
    %31 = arith.muli %c1_i32, %c8_i32_10 : i32
    %32 = tpu.assume_multiple %31, 8 : i32
    %33 = arith.index_cast %32 : i32 to index
    %c0_11 = arith.constant 0 : index
    %34 = vector.load %arg1[%33, %c0_11] : memref<64x512xf32, #tpu.memory_space<vmem>>, vector<8x512xf32>
    %35 = arith.truncf %28 : vector<8x128xf32> to vector<8x128xbf16>
    %c0_12 = arith.constant 0 : index
    %c0_13 = arith.constant 0 : index
    %36 = vector.load %arg2[%c0_12, %c0_13] : memref<128x512xbf16, #tpu.memory_space<vmem>>, vector<128x512xbf16>
    %cst_14 = arith.constant dense<0.000000e+00> : vector<8x512xf32>
    %37 = tpu.matmul %35, %36, %cst_14 {dimension_numbers = #tpu.dot_dimension_numbers<[1], [0], [0], [1], [0, 0, 1, 1], [], []>} : vector<8x128xbf16>, vector<128x512xbf16>, vector<8x512xf32> -> vector<8x512xf32>
    %38 = arith.addf %34, %37 : vector<8x512xf32>
    %39 = vector.extract_strided_slice %38 {offsets = [0, 0], sizes = [8, 384], strides = [1, 1]} : vector<8x512xf32> to vector<8x384xf32>
    %40 = arith.negf %39 : vector<8x384xf32>
    %41 = math.exp %40 : vector<8x384xf32>
    %cst_15 = arith.constant 1.000000e+00 : f32
    %42 = vector.broadcast %cst_15 : f32 to vector<8x384xf32>
    %43 = arith.addf %42, %41 : vector<8x384xf32>
    %44 = arith.divf %42, %43 : vector<8x384xf32>
    %45 = vector.extract_strided_slice %38 {offsets = [0, 384], sizes = [8, 128], strides = [1, 1]} : vector<8x512xf32> to vector<8x128xf32>
    %46 = math.tanh %45 : vector<8x128xf32>
    %47 = vector.extract_strided_slice %44 {offsets = [0, 0], sizes = [8, 128], strides = [1, 1]} : vector<8x384xf32> to vector<8x128xf32>
    %48 = vector.extract_strided_slice %44 {offsets = [0, 128], sizes = [8, 128], strides = [1, 1]} : vector<8x384xf32> to vector<8x128xf32>
    %49 = vector.extract_strided_slice %44 {offsets = [0, 256], sizes = [8, 128], strides = [1, 1]} : vector<8x384xf32> to vector<8x128xf32>
    %50 = arith.mulf %48, %26 : vector<8x128xf32>
    %51 = arith.mulf %47, %46 : vector<8x128xf32>
    %52 = arith.addf %50, %51 : vector<8x128xf32>
    %53 = math.tanh %52 : vector<8x128xf32>
    %54 = arith.mulf %49, %53 : vector<8x128xf32>
    %55 = arith.index_cast %32 : i32 to index
    %c0_16 = arith.constant 0 : index
    %56 = vector.load %arg11[%55, %c0_16] : memref<64x128xf32, #tpu.memory_space<vmem>>, vector<8x128xf32>
    tpu.vector_store %arg11[%55, %c0_16], %54 {strides = array<i32>} : memref<64x128xf32, #tpu.memory_space<vmem>>, vector<8x128xf32>,
    %c2_i32 = arith.constant 2 : i32
    %c8_i32_17 = arith.constant 8 : i32
    %57 = arith.muli %c2_i32, %c8_i32_17 : i32
    %58 = tpu.assume_multiple %57, 8 : i32
    %59 = arith.index_cast %58 : i32 to index
    %c0_18 = arith.constant 0 : index
    %60 = vector.load %arg1[%59, %c0_18] : memref<64x512xf32, #tpu.memory_space<vmem>>, vector<8x512xf32>
    %61 = arith.truncf %54 : vector<8x128xf32> to vector<8x128xbf16>
    %c0_19 = arith.constant 0 : index
    %c0_20 = arith.constant 0 : index
    %62 = vector.load %arg2[%c0_19, %c0_20] : memref<128x512xbf16, #tpu.memory_space<vmem>>, vector<128x512xbf16>
    %cst_21 = arith.constant dense<0.000000e+00> : vector<8x512xf32>
    %63 = tpu.matmul %61, %62, %cst_21 {dimension_numbers = #tpu.dot_dimension_numbers<[1], [0], [0], [1], [0, 0, 1, 1], [], []>} : vector<8x128xbf16>, vector<128x512xbf16>, vector<8x512xf32> -> vector<8x512xf32>
    %64 = arith.addf %60, %63 : vector<8x512xf32>
    %65 = vector.extract_strided_slice %64 {offsets = [0, 0], sizes = [8, 384], strides = [1, 1]} : vector<8x512xf32> to vector<8x384xf32>
    %66 = arith.negf %65 : vector<8x384xf32>
    %67 = math.exp %66 : vector<8x384xf32>
    %cst_22 = arith.constant 1.000000e+00 : f32
    %68 = vector.broadcast %cst_22 : f32 to vector<8x384xf32>
    %69 = arith.addf %68, %67 : vector<8x384xf32>
    %70 = arith.divf %68, %69 : vector<8x384xf32>
    %71 = vector.extract_strided_slice %64 {offsets = [0, 384], sizes = [8, 128], strides = [1, 1]} : vector<8x512xf32> to vector<8x128xf32>
    %72 = math.tanh %71 : vector<8x128xf32>
    %73 = vector.extract_strided_slice %70 {offsets = [0, 0], sizes = [8, 128], strides = [1, 1]} : vector<8x384xf32> to vector<8x128xf32>
    %74 = vector.extract_strided_slice %70 {offsets = [0, 128], sizes = [8, 128], strides = [1, 1]} : vector<8x384xf32> to vector<8x128xf32>
    %75 = vector.extract_strided_slice %70 {offsets = [0, 256], sizes = [8, 128], strides = [1, 1]} : vector<8x384xf32> to vector<8x128xf32>
    %76 = arith.mulf %74, %52 : vector<8x128xf32>
    %77 = arith.mulf %73, %72 : vector<8x128xf32>
    %78 = arith.addf %76, %77 : vector<8x128xf32>
    %79 = math.tanh %78 : vector<8x128xf32>
    %80 = arith.mulf %75, %79 : vector<8x128xf32>
    %81 = arith.index_cast %58 : i32 to index
    %c0_23 = arith.constant 0 : index
    %82 = vector.load %arg11[%81, %c0_23] : memref<64x128xf32, #tpu.memory_space<vmem>>, vector<8x128xf32>
    tpu.vector_store %arg11[%81, %c0_23], %80 {strides = array<i32>} : memref<64x128xf32, #tpu.memory_space<vmem>>, vector<8x128xf32>,
    %c3_i32 = arith.constant 3 : i32
    %c8_i32_24 = arith.constant 8 : i32
    %83 = arith.muli %c3_i32, %c8_i32_24 : i32
    %84 = tpu.assume_multiple %83, 8 : i32
    %85 = arith.index_cast %84 : i32 to index
    %c0_25 = arith.constant 0 : index
    %86 = vector.load %arg1[%85, %c0_25] : memref<64x512xf32, #tpu.memory_space<vmem>>, vector<8x512xf32>
    %87 = arith.truncf %80 : vector<8x128xf32> to vector<8x128xbf16>
    %c0_26 = arith.constant 0 : index
    %c0_27 = arith.constant 0 : index
    %88 = vector.load %arg2[%c0_26, %c0_27] : memref<128x512xbf16, #tpu.memory_space<vmem>>, vector<128x512xbf16>
    %cst_28 = arith.constant dense<0.000000e+00> : vector<8x512xf32>
    %89 = tpu.matmul %87, %88, %cst_28 {dimension_numbers = #tpu.dot_dimension_numbers<[1], [0], [0], [1], [0, 0, 1, 1], [], []>} : vector<8x128xbf16>, vector<128x512xbf16>, vector<8x512xf32> -> vector<8x512xf32>
    %90 = arith.addf %86, %89 : vector<8x512xf32>
    %91 = vector.extract_strided_slice %90 {offsets = [0, 0], sizes = [8, 384], strides = [1, 1]} : vector<8x512xf32> to vector<8x384xf32>
    %92 = arith.negf %91 : vector<8x384xf32>
    %93 = math.exp %92 : vector<8x384xf32>
    %cst_29 = arith.constant 1.000000e+00 : f32
    %94 = vector.broadcast %cst_29 : f32 to vector<8x384xf32>
    %95 = arith.addf %94, %93 : vector<8x384xf32>
    %96 = arith.divf %94, %95 : vector<8x384xf32>
    %97 = vector.extract_strided_slice %90 {offsets = [0, 384], sizes = [8, 128], strides = [1, 1]} : vector<8x512xf32> to vector<8x128xf32>
    %98 = math.tanh %97 : vector<8x128xf32>
    %99 = vector.extract_strided_slice %96 {offsets = [0, 0], sizes = [8, 128], strides = [1, 1]} : vector<8x384xf32> to vector<8x128xf32>
    %100 = vector.extract_strided_slice %96 {offsets = [0, 128], sizes = [8, 128], strides = [1, 1]} : vector<8x384xf32> to vector<8x128xf32>
    %101 = vector.extract_strided_slice %96 {offsets = [0, 256], sizes = [8, 128], strides = [1, 1]} : vector<8x384xf32> to vector<8x128xf32>
    %102 = arith.mulf %100, %78 : vector<8x128xf32>
    %103 = arith.mulf %99, %98 : vector<8x128xf32>
    %104 = arith.addf %102, %103 : vector<8x128xf32>
    %105 = math.tanh %104 : vector<8x128xf32>
    %106 = arith.mulf %101, %105 : vector<8x128xf32>
    %107 = arith.index_cast %84 : i32 to index
    %c0_30 = arith.constant 0 : index
    %108 = vector.load %arg11[%107, %c0_30] : memref<64x128xf32, #tpu.memory_space<vmem>>, vector<8x128xf32>
    tpu.vector_store %arg11[%107, %c0_30], %106 {strides = array<i32>} : memref<64x128xf32, #tpu.memory_space<vmem>>, vector<8x128xf32>,
    %c4_i32 = arith.constant 4 : i32
    %c8_i32_31 = arith.constant 8 : i32
    %109 = arith.muli %c4_i32, %c8_i32_31 : i32
    %110 = tpu.assume_multiple %109, 8 : i32
    %111 = arith.index_cast %110 : i32 to index
    %c0_32 = arith.constant 0 : index
    %112 = vector.load %arg1[%111, %c0_32] : memref<64x512xf32, #tpu.memory_space<vmem>>, vector<8x512xf32>
    %113 = arith.truncf %106 : vector<8x128xf32> to vector<8x128xbf16>
    %c0_33 = arith.constant 0 : index
    %c0_34 = arith.constant 0 : index
    %114 = vector.load %arg2[%c0_33, %c0_34] : memref<128x512xbf16, #tpu.memory_space<vmem>>, vector<128x512xbf16>
    %cst_35 = arith.constant dense<0.000000e+00> : vector<8x512xf32>
    %115 = tpu.matmul %113, %114, %cst_35 {dimension_numbers = #tpu.dot_dimension_numbers<[1], [0], [0], [1], [0, 0, 1, 1], [], []>} : vector<8x128xbf16>, vector<128x512xbf16>, vector<8x512xf32> -> vector<8x512xf32>
    %116 = arith.addf %112, %115 : vector<8x512xf32>
    %117 = vector.extract_strided_slice %116 {offsets = [0, 0], sizes = [8, 384], strides = [1, 1]} : vector<8x512xf32> to vector<8x384xf32>
    %118 = arith.negf %117 : vector<8x384xf32>
    %119 = math.exp %118 : vector<8x384xf32>
    %cst_36 = arith.constant 1.000000e+00 : f32
    %120 = vector.broadcast %cst_36 : f32 to vector<8x384xf32>
    %121 = arith.addf %120, %119 : vector<8x384xf32>
    %122 = arith.divf %120, %121 : vector<8x384xf32>
    %123 = vector.extract_strided_slice %116 {offsets = [0, 384], sizes = [8, 128], strides = [1, 1]} : vector<8x512xf32> to vector<8x128xf32>
    %124 = math.tanh %123 : vector<8x128xf32>
    %125 = vector.extract_strided_slice %122 {offsets = [0, 0], sizes = [8, 128], strides = [1, 1]} : vector<8x384xf32> to vector<8x128xf32>
    %126 = vector.extract_strided_slice %122 {offsets = [0, 128], sizes = [8, 128], strides = [1, 1]} : vector<8x384xf32> to vector<8x128xf32>
    %127 = vector.extract_strided_slice %122 {offsets = [0, 256], sizes = [8, 128], strides = [1, 1]} : vector<8x384xf32> to vector<8x128xf32>
    %128 = arith.mulf %126, %104 : vector<8x128xf32>
    %129 = arith.mulf %125, %124 : vector<8x128xf32>
    %130 = arith.addf %128, %129 : vector<8x128xf32>
    %131 = math.tanh %130 : vector<8x128xf32>
    %132 = arith.mulf %127, %131 : vector<8x128xf32>
    %133 = arith.index_cast %110 : i32 to index
    %c0_37 = arith.constant 0 : index
    %134 = vector.load %arg11[%133, %c0_37] : memref<64x128xf32, #tpu.memory_space<vmem>>, vector<8x128xf32>
    tpu.vector_store %arg11[%133, %c0_37], %132 {strides = array<i32>} : memref<64x128xf32, #tpu.memory_space<vmem>>, vector<8x128xf32>,
    %c5_i32 = arith.constant 5 : i32
    %c8_i32_38 = arith.constant 8 : i32
    %135 = arith.muli %c5_i32, %c8_i32_38 : i32
    %136 = tpu.assume_multiple %135, 8 : i32
    %137 = arith.index_cast %136 : i32 to index
    %c0_39 = arith.constant 0 : index
    %138 = vector.load %arg1[%137, %c0_39] : memref<64x512xf32, #tpu.memory_space<vmem>>, vector<8x512xf32>
    %139 = arith.truncf %132 : vector<8x128xf32> to vector<8x128xbf16>
    %c0_40 = arith.constant 0 : index
    %c0_41 = arith.constant 0 : index
    %140 = vector.load %arg2[%c0_40, %c0_41] : memref<128x512xbf16, #tpu.memory_space<vmem>>, vector<128x512xbf16>
    %cst_42 = arith.constant dense<0.000000e+00> : vector<8x512xf32>
    %141 = tpu.matmul %139, %140, %cst_42 {dimension_numbers = #tpu.dot_dimension_numbers<[1], [0], [0], [1], [0, 0, 1, 1], [], []>} : vector<8x128xbf16>, vector<128x512xbf16>, vector<8x512xf32> -> vector<8x512xf32>
    %142 = arith.addf %138, %141 : vector<8x512xf32>
    %143 = vector.extract_strided_slice %142 {offsets = [0, 0], sizes = [8, 384], strides = [1, 1]} : vector<8x512xf32> to vector<8x384xf32>
    %144 = arith.negf %143 : vector<8x384xf32>
    %145 = math.exp %144 : vector<8x384xf32>
    %cst_43 = arith.constant 1.000000e+00 : f32
    %146 = vector.broadcast %cst_43 : f32 to vector<8x384xf32>
    %147 = arith.addf %146, %145 : vector<8x384xf32>
    %148 = arith.divf %146, %147 : vector<8x384xf32>
    %149 = vector.extract_strided_slice %142 {offsets = [0, 384], sizes = [8, 128], strides = [1, 1]} : vector<8x512xf32> to vector<8x128xf32>
    %150 = math.tanh %149 : vector<8x128xf32>
    %151 = vector.extract_strided_slice %148 {offsets = [0, 0], sizes = [8, 128], strides = [1, 1]} : vector<8x384xf32> to vector<8x128xf32>
    %152 = vector.extract_strided_slice %148 {offsets = [0, 128], sizes = [8, 128], strides = [1, 1]} : vector<8x384xf32> to vector<8x128xf32>
    %153 = vector.extract_strided_slice %148 {offsets = [0, 256], sizes = [8, 128], strides = [1, 1]} : vector<8x384xf32> to vector<8x128xf32>
    %154 = arith.mulf %152, %130 : vector<8x128xf32>
    %155 = arith.mulf %151, %150 : vector<8x128xf32>
    %156 = arith.addf %154, %155 : vector<8x128xf32>
    %157 = math.tanh %156 : vector<8x128xf32>
    %158 = arith.mulf %153, %157 : vector<8x128xf32>
    %159 = arith.index_cast %136 : i32 to index
    %c0_44 = arith.constant 0 : index
    %160 = vector.load %arg11[%159, %c0_44] : memref<64x128xf32, #tpu.memory_space<vmem>>, vector<8x128xf32>
    tpu.vector_store %arg11[%159, %c0_44], %158 {strides = array<i32>} : memref<64x128xf32, #tpu.memory_space<vmem>>, vector<8x128xf32>,
    %c6_i32 = arith.constant 6 : i32
    %c8_i32_45 = arith.constant 8 : i32
    %161 = arith.muli %c6_i32, %c8_i32_45 : i32
    %162 = tpu.assume_multiple %161, 8 : i32
    %163 = arith.index_cast %162 : i32 to index
    %c0_46 = arith.constant 0 : index
    %164 = vector.load %arg1[%163, %c0_46] : memref<64x512xf32, #tpu.memory_space<vmem>>, vector<8x512xf32>
    %165 = arith.truncf %158 : vector<8x128xf32> to vector<8x128xbf16>
    %c0_47 = arith.constant 0 : index
    %c0_48 = arith.constant 0 : index
    %166 = vector.load %arg2[%c0_47, %c0_48] : memref<128x512xbf16, #tpu.memory_space<vmem>>, vector<128x512xbf16>
    %cst_49 = arith.constant dense<0.000000e+00> : vector<8x512xf32>
    %167 = tpu.matmul %165, %166, %cst_49 {dimension_numbers = #tpu.dot_dimension_numbers<[1], [0], [0], [1], [0, 0, 1, 1], [], []>} : vector<8x128xbf16>, vector<128x512xbf16>, vector<8x512xf32> -> vector<8x512xf32>
    %168 = arith.addf %164, %167 : vector<8x512xf32>
    %169 = vector.extract_strided_slice %168 {offsets = [0, 0], sizes = [8, 384], strides = [1, 1]} : vector<8x512xf32> to vector<8x384xf32>
    %170 = arith.negf %169 : vector<8x384xf32>
    %171 = math.exp %170 : vector<8x384xf32>
    %cst_50 = arith.constant 1.000000e+00 : f32
    %172 = vector.broadcast %cst_50 : f32 to vector<8x384xf32>
    %173 = arith.addf %172, %171 : vector<8x384xf32>
    %174 = arith.divf %172, %173 : vector<8x384xf32>
    %175 = vector.extract_strided_slice %168 {offsets = [0, 384], sizes = [8, 128], strides = [1, 1]} : vector<8x512xf32> to vector<8x128xf32>
    %176 = math.tanh %175 : vector<8x128xf32>
    %177 = vector.extract_strided_slice %174 {offsets = [0, 0], sizes = [8, 128], strides = [1, 1]} : vector<8x384xf32> to vector<8x128xf32>
    %178 = vector.extract_strided_slice %174 {offsets = [0, 128], sizes = [8, 128], strides = [1, 1]} : vector<8x384xf32> to vector<8x128xf32>
    %179 = vector.extract_strided_slice %174 {offsets = [0, 256], sizes = [8, 128], strides = [1, 1]} : vector<8x384xf32> to vector<8x128xf32>
    %180 = arith.mulf %178, %156 : vector<8x128xf32>
    %181 = arith.mulf %177, %176 : vector<8x128xf32>
    %182 = arith.addf %180, %181 : vector<8x128xf32>
    %183 = math.tanh %182 : vector<8x128xf32>
    %184 = arith.mulf %179, %183 : vector<8x128xf32>
    %185 = arith.index_cast %162 : i32 to index
    %c0_51 = arith.constant 0 : index
    %186 = vector.load %arg11[%185, %c0_51] : memref<64x128xf32, #tpu.memory_space<vmem>>, vector<8x128xf32>
    tpu.vector_store %arg11[%185, %c0_51], %184 {strides = array<i32>} : memref<64x128xf32, #tpu.memory_space<vmem>>, vector<8x128xf32>,
    %c7_i32 = arith.constant 7 : i32
    %c8_i32_52 = arith.constant 8 : i32
    %187 = arith.muli %c7_i32, %c8_i32_52 : i32
    %188 = tpu.assume_multiple %187, 8 : i32
    %189 = arith.index_cast %188 : i32 to index
    %c0_53 = arith.constant 0 : index
    %190 = vector.load %arg1[%189, %c0_53] : memref<64x512xf32, #tpu.memory_space<vmem>>, vector<8x512xf32>
    %191 = arith.truncf %184 : vector<8x128xf32> to vector<8x128xbf16>
    %c0_54 = arith.constant 0 : index
    %c0_55 = arith.constant 0 : index
    %192 = vector.load %arg2[%c0_54, %c0_55] : memref<128x512xbf16, #tpu.memory_space<vmem>>, vector<128x512xbf16>
    %cst_56 = arith.constant dense<0.000000e+00> : vector<8x512xf32>
    %193 = tpu.matmul %191, %192, %cst_56 {dimension_numbers = #tpu.dot_dimension_numbers<[1], [0], [0], [1], [0, 0, 1, 1], [], []>} : vector<8x128xbf16>, vector<128x512xbf16>, vector<8x512xf32> -> vector<8x512xf32>
    %194 = arith.addf %190, %193 : vector<8x512xf32>
    %195 = vector.extract_strided_slice %194 {offsets = [0, 0], sizes = [8, 384], strides = [1, 1]} : vector<8x512xf32> to vector<8x384xf32>
    %196 = arith.negf %195 : vector<8x384xf32>
    %197 = math.exp %196 : vector<8x384xf32>
    %cst_57 = arith.constant 1.000000e+00 : f32
    %198 = vector.broadcast %cst_57 : f32 to vector<8x384xf32>
    %199 = arith.addf %198, %197 : vector<8x384xf32>
    %200 = arith.divf %198, %199 : vector<8x384xf32>
    %201 = vector.extract_strided_slice %194 {offsets = [0, 384], sizes = [8, 128], strides = [1, 1]} : vector<8x512xf32> to vector<8x128xf32>
    %202 = math.tanh %201 : vector<8x128xf32>
    %203 = vector.extract_strided_slice %200 {offsets = [0, 0], sizes = [8, 128], strides = [1, 1]} : vector<8x384xf32> to vector<8x128xf32>
    %204 = vector.extract_strided_slice %200 {offsets = [0, 128], sizes = [8, 128], strides = [1, 1]} : vector<8x384xf32> to vector<8x128xf32>
    %205 = vector.extract_strided_slice %200 {offsets = [0, 256], sizes = [8, 128], strides = [1, 1]} : vector<8x384xf32> to vector<8x128xf32>
    %206 = arith.mulf %204, %182 : vector<8x128xf32>
    %207 = arith.mulf %203, %202 : vector<8x128xf32>
    %208 = arith.addf %206, %207 : vector<8x128xf32>
    %209 = math.tanh %208 : vector<8x128xf32>
    %210 = arith.mulf %205, %209 : vector<8x128xf32>
    %211 = arith.index_cast %188 : i32 to index
    %c0_58 = arith.constant 0 : index
    %212 = vector.load %arg11[%211, %c0_58] : memref<64x128xf32, #tpu.memory_space<vmem>>, vector<8x128xf32>
    tpu.vector_store %arg11[%211, %c0_58], %210 {strides = array<i32>} : memref<64x128xf32, #tpu.memory_space<vmem>>, vector<8x128xf32>,
    %c8_i32_59 = arith.constant 8 : i32
    %c0_60 = arith.constant 0 : index
    %c0_61 = arith.constant 0 : index
    %213 = vector.load %arg12[%c0_60, %c0_61] : memref<8x128xf32, #tpu.memory_space<vmem>>, vector<8x128xf32>
    tpu.vector_store %arg12[%c0_60, %c0_61], %210 {strides = array<i32>} : memref<8x128xf32, #tpu.memory_space<vmem>>, vector<8x128xf32>,
    %c0_62 = arith.constant 0 : index
    %c0_63 = arith.constant 0 : index
    %214 = vector.load %arg13[%c0_62, %c0_63] : memref<8x128xf32, #tpu.memory_space<vmem>>, vector<8x128xf32>
    tpu.vector_store %arg13[%c0_62, %c0_63], %208 {strides = array<i32>} : memref<8x128xf32, #tpu.memory_space<vmem>>, vector<8x128xf32>,
    %c0_64 = arith.constant 0 : index
    %c0_65 = arith.constant 0 : index
    %215 = vector.load %arg11[%c0_64, %c0_65] : memref<64x128xf32, #tpu.memory_space<vmem>>, vector<64x128xf32>
    %216 = arith.truncf %215 : vector<64x128xf32> to vector<64x128xbf16>
    %c0_66 = arith.constant 0 : index
    %c0_67 = arith.constant 0 : index
    %217 = vector.load %arg3[%c0_66, %c0_67] : memref<128x256xbf16, #tpu.memory_space<vmem>>, vector<128x256xbf16>
    %cst_68 = arith.constant dense<0.000000e+00> : vector<64x256xf32>
    %218 = tpu.matmul %216, %217, %cst_68 {dimension_numbers = #tpu.dot_dimension_numbers<[1], [0], [0], [1], [0, 0, 1, 1], [], []>} : vector<64x128xbf16>, vector<128x256xbf16>, vector<64x256xf32> -> vector<64x256xf32>
    %c0_69 = arith.constant 0 : index
    %c0_70 = arith.constant 0 : index
    %219 = vector.load %arg4[%c0_69, %c0_70] : memref<1x256xf32, #tpu.memory_space<vmem>>, vector<1x256xf32>
    %220 = vector.broadcast %219 : vector<1x256xf32> to vector<64x256xf32>
    %221 = arith.addf %218, %220 : vector<64x256xf32>
    %222 = vector.extract_strided_slice %221 {offsets = [0, 0], sizes = [64, 128], strides = [1, 1]} : vector<64x256xf32> to vector<64x128xf32>
    %cst_71 = arith.constant 0.000000e+00 : f32
    %223 = vector.broadcast %cst_71 : f32 to vector<64x128xf32>
    %224 = arith.cmpf ogt, %222, %223 : vector<64x128xf32>
    %225 = math.exp %222 : vector<64x128xf32>
    %cst_72 = arith.constant 1.000000e+00 : f32
    %226 = vector.broadcast %cst_72 : f32 to vector<64x128xf32>
    %227 = arith.subf %225, %226 : vector<64x128xf32>
    %cst_73 = arith.constant 1.67326319 : f32
    %228 = vector.broadcast %cst_73 : f32 to vector<64x128xf32>
    %229 = arith.mulf %228, %227 : vector<64x128xf32>
    %230 = arith.select %224, %222, %229 : vector<64x128xi1>, vector<64x128xf32>
    %cst_74 = arith.constant 1.05070102 : f32
    %231 = vector.broadcast %cst_74 : f32 to vector<64x128xf32>
    %232 = arith.mulf %231, %230 : vector<64x128xf32>
    %233 = vector.extract_strided_slice %221 {offsets = [0, 128], sizes = [64, 128], strides = [1, 1]} : vector<64x256xf32> to vector<64x128xf32>
    %cst_75 = arith.constant 0.000000e+00 : f32
    %234 = vector.broadcast %cst_75 : f32 to vector<64x128xf32>
    %235 = arith.maximumf %233, %234 : vector<64x128xf32>
    %236 = tpu.concatenate %232, %235 in 1 : vector<64x128xf32>, vector<64x128xf32> -> vector<64x256xf32>
    %237 = arith.truncf %236 : vector<64x256xf32> to vector<64x256xbf16>
    %c0_76 = arith.constant 0 : index
    %c0_77 = arith.constant 0 : index
    %238 = vector.load %arg5[%c0_76, %c0_77] : memref<256x256xbf16, #tpu.memory_space<vmem>>, vector<256x256xbf16>
    %cst_78 = arith.constant dense<0.000000e+00> : vector<64x256xf32>
    %239 = tpu.matmul %237, %238, %cst_78 {dimension_numbers = #tpu.dot_dimension_numbers<[1], [0], [0], [1], [0, 0, 1, 1], [], []>} : vector<64x256xbf16>, vector<256x256xbf16>, vector<64x256xf32> -> vector<64x256xf32>
    %c0_79 = arith.constant 0 : index
    %c0_80 = arith.constant 0 : index
    %240 = vector.load %arg6[%c0_79, %c0_80] : memref<1x256xf32, #tpu.memory_space<vmem>>, vector<1x256xf32>
    %241 = vector.broadcast %240 : vector<1x256xf32> to vector<64x256xf32>
    %242 = arith.addf %239, %241 : vector<64x256xf32>
    %243 = vector.extract_strided_slice %242 {offsets = [0, 0], sizes = [64, 128], strides = [1, 1]} : vector<64x256xf32> to vector<64x128xf32>
    %cst_81 = arith.constant 0.000000e+00 : f32
    %244 = vector.broadcast %cst_81 : f32 to vector<64x128xf32>
    %245 = arith.cmpf ogt, %243, %244 : vector<64x128xf32>
    %246 = math.exp %243 : vector<64x128xf32>
    %cst_82 = arith.constant 1.000000e+00 : f32
    %247 = vector.broadcast %cst_82 : f32 to vector<64x128xf32>
    %248 = arith.subf %246, %247 : vector<64x128xf32>
    %cst_83 = arith.constant 1.67326319 : f32
    %249 = vector.broadcast %cst_83 : f32 to vector<64x128xf32>
    %250 = arith.mulf %249, %248 : vector<64x128xf32>
    %251 = arith.select %245, %243, %250 : vector<64x128xi1>, vector<64x128xf32>
    %cst_84 = arith.constant 1.05070102 : f32
    %252 = vector.broadcast %cst_84 : f32 to vector<64x128xf32>
    %253 = arith.mulf %252, %251 : vector<64x128xf32>
    %254 = vector.extract_strided_slice %242 {offsets = [0, 128], sizes = [64, 128], strides = [1, 1]} : vector<64x256xf32> to vector<64x128xf32>
    %cst_85 = arith.constant 0.000000e+00 : f32
    %255 = vector.broadcast %cst_85 : f32 to vector<64x128xf32>
    %256 = arith.maximumf %254, %255 : vector<64x128xf32>
    %257 = tpu.concatenate %253, %256 in 1 : vector<64x128xf32>, vector<64x128xf32> -> vector<64x256xf32>
    %258 = arith.truncf %257 : vector<64x256xf32> to vector<64x256xbf16>
    %c0_86 = arith.constant 0 : index
    %c0_87 = arith.constant 0 : index
    %259 = vector.load %arg7[%c0_86, %c0_87] : memref<256x256xbf16, #tpu.memory_space<vmem>>, vector<256x256xbf16>
    %cst_88 = arith.constant dense<0.000000e+00> : vector<64x256xf32>
    %260 = tpu.matmul %258, %259, %cst_88 {dimension_numbers = #tpu.dot_dimension_numbers<[1], [0], [0], [1], [0, 0, 1, 1], [], []>} : vector<64x256xbf16>, vector<256x256xbf16>, vector<64x256xf32> -> vector<64x256xf32>
    %c0_89 = arith.constant 0 : index
    %c0_90 = arith.constant 0 : index
    %261 = vector.load %arg8[%c0_89, %c0_90] : memref<1x256xf32, #tpu.memory_space<vmem>>, vector<1x256xf32>
    %262 = vector.broadcast %261 : vector<1x256xf32> to vector<64x256xf32>
    %263 = arith.addf %260, %262 : vector<64x256xf32>
    %264 = vector.extract_strided_slice %263 {offsets = [0, 0], sizes = [64, 128], strides = [1, 1]} : vector<64x256xf32> to vector<64x128xf32>
    %cst_91 = arith.constant dense<0xFF800000> : vector<64xf32>
    %265 = vector.multi_reduction <maximumf>, %264, %cst_91 [1] : vector<64x128xf32> to vector<64xf32>
    %266 = vector.shape_cast %265 : vector<64xf32> to vector<64x1xf32>
    %267 = vector.broadcast %266 : vector<64x1xf32> to vector<64x128xf32>
    %268 = arith.subf %264, %267 : vector<64x128xf32>
    %269 = math.exp %268 : vector<64x128xf32>
    %cst_92 = arith.constant dense<0.000000e+00> : vector<64xf32>
    %270 = vector.multi_reduction <add>, %269, %cst_92 [1] : vector<64x128xf32> to vector<64xf32>
    %271 = vector.shape_cast %270 : vector<64xf32> to vector<64x1xf32>
    %272 = vector.broadcast %271 : vector<64x1xf32> to vector<64x128xf32>
    %273 = arith.divf %269, %272 : vector<64x128xf32>
    %c0_93 = arith.constant 0 : index
    %c0_94 = arith.constant 0 : index
    %274 = vector.load %arg9[%c0_93, %c0_94] : memref<64x128xf32, #tpu.memory_space<vmem>>, vector<64x128xf32>
    tpu.vector_store %arg9[%c0_93, %c0_94], %273 {strides = array<i32>} : memref<64x128xf32, #tpu.memory_space<vmem>>, vector<64x128xf32>,
    %275 = vector.extract_strided_slice %263 {offsets = [0, 128], sizes = [64, 128], strides = [1, 1]} : vector<64x256xf32> to vector<64x128xf32>
    %276 = math.exp %275 : vector<64x128xf32>
    %c0_95 = arith.constant 0 : index
    %c0_96 = arith.constant 0 : index
    %277 = vector.load %arg10[%c0_95, %c0_96] : memref<64x128xf32, #tpu.memory_space<vmem>>, vector<64x128xf32>
    tpu.vector_store %arg10[%c0_95, %c0_96], %276 {strides = array<i32>} : memref<64x128xf32, #tpu.memory_space<vmem>>, vector<64x128xf32>,
    return
  }
  func.func @transform_0(%arg0: i32) -> (i32, i32) {
    %c0_i32 = arith.constant 0 : i32
    %c0_i32_0 = arith.constant 0 : i32
    return %arg0, %c0_i32 : i32, i32
  }
  func.func @transform_1(%arg0: i32) -> (i32, i32) {
    %c0_i32 = arith.constant 0 : i32
    %c0_i32_0 = arith.constant 0 : i32
    %c0_i32_1 = arith.constant 0 : i32
    return %c0_i32, %c0_i32_0 : i32, i32
  }
  func.func @transform_2(%arg0: i32) -> (i32, i32) {
    %c0_i32 = arith.constant 0 : i32
    %c0_i32_0 = arith.constant 0 : i32
    %c0_i32_1 = arith.constant 0 : i32
    return %c0_i32, %c0_i32_0 : i32, i32
  }
  func.func @transform_3(%arg0: i32) -> (i32, i32) {
    %c0_i32 = arith.constant 0 : i32
    %c0_i32_0 = arith.constant 0 : i32
    %c0_i32_1 = arith.constant 0 : i32
    return %c0_i32, %c0_i32_0 : i32, i32
  }
  func.func @transform_4(%arg0: i32) -> (i32, i32) {
    %c0_i32 = arith.constant 0 : i32
    %c0_i32_0 = arith.constant 0 : i32
    %c0_i32_1 = arith.constant 0 : i32
    return %c0_i32, %c0_i32_0 : i32, i32
  }
  func.func @transform_5(%arg0: i32) -> (i32, i32) {
    %c0_i32 = arith.constant 0 : i32
    %c0_i32_0 = arith.constant 0 : i32
    %c0_i32_1 = arith.constant 0 : i32
    return %c0_i32, %c0_i32_0 : i32, i32
  }
  func.func @transform_6(%arg0: i32) -> (i32, i32) {
    %c0_i32 = arith.constant 0 : i32
    %c0_i32_0 = arith.constant 0 : i32
    %c0_i32_1 = arith.constant 0 : i32
    return %c0_i32, %c0_i32_0 : i32, i32
  }
  func.func @transform_7(%arg0: i32) -> (i32, i32) {
    %c0_i32 = arith.constant 0 : i32
    %c0_i32_0 = arith.constant 0 : i32
    %c0_i32_1 = arith.constant 0 : i32
    return %c0_i32, %c0_i32_0 : i32, i32
  }
  func.func @transform_8(%arg0: i32) -> (i32, i32) {
    %c0_i32 = arith.constant 0 : i32
    %c0_i32_0 = arith.constant 0 : i32
    return %arg0, %c0_i32 : i32, i32
  }
  func.func @transform_9(%arg0: i32) -> (i32, i32) {
    %c0_i32 = arith.constant 0 : i32
    %c0_i32_0 = arith.constant 0 : i32
    return %arg0, %c0_i32 : i32, i32
  }
}

</mosaic_0001>

<llo_original>
// kernel: _lambda_.1
$region0: #{_lambda_.1}
  #allocation0 [shape = 'u32[]', space=smem, size = 0x4, offset = 0x4, fixed_abs, tag = 'smem constant byte address 0x4 - core index']
  #allocation1 [shape = 'u32[144,128]{1,0:T(1,128)}', space=vmem, size = 0x12000, scoped, tag = 'internal scratch']
  #allocation2 [shape = 'f32[64,128]{1,0:T(8,128)}', space=vmem, size = 0x8000, scoped, tag = 'scratch operand']
  #allocation3 [shape = 'f32[8,128]{1,0:T(8,128)}', space=vmem, size = 0x1000, scoped, tag = 'scratch operand']
  #allocation4 [shape = 'f32[8,128]{1,0:T(8,128)}', space=vmem, size = 0x1000, scoped, tag = 'scratch operand']
  %s0 = inlined_call_operand.hbm [shape: f32[64,512], index: 0, kind: input, shape index: {}]
  %s1 = inlined_call_operand.hbm [shape: bf16[128,512], index: 1, kind: input, shape index: {}]
  %s2 = inlined_call_operand.hbm [shape: bf16[128,256], index: 2, kind: input, shape index: {}]
  %s3 = inlined_call_operand.hbm [shape: f32[1,256], index: 3, kind: input, shape index: {}]
  %s4 = inlined_call_operand.hbm [shape: bf16[256,256], index: 4, kind: input, shape index: {}]
  %s5 = inlined_call_operand.hbm [shape: f32[1,256], index: 5, kind: input, shape index: {}]
  %s6 = inlined_call_operand.hbm [shape: bf16[256,256], index: 6, kind: input, shape index: {}]
  %s7 = inlined_call_operand.hbm [shape: f32[1,256], index: 7, kind: input, shape index: {}]
  %s8 = inlined_call_operand.hbm [shape: f32[64,128], index: 8, kind: output, shape index: {0}]
  %s9 = inlined_call_operand.hbm [shape: f32[64,128], index: 9, kind: output, shape index: {1}]
  %10 = xla_tuple %s8, %s9
  %s11 = sld [smem:[#allocation0]]
  $region86: #{_lambda_.1} parent=0
    _
  %s13 = ssub.s32 1, %s11
  %s14 = scalar_select 0, %s13, %s11
  $region1: #{_lambda_.1} parent=0
    #allocation5 [shape = 'u8[131072]{0}', space=vmem, size = 0x20000, scoped, tag = 'input window, operand 0, single buffered']
    #allocation6 [shape = 's32[1]{0}', space=sflag, size = 0x4, scoped, tag = 'scoped memory for _lambda_.1']
    #allocation7 [shape = 's32[1]{0}', space=sflag, size = 0x4, scoped, tag = 'scoped memory for _lambda_.1']
    #allocation8 [shape = 'u8[131072]{0}', space=vmem, size = 0x20000, scoped, tag = 'input window, operand 1, single buffered']
    #allocation9 [shape = 's32[1]{0}', space=sflag, size = 0x4, scoped, tag = 'scoped memory for _lambda_.1']
    #allocation10 [shape = 'u8[65536]{0}', space=vmem, size = 0x10000, scoped, tag = 'input window, operand 2, single buffered']
    #allocation11 [shape = 'u8[1024]{0}', space=vmem, size = 0x400, scoped, tag = 'input window, operand 3, single buffered']
    #allocation12 [shape = 's32[1]{0}', space=sflag, size = 0x4, scoped, tag = 'scoped memory for _lambda_.1']
    #allocation13 [shape = 'u8[131072]{0}', space=vmem, size = 0x20000, scoped, tag = 'input window, operand 4, single buffered']
    #allocation14 [shape = 'u8[1024]{0}', space=vmem, size = 0x400, scoped, tag = 'input window, operand 5, single buffered']
    #allocation15 [shape = 's32[1]{0}', space=sflag, size = 0x4, scoped, tag = 'scoped memory for _lambda_.1']
    #allocation16 [shape = 'u8[131072]{0}', space=vmem, size = 0x20000, scoped, tag = 'input window, operand 6, single buffered']
    #allocation17 [shape = 'u8[1024]{0}', space=vmem, size = 0x400, scoped, tag = 'input window, operand 7, single buffered']
    #allocation18 [shape = 's32[1]{0}', space=sflag, size = 0x4, scoped, tag = 'scoped memory for _lambda_.1']
    #allocation19 [shape = 'u8[32768]{0}', space=vmem, size = 0x8000, scoped, tag = 'output window, operand 0, single buffered']
    #allocation20 [shape = 'u8[32768]{0}', space=vmem, size = 0x8000, scoped, tag = 'output window, operand 1, single buffered']
    #allocation21 [shape = 's32[1]{0}', space=sflag, size = 0x4, scoped, tag = 'scoped memory for _lambda_.1']
    %15 = vsyncpa [#allocation6], 0
    %16 = vsyncpa [#allocation9], 0
    %17 = vsyncpa [#allocation12], 0
    %18 = vsyncpa [#allocation15], 0
    %19 = vsyncpa [#allocation18], 0
    %20 = vsyncpa [#allocation7], 0
    %21 = vsyncpa [#allocation21], 0
    // Predicated region
    $region2: #{_lambda_.1} parent=1 // pred_check
      _
    $region3: #{_lambda_.1} parent=1 // pred_check_branch
      %23 = sbr.rel (0) target = $region5
    $region4: #{_lambda_.1} parent=1 // pred_region
      %s25 = ssub.s32 4096, 4096
      %26 = vsyncadd [#allocation6], %s25
      %s27 = sshll.u32 [#allocation5], 4
      %s28 = int_to_ptr.vmem [resolvable:$true] %s27
      %33 = dma.hbm_to_vmem [thread:$0]  %s0, 4096, %s28, [#allocation6], 512, 512, 32
    $region5: #{_lambda_.1} parent=1 // pred_fallthru
      _
    // Predicated region
    $region6: #{_lambda_.1} parent=1 // pred_check
      _
    $region7: #{_lambda_.1} parent=1 // pred_check_branch
      %35 = sbr.rel (0) target = $region9
    $region8: #{_lambda_.1} parent=1 // pred_region
      %s37 = ssub.s32 4096, 4096
      %38 = vsyncadd [#allocation9], %s37
      %s39 = sshll.u32 [#allocation8], 4
      %s40 = int_to_ptr.vmem [resolvable:$true] %s39
      %45 = dma.hbm_to_vmem [thread:$0]  %s1, 4096, %s40, [#allocation9], 256, 256, 16
    $region9: #{_lambda_.1} parent=1 // pred_fallthru
      _
    // Predicated region
    $region10: #{_lambda_.1} parent=1 // pred_check
      _
    $region11: #{_lambda_.1} parent=1 // pred_check_branch
      %47 = sbr.rel (0) target = $region13
    $region12: #{_lambda_.1} parent=1 // pred_region
      %s49 = ssub.s32 2048, 2048
      %50 = vsyncadd [#allocation9], %s49
      %s51 = sshll.u32 [#allocation10], 4
      %s52 = int_to_ptr.vmem [resolvable:$true] %s51
      %57 = dma.hbm_to_vmem [thread:$0]  %s2, 2048, %s52, [#allocation9], 128, 128, 8
    $region13: #{_lambda_.1} parent=1 // pred_fallthru
      _
    // Predicated region
    $region14: #{_lambda_.1} parent=1 // pred_check
      _
    $region15: #{_lambda_.1} parent=1 // pred_check_branch
      %59 = sbr.rel (0) target = $region17
    $region16: #{_lambda_.1} parent=1 // pred_region
      %s61 = ssub.s32 32, 32
      %62 = vsyncadd [#allocation12], %s61
      %s64 = sshll.u32 [#allocation11], 4
      %s65 = int_to_ptr.vmem [resolvable:$true] %s64
      %67 = dma.hbm_to_vmem [thread:$0]  %s3, 32, %s65, [#allocation12]
    $region17: #{_lambda_.1} parent=1 // pred_fallthru
      _
    // Predicated region
    $region18: #{_lambda_.1} parent=1 // pred_check
      _
    $region19: #{_lambda_.1} parent=1 // pred_check_branch
      %69 = sbr.rel (0) target = $region21
    $region20: #{_lambda_.1} parent=1 // pred_region
      %s71 = ssub.s32 4096, 4096
      %72 = vsyncadd [#allocation12], %s71
      %s73 = sshll.u32 [#allocation13], 4
      %s74 = int_to_ptr.vmem [resolvable:$true] %s73
      %79 = dma.hbm_to_vmem [thread:$0]  %s4, 4096, %s74, [#allocation12], 128, 128, 8
    $region21: #{_lambda_.1} parent=1 // pred_fallthru
      _
    // Predicated region
    $region22: #{_lambda_.1} parent=1 // pred_check
      _
    $region23: #{_lambda_.1} parent=1 // pred_check_branch
      %81 = sbr.rel (0) target = $region25
    $region24: #{_lambda_.1} parent=1 // pred_region
      %s83 = ssub.s32 32, 32
      %84 = vsyncadd [#allocation15], %s83
      %s86 = sshll.u32 [#allocation14], 4
      %s87 = int_to_ptr.vmem [resolvable:$true] %s86
      %89 = dma.hbm_to_vmem [thread:$0]  %s5, 32, %s87, [#allocation15]
    $region25: #{_lambda_.1} parent=1 // pred_fallthru
      _
    // Predicated region
    $region26: #{_lambda_.1} parent=1 // pred_check
      _
    $region27: #{_lambda_.1} parent=1 // pred_check_branch
      %91 = sbr.rel (0) target = $region29
    $region28: #{_lambda_.1} parent=1 // pred_region
      %s93 = ssub.s32 4096, 4096
      %94 = vsyncadd [#allocation15], %s93
      %s95 = sshll.u32 [#allocation16], 4
      %s96 = int_to_ptr.vmem [resolvable:$true] %s95
      %101 = dma.hbm_to_vmem [thread:$0]  %s6, 4096, %s96, [#allocation15], 128, 128, 8
    $region29: #{_lambda_.1} parent=1 // pred_fallthru
      _
    // Predicated region
    $region30: #{_lambda_.1} parent=1 // pred_check
      _
    $region31: #{_lambda_.1} parent=1 // pred_check_branch
      %103 = sbr.rel (0) target = $region33
    $region32: #{_lambda_.1} parent=1 // pred_region
      %s105 = ssub.s32 32, 32
      %106 = vsyncadd [#allocation18], %s105
      %s108 = sshll.u32 [#allocation17], 4
      %s109 = int_to_ptr.vmem [resolvable:$true] %s108
      %111 = dma.hbm_to_vmem [thread:$0]  %s7, 32, %s109, [#allocation18]
    $region33: #{_lambda_.1} parent=1 // pred_fallthru
      _
    // Predicated region
    $region34: #{_lambda_.1} parent=1 // pred_check
      _
    $region35: #{_lambda_.1} parent=1 // pred_check_branch
      %113 = sbr.rel (0) target = $region37
    $region36: #{_lambda_.1} parent=1 // pred_region
      %114 = dma.done [#allocation6], 4096
    $region37: #{_lambda_.1} parent=1 // pred_fallthru
      _
    // Predicated region
    $region38: #{_lambda_.1} parent=1 // pred_check
      _
    $region39: #{_lambda_.1} parent=1 // pred_check_branch
      %116 = sbr.rel (0) target = $region41
    $region40: #{_lambda_.1} parent=1 // pred_region
      %117 = dma.done [#allocation9], 4096
    $region41: #{_lambda_.1} parent=1 // pred_fallthru
      _
    // Predicated region
    $region42: #{_lambda_.1} parent=1 // pred_check
      _
    $region43: #{_lambda_.1} parent=1 // pred_check_branch
      %119 = sbr.rel (0) target = $region45
    $region44: #{_lambda_.1} parent=1 // pred_region
      %120 = dma.done [#allocation9], 2048
    $region45: #{_lambda_.1} parent=1 // pred_fallthru
      _
    // Predicated region
    $region46: #{_lambda_.1} parent=1 // pred_check
      _
    $region47: #{_lambda_.1} parent=1 // pred_check_branch
      %122 = sbr.rel (0) target = $region49
    $region48: #{_lambda_.1} parent=1 // pred_region
      %123 = dma.done [#allocation12], 32
    $region49: #{_lambda_.1} parent=1 // pred_fallthru
      _
    // Predicated region
    $region50: #{_lambda_.1} parent=1 // pred_check
      _
    $region51: #{_lambda_.1} parent=1 // pred_check_branch
      %125 = sbr.rel (0) target = $region53
    $region52: #{_lambda_.1} parent=1 // pred_region
      %126 = dma.done [#allocation12], 4096
    $region53: #{_lambda_.1} parent=1 // pred_fallthru
      _
    // Predicated region
    $region54: #{_lambda_.1} parent=1 // pred_check
      _
    $region55: #{_lambda_.1} parent=1 // pred_check_branch
      %128 = sbr.rel (0) target = $region57
    $region56: #{_lambda_.1} parent=1 // pred_region
      %129 = dma.done [#allocation15], 32
    $region57: #{_lambda_.1} parent=1 // pred_fallthru
      _
    // Predicated region
    $region58: #{_lambda_.1} parent=1 // pred_check
      _
    $region59: #{_lambda_.1} parent=1 // pred_check_branch
      %131 = sbr.rel (0) target = $region61
    $region60: #{_lambda_.1} parent=1 // pred_region
      %132 = dma.done [#allocation15], 4096
    $region61: #{_lambda_.1} parent=1 // pred_fallthru
      _
    // Predicated region
    $region62: #{_lambda_.1} parent=1 // pred_check
      _
    $region63: #{_lambda_.1} parent=1 // pred_check_branch
      %134 = sbr.rel (0) target = $region65
    $region64: #{_lambda_.1} parent=1 // pred_region
      %135 = dma.done [#allocation18], 32
    $region65: #{_lambda_.1} parent=1 // pred_fallthru
      _
    %p137 = scmp.eq.s32.totalorder 0, 0
    // Predicated region
    $region66: #{_lambda_.1} parent=1 // pred_check
      %p138 = pneg %p137
    $region67: #{_lambda_.1} parent=1 // pred_check_branch
      %140 = sbr.rel (%p138) target = $region69
    $region68: #{_lambda_.1} parent=1 // pred_region
      %141 = vst [vmem:[#allocation3] sm:$0xff] 0.0
      %142 = vst [vmem:[#allocation4] sm:$0xff] 0.0
    $region69: #{_lambda_.1} parent=1 // pred_fallthru
      _
    %v143 = vld [vmem:[#allocation3] sm:$0xff]
    %v144 = vld [vmem:[#allocation4] sm:$0xff]
    %s145 = smul.u32 0, 4
    %s146 = smul.addr %s145, 8
    %s147 = scalar_lea.vmem [#allocation5], %s146
    %v148 = vld [vmem:[%s147] sm:$0xff]
    %v149 = vld [vmem:[%s147 + $0x8] sm:$0xff]
    %v150 = vld [vmem:[%s147 + $0x10] sm:$0xff]
    %v151 = vld [vmem:[%s147 + $0x18] sm:$0xff]
    %v152 = vpack.c.bf16 %v143, %v143
    %v153 = vld [vmem:[#allocation8] sm:$0xff]
    %v154 = vld [vmem:[#allocation8 + $0x8] sm:$0xff]
    %v155 = vld [vmem:[#allocation8 + $0x10] sm:$0xff]
    %v156 = vld [vmem:[#allocation8 + $0x18] sm:$0xff]
    %v157 = vld [vmem:[#allocation8 + $0x20] sm:$0xff]
    %v158 = vld [vmem:[#allocation8 + $0x28] sm:$0xff]
    %v159 = vld [vmem:[#allocation8 + $0x30] sm:$0xff]
    %v160 = vld [vmem:[#allocation8 + $0x38] sm:$0xff]
    %v161 = vld [vmem:[#allocation8 + $0x40] sm:$0xff]
    %v162 = vld [vmem:[#allocation8 + $0x48] sm:$0xff]
    %v163 = vld [vmem:[#allocation8 + $0x50] sm:$0xff]
    %v164 = vld [vmem:[#allocation8 + $0x58] sm:$0xff]
    %v165 = vld [vmem:[#allocation8 + $0x60] sm:$0xff]
    %v166 = vld [vmem:[#allocation8 + $0x68] sm:$0xff]
    %v167 = vld [vmem:[#allocation8 + $0x70] sm:$0xff]
    %v168 = vld [vmem:[#allocation8 + $0x78] sm:$0xff]
    %v169 = vld [vmem:[#allocation8 + $0x80] sm:$0xff]
    %v170 = vld [vmem:[#allocation8 + $0x88] sm:$0xff]
    %v171 = vld [vmem:[#allocation8 + $0x90] sm:$0xff]
    %v172 = vld [vmem:[#allocation8 + $0x98] sm:$0xff]
    %v173 = vld [vmem:[#allocation8 + $0xa0] sm:$0xff]
    %v174 = vld [vmem:[#allocation8 + $0xa8] sm:$0xff]
    %v175 = vld [vmem:[#allocation8 + $0xb0] sm:$0xff]
    %v176 = vld [vmem:[#allocation8 + $0xb8] sm:$0xff]
    %v177 = vld [vmem:[#allocation8 + $0xc0] sm:$0xff]
    %v178 = vld [vmem:[#allocation8 + $0xc8] sm:$0xff]
    %v179 = vld [vmem:[#allocation8 + $0xd0] sm:$0xff]
    %v180 = vld [vmem:[#allocation8 + $0xd8] sm:$0xff]
    %v181 = vld [vmem:[#allocation8 + $0xe0] sm:$0xff]
    %v182 = vld [vmem:[#allocation8 + $0xe8] sm:$0xff]
    %v183 = vld [vmem:[#allocation8 + $0xf0] sm:$0xff]
    %v184 = vld [vmem:[#allocation8 + $0xf8] sm:$0xff]
    %v217 = vunpack.c.l.b16 %v153
    %v218 = vunpack.c.h.b16 %v153
    %v219 = vunpack.c.l.b16 %v154
    %v220 = vunpack.c.h.b16 %v154
    %v221 = vunpack.c.l.b16 %v155
    %v222 = vunpack.c.h.b16 %v155
    %v223 = vunpack.c.l.b16 %v156
    %v224 = vunpack.c.h.b16 %v156
    %v225 = vunpack.c.l.b16 %v157
    %v226 = vunpack.c.h.b16 %v157
    %v227 = vunpack.c.l.b16 %v158
    %v228 = vunpack.c.h.b16 %v158
    %v229 = vunpack.c.l.b16 %v159
    %v230 = vunpack.c.h.b16 %v159
    %v231 = vunpack.c.l.b16 %v160
    %v232 = vunpack.c.h.b16 %v160
    %v233 = vunpack.c.l.b16 %v161
    %v234 = vunpack.c.h.b16 %v161
    %v235 = vunpack.c.l.b16 %v162
    %v236 = vunpack.c.h.b16 %v162
    %v237 = vunpack.c.l.b16 %v163
    %v238 = vunpack.c.h.b16 %v163
    %v239 = vunpack.c.l.b16 %v164
    %v240 = vunpack.c.h.b16 %v164
    %v241 = vunpack.c.l.b16 %v165
    %v242 = vunpack.c.h.b16 %v165
    %v243 = vunpack.c.l.b16 %v166
    %v244 = vunpack.c.h.b16 %v166
    %v245 = vunpack.c.l.b16 %v167
    %v246 = vunpack.c.h.b16 %v167
    %v247 = vunpack.c.l.b16 %v168
    %v248 = vunpack.c.h.b16 %v168
    %v249 = vunpack.c.l.b16 %v169
    %v250 = vunpack.c.h.b16 %v169
    %v251 = vunpack.c.l.b16 %v170
    %v252 = vunpack.c.h.b16 %v170
    %v253 = vunpack.c.l.b16 %v171
    %v254 = vunpack.c.h.b16 %v171
    %v255 = vunpack.c.l.b16 %v172
    %v256 = vunpack.c.h.b16 %v172
    %v257 = vunpack.c.l.b16 %v173
    %v258 = vunpack.c.h.b16 %v173
    %v259 = vunpack.c.l.b16 %v174
    %v260 = vunpack.c.h.b16 %v174
    %v261 = vunpack.c.l.b16 %v175
    %v262 = vunpack.c.h.b16 %v175
    %v263 = vunpack.c.l.b16 %v176
    %v264 = vunpack.c.h.b16 %v176
    %v265 = vunpack.c.l.b16 %v177
    %v266 = vunpack.c.h.b16 %v177
    %v267 = vunpack.c.l.b16 %v178
    %v268 = vunpack.c.h.b16 %v178
    %v269 = vunpack.c.l.b16 %v179
    %v270 = vunpack.c.h.b16 %v179
    %v271 = vunpack.c.l.b16 %v180
    %v272 = vunpack.c.h.b16 %v180
    %v273 = vunpack.c.l.b16 %v181
    %v274 = vunpack.c.h.b16 %v181
    %v275 = vunpack.c.l.b16 %v182
    %v276 = vunpack.c.h.b16 %v182
    %v277 = vunpack.c.l.b16 %v183
    %v278 = vunpack.c.h.b16 %v183
    %v279 = vunpack.c.l.b16 %v184
    %v280 = vunpack.c.h.b16 %v184
    %v281 = vpack.c.b16 %v221, %v217
    %v282 = vpack.c.b16 %v222, %v218
    %v283 = vpack.c.b16 %v223, %v219
    %v284 = vpack.c.b16 %v224, %v220
    %v285 = vpack.c.b16 %v229, %v225
    %v286 = vpack.c.b16 %v230, %v226
    %v287 = vpack.c.b16 %v231, %v227
    %v288 = vpack.c.b16 %v232, %v228
    %v289 = vpack.c.b16 %v237, %v233
    %v290 = vpack.c.b16 %v238, %v234
    %v291 = vpack.c.b16 %v239, %v235
    %v292 = vpack.c.b16 %v240, %v236
    %v293 = vpack.c.b16 %v245, %v241
    %v294 = vpack.c.b16 %v246, %v242
    %v295 = vpack.c.b16 %v247, %v243
    %v296 = vpack.c.b16 %v248, %v244
    %v297 = vpack.c.b16 %v253, %v249
    %v298 = vpack.c.b16 %v254, %v250
    %v299 = vpack.c.b16 %v255, %v251
    %v300 = vpack.c.b16 %v256, %v252
    %v301 = vpack.c.b16 %v261, %v257
    %v302 = vpack.c.b16 %v262, %v258
    %v303 = vpack.c.b16 %v263, %v259
    %v304 = vpack.c.b16 %v264, %v260
    %v305 = vpack.c.b16 %v269, %v265
    %v306 = vpack.c.b16 %v270, %v266
    %v307 = vpack.c.b16 %v271, %v267
    %v308 = vpack.c.b16 %v272, %v268
    %v309 = vpack.c.b16 %v277, %v273
    %v310 = vpack.c.b16 %v278, %v274
    %v311 = vpack.c.b16 %v279, %v275
    %v312 = vpack.c.b16 %v280, %v276
    %345 = vmatprep.subr.bf16.mxu0 %v282
    %346 = vmatpush1.bf16.msra.mxu0 %v281
    %347 = vmatprep.subr.bf16.mxu0 %v286
    %348 = vmatpush1.bf16.msra.mxu0 %v285
    %349 = vmatprep.subr.bf16.mxu0 %v290
    %350 = vmatpush1.bf16.msra.mxu0 %v289
    %351 = vmatprep.subr.bf16.mxu0 %v294
    %352 = vmatpush1.bf16.msra.mxu0 %v293
    %353 = vmatprep.subr.bf16.mxu0 %v298
    %354 = vmatpush1.bf16.msra.mxu0 %v297
    %355 = vmatprep.subr.bf16.mxu0 %v302
    %356 = vmatpush1.bf16.msra.mxu0 %v301
    %357 = vmatprep.subr.bf16.mxu0 %v306
    %358 = vmatpush1.bf16.msra.mxu0 %v305
    %359 = vmatprep.subr.bf16.mxu0 %v310
    %360 = vmatpush1.bf16.msra.mxu0 %v309
    %361 = vmatprep.subr.bf16.mxu0 0
    %362 = vmatpush1.bf16.msra.mxu0 0
    %363 = vmatprep.subr.bf16.mxu0 0
    %364 = vmatpush1.bf16.msra.mxu0 0
    %365 = vmatprep.subr.bf16.mxu0 0
    %366 = vmatpush1.bf16.msra.mxu0 0
    %367 = vmatprep.subr.bf16.mxu0 0
    %368 = vmatpush1.bf16.msra.mxu0 0
    %369 = vmatprep.subr.bf16.mxu0 0
    %370 = vmatpush1.bf16.msra.mxu0 0
    %371 = vmatprep.subr.bf16.mxu0 0
    %372 = vmatpush1.bf16.msra.mxu0 0
    %373 = vmatprep.subr.bf16.mxu0 0
    %374 = vmatpush1.bf16.msra.mxu0 0
    %375 = vmatprep.subr.bf16.mxu0 0
    %376 = vmatpush1.bf16.msra.mxu0 0
    %377 = vmatprep.mubr.bf16.mxu0 0
    %378 = vmatmul.mubr.bf16.gmra.mrb[0].mxu0 %v152
    %v379 = vpop.f32.mrb[0].mxu0
    %v380 = vadd.f32 0.0, %v379
    %v381 = vpop.f32.mrb[0].mxu0
    %v382 = vadd.f32 0.0, %v381
    %v383 = vpop.f32.mrb[0].mxu0
    %v384 = vpop.f32.mrb[0].mxu0
    %385 = vdwg.mxu0
    %386 = vmatprep.subr.bf16.mxu0 %v284
    %387 = vmatpush1.bf16.msra.mxu0 %v283
    %388 = vmatprep.subr.bf16.mxu0 %v288
    %389 = vmatpush1.bf16.msra.mxu0 %v287
    %390 = vmatprep.subr.bf16.mxu0 %v292
    %391 = vmatpush1.bf16.msra.mxu0 %v291
    %392 = vmatprep.subr.bf16.mxu0 %v296
    %393 = vmatpush1.bf16.msra.mxu0 %v295
    %394 = vmatprep.subr.bf16.mxu0 %v300
    %395 = vmatpush1.bf16.msra.mxu0 %v299
    %396 = vmatprep.subr.bf16.mxu0 %v304
    %397 = vmatpush1.bf16.msra.mxu0 %v303
    %398 = vmatprep.subr.bf16.mxu0 %v308
    %399 = vmatpush1.bf16.msra.mxu0 %v307
    %400 = vmatprep.subr.bf16.mxu0 %v312
    %401 = vmatpush1.bf16.msra.mxu0 %v311
    %402 = vmatprep.subr.bf16.mxu0 0
    %403 = vmatpush1.bf16.msra.mxu0 0
    %404 = vmatprep.subr.bf16.mxu0 0
    %405 = vmatpush1.bf16.msra.mxu0 0
    %406 = vmatprep.subr.bf16.mxu0 0
    %407 = vmatpush1.bf16.msra.mxu0 0
    %408 = vmatprep.subr.bf16.mxu0 0
    %409 = vmatpush1.bf16.msra.mxu0 0
    %410 = vmatprep.subr.bf16.mxu0 0
    %411 = vmatpush1.bf16.msra.mxu0 0
    %412 = vmatprep.subr.bf16.mxu0 0
    %413 = vmatpush1.bf16.msra.mxu0 0
    %414 = vmatprep.subr.bf16.mxu0 0
    %415 = vmatpush1.bf16.msra.mxu0 0
    %416 = vmatprep.subr.bf16.mxu0 0
    %417 = vmatpush1.bf16.msra.mxu0 0
    %418 = vmatprep.mubr.bf16.mxu0 0
    %419 = vmatmul.mubr.bf16.gmra.mrb[0].mxu0 %v152
    %v420 = vpop.f32.mrb[0].mxu0
    %v421 = vadd.f32 0.0, %v420
    %v422 = vpop.f32.mrb[0].mxu0
    %v423 = vadd.f32 0.0, %v422
    %v424 = vpop.f32.mrb[0].mxu0
    %v425 = vpop.f32.mrb[0].mxu0
    %426 = vdwg.mxu0
    %v427 = vadd.f32 %v148, %v380
    %v428 = vadd.f32 %v149, %v382
    %v429 = vadd.f32 %v150, %v421
    %v430 = vadd.f32 %v151, %v423
    %v431 = vxor.u32 %v427, 2147483648
    %v432 = vxor.u32 %v428, 2147483648
    %v433 = vxor.u32 %v429, 2147483648
    %v434 = vmul.f32 %v431, 1.442695
    %v435 = vpow.pop %v434
    %v436 = vmul.f32 %v432, 1.442695
    %v437 = vpow.pop %v436
    %v438 = vmul.f32 %v433, 1.442695
    %v439 = vpow.pop %v438
    %v440 = vadd.f32 %v435, 1.0
    %v441 = vadd.f32 %v437, 1.0
    %v442 = vadd.f32 %v439, 1.0
    %v443 = vrcp.pop %v440
    %v444 = vmul.f32 1.0, %v443
    %v445 = vrcp.pop %v441
    %v446 = vmul.f32 1.0, %v445
    %v447 = vrcp.pop %v442
    %v448 = vmul.f32 1.0, %v447
    %v449 = vtanh.pop %v430
    %v450 = vmul.f32 %v446, %v144
    %v451 = vmul.f32 %v444, %v449
    %v452 = vadd.f32 %v450, %v451
    %v453 = vtanh.pop %v452
    %v454 = vmul.f32 %v448, %v453
    %455 = vst [vmem:[#allocation2] sm:$0xff] %v454
    %s456 = smul.u32 1, 4
    %s457 = smul.addr %s456, 8
    %s458 = scalar_lea.vmem [#allocation5], %s457
    %v459 = vld [vmem:[%s458] sm:$0xff]
    %v460 = vld [vmem:[%s458 + $0x8] sm:$0xff]
    %v461 = vld [vmem:[%s458 + $0x10] sm:$0xff]
    %v462 = vld [vmem:[%s458 + $0x18] sm:$0xff]
    %v463 = vpack.c.bf16 %v454, %v454
    %v464 = vld [vmem:[#allocation8] sm:$0xff]
    %v465 = vld [vmem:[#allocation8 + $0x8] sm:$0xff]
    %v466 = vld [vmem:[#allocation8 + $0x10] sm:$0xff]
    %v467 = vld [vmem:[#allocation8 + $0x18] sm:$0xff]
    %v468 = vld [vmem:[#allocation8 + $0x20] sm:$0xff]
    %v469 = vld [vmem:[#allocation8 + $0x28] sm:$0xff]
    %v470 = vld [vmem:[#allocation8 + $0x30] sm:$0xff]
    %v471 = vld [vmem:[#allocation8 + $0x38] sm:$0xff]
    %v472 = vld [vmem:[#allocation8 + $0x40] sm:$0xff]
    %v473 = vld [vmem:[#allocation8 + $0x48] sm:$0xff]
    %v474 = vld [vmem:[#allocation8 + $0x50] sm:$0xff]
    %v475 = vld [vmem:[#allocation8 + $0x58] sm:$0xff]
    %v476 = vld [vmem:[#allocation8 + $0x60] sm:$0xff]
    %v477 = vld [vmem:[#allocation8 + $0x68] sm:$0xff]
    %v478 = vld [vmem:[#allocation8 + $0x70] sm:$0xff]
    %v479 = vld [vmem:[#allocation8 + $0x78] sm:$0xff]
    %v480 = vld [vmem:[#allocation8 + $0x80] sm:$0xff]
    %v481 = vld [vmem:[#allocation8 + $0x88] sm:$0xff]
    %v482 = vld [vmem:[#allocation8 + $0x90] sm:$0xff]
    %v483 = vld [vmem:[#allocation8 + $0x98] sm:$0xff]
    %v484 = vld [vmem:[#allocation8 + $0xa0] sm:$0xff]
    %v485 = vld [vmem:[#allocation8 + $0xa8] sm:$0xff]
    %v486 = vld [vmem:[#allocation8 + $0xb0] sm:$0xff]
    %v487 = vld [vmem:[#allocation8 + $0xb8] sm:$0xff]
    %v488 = vld [vmem:[#allocation8 + $0xc0] sm:$0xff]
    %v489 = vld [vmem:[#allocation8 + $0xc8] sm:$0xff]
    %v490 = vld [vmem:[#allocation8 + $0xd0] sm:$0xff]
    %v491 = vld [vmem:[#allocation8 + $0xd8] sm:$0xff]
    %v492 = vld [vmem:[#allocation8 + $0xe0] sm:$0xff]
    %v493 = vld [vmem:[#allocation8 + $0xe8] sm:$0xff]
    %v494 = vld [vmem:[#allocation8 + $0xf0] sm:$0xff]
    %v495 = vld [vmem:[#allocation8 + $0xf8] sm:$0xff]
    %v528 = vunpack.c.l.b16 %v464
    %v529 = vunpack.c.h.b16 %v464
    %v530 = vunpack.c.l.b16 %v465
    %v531 = vunpack.c.h.b16 %v465
    %v532 = vunpack.c.l.b16 %v466
    %v533 = vunpack.c.h.b16 %v466
    %v534 = vunpack.c.l.b16 %v467
    %v535 = vunpack.c.h.b16 %v467
    %v536 = vunpack.c.l.b16 %v468
    %v537 = vunpack.c.h.b16 %v468
    %v538 = vunpack.c.l.b16 %v469
    %v539 = vunpack.c.h.b16 %v469
    %v540 = vunpack.c.l.b16 %v470
    %v541 = vunpack.c.h.b16 %v470
    %v542 = vunpack.c.l.b16 %v471
    %v543 = vunpack.c.h.b16 %v471
    %v544 = vunpack.c.l.b16 %v472
    %v545 = vunpack.c.h.b16 %v472
    %v546 = vunpack.c.l.b16 %v473
    %v547 = vunpack.c.h.b16 %v473
    %v548 = vunpack.c.l.b16 %v474
    %v549 = vunpack.c.h.b16 %v474
    %v550 = vunpack.c.l.b16 %v475
    %v551 = vunpack.c.h.b16 %v475
    %v552 = vunpack.c.l.b16 %v476
    %v553 = vunpack.c.h.b16 %v476
    %v554 = vunpack.c.l.b16 %v477
    %v555 = vunpack.c.h.b16 %v477
    %v556 = vunpack.c.l.b16 %v478
    %v557 = vunpack.c.h.b16 %v478
    %v558 = vunpack.c.l.b16 %v479
    %v559 = vunpack.c.h.b16 %v479
    %v560 = vunpack.c.l.b16 %v480
    %v561 = vunpack.c.h.b16 %v480
    %v562 = vunpack.c.l.b16 %v481
    %v563 = vunpack.c.h.b16 %v481
    %v564 = vunpack.c.l.b16 %v482
    %v565 = vunpack.c.h.b16 %v482
    %v566 = vunpack.c.l.b16 %v483
    %v567 = vunpack.c.h.b16 %v483
    %v568 = vunpack.c.l.b16 %v484
    %v569 = vunpack.c.h.b16 %v484
    %v570 = vunpack.c.l.b16 %v485
    %v571 = vunpack.c.h.b16 %v485
    %v572 = vunpack.c.l.b16 %v486
    %v573 = vunpack.c.h.b16 %v486
    %v574 = vunpack.c.l.b16 %v487
    %v575 = vunpack.c.h.b16 %v487
    %v576 = vunpack.c.l.b16 %v488
    %v577 = vunpack.c.h.b16 %v488
    %v578 = vunpack.c.l.b16 %v489
    %v579 = vunpack.c.h.b16 %v489
    %v580 = vunpack.c.l.b16 %v490
    %v581 = vunpack.c.h.b16 %v490
    %v582 = vunpack.c.l.b16 %v491
    %v583 = vunpack.c.h.b16 %v491
    %v584 = vunpack.c.l.b16 %v492
    %v585 = vunpack.c.h.b16 %v492
    %v586 = vunpack.c.l.b16 %v493
    %v587 = vunpack.c.h.b16 %v493
    %v588 = vunpack.c.l.b16 %v494
    %v589 = vunpack.c.h.b16 %v494
    %v590 = vunpack.c.l.b16 %v495
    %v591 = vunpack.c.h.b16 %v495
    %v592 = vpack.c.b16 %v532, %v528
    %v593 = vpack.c.b16 %v533, %v529
    %v594 = vpack.c.b16 %v534, %v530
    %v595 = vpack.c.b16 %v535, %v531
    %v596 = vpack.c.b16 %v540, %v536
    %v597 = vpack.c.b16 %v541, %v537
    %v598 = vpack.c.b16 %v542, %v538
    %v599 = vpack.c.b16 %v543, %v539
    %v600 = vpack.c.b16 %v548, %v544
    %v601 = vpack.c.b16 %v549, %v545
    %v602 = vpack.c.b16 %v550, %v546
    %v603 = vpack.c.b16 %v551, %v547
    %v604 = vpack.c.b16 %v556, %v552
    %v605 = vpack.c.b16 %v557, %v553
    %v606 = vpack.c.b16 %v558, %v554
    %v607 = vpack.c.b16 %v559, %v555
    %v608 = vpack.c.b16 %v564, %v560
    %v609 = vpack.c.b16 %v565, %v561
    %v610 = vpack.c.b16 %v566, %v562
    %v611 = vpack.c.b16 %v567, %v563
    %v612 = vpack.c.b16 %v572, %v568
    %v613 = vpack.c.b16 %v573, %v569
    %v614 = vpack.c.b16 %v574, %v570
    %v615 = vpack.c.b16 %v575, %v571
    %v616 = vpack.c.b16 %v580, %v576
    %v617 = vpack.c.b16 %v581, %v577
    %v618 = vpack.c.b16 %v582, %v578
    %v619 = vpack.c.b16 %v583, %v579
    %v620 = vpack.c.b16 %v588, %v584
    %v621 = vpack.c.b16 %v589, %v585
    %v622 = vpack.c.b16 %v590, %v586
    %v623 = vpack.c.b16 %v591, %v587
    %656 = vmatprep.subr.bf16.mxu0 %v593
    %657 = vmatpush1.bf16.msra.mxu0 %v592
    %658 = vmatprep.subr.bf16.mxu0 %v597
    %659 = vmatpush1.bf16.msra.mxu0 %v596
    %660 = vmatprep.subr.bf16.mxu0 %v601
    %661 = vmatpush1.bf16.msra.mxu0 %v600
    %662 = vmatprep.subr.bf16.mxu0 %v605
    %663 = vmatpush1.bf16.msra.mxu0 %v604
    %664 = vmatprep.subr.bf16.mxu0 %v609
    %665 = vmatpush1.bf16.msra.mxu0 %v608
    %666 = vmatprep.subr.bf16.mxu0 %v613
    %667 = vmatpush1.bf16.msra.mxu0 %v612
    %668 = vmatprep.subr.bf16.mxu0 %v617
    %669 = vmatpush1.bf16.msra.mxu0 %v616
    %670 = vmatprep.subr.bf16.mxu0 %v621
    %671 = vmatpush1.bf16.msra.mxu0 %v620
    %672 = vmatprep.subr.bf16.mxu0 0
    %673 = vmatpush1.bf16.msra.mxu0 0
    %674 = vmatprep.subr.bf16.mxu0 0
    %675 = vmatpush1.bf16.msra.mxu0 0
    %676 = vmatprep.subr.bf16.mxu0 0
    %677 = vmatpush1.bf16.msra.mxu0 0
    %678 = vmatprep.subr.bf16.mxu0 0
    %679 = vmatpush1.bf16.msra.mxu0 0
    %680 = vmatprep.subr.bf16.mxu0 0
    %681 = vmatpush1.bf16.msra.mxu0 0
    %682 = vmatprep.subr.bf16.mxu0 0
    %683 = vmatpush1.bf16.msra.mxu0 0
    %684 = vmatprep.subr.bf16.mxu0 0
    %685 = vmatpush1.bf16.msra.mxu0 0
    %686 = vmatprep.subr.bf16.mxu0 0
    %687 = vmatpush1.bf16.msra.mxu0 0
    %688 = vmatprep.mubr.bf16.mxu0 0
    %689 = vmatmul.mubr.bf16.gmra.mrb[0].mxu0 %v463
    %v690 = vpop.f32.mrb[0].mxu0
    %v691 = vadd.f32 0.0, %v690
    %v692 = vpop.f32.mrb[0].mxu0
    %v693 = vadd.f32 0.0, %v692
    %v694 = vpop.f32.mrb[0].mxu0
    %v695 = vpop.f32.mrb[0].mxu0
    %696 = vdwg.mxu0
    %697 = vmatprep.subr.bf16.mxu0 %v595
    %698 = vmatpush1.bf16.msra.mxu0 %v594
    %699 = vmatprep.subr.bf16.mxu0 %v599
    %700 = vmatpush1.bf16.msra.mxu0 %v598
    %701 = vmatprep.subr.bf16.mxu0 %v603
    %702 = vmatpush1.bf16.msra.mxu0 %v602
    %703 = vmatprep.subr.bf16.mxu0 %v607
    %704 = vmatpush1.bf16.msra.mxu0 %v606
    %705 = vmatprep.subr.bf16.mxu0 %v611
    %706 = vmatpush1.bf16.msra.mxu0 %v610
    %707 = vmatprep.subr.bf16.mxu0 %v615
    %708 = vmatpush1.bf16.msra.mxu0 %v614
    %709 = vmatprep.subr.bf16.mxu0 %v619
    %710 = vmatpush1.bf16.msra.mxu0 %v618
    %711 = vmatprep.subr.bf16.mxu0 %v623
    %712 = vmatpush1.bf16.msra.mxu0 %v622
    %713 = vmatprep.subr.bf16.mxu0 0
    %714 = vmatpush1.bf16.msra.mxu0 0
    %715 = vmatprep.subr.bf16.mxu0 0
    %716 = vmatpush1.bf16.msra.mxu0 0
    %717 = vmatprep.subr.bf16.mxu0 0
    %718 = vmatpush1.bf16.msra.mxu0 0
    %719 = vmatprep.subr.bf16.mxu0 0
    %720 = vmatpush1.bf16.msra.mxu0 0
    %721 = vmatprep.subr.bf16.mxu0 0
    %722 = vmatpush1.bf16.msra.mxu0 0
    %723 = vmatprep.subr.bf16.mxu0 0
    %724 = vmatpush1.bf16.msra.mxu0 0
    %725 = vmatprep.subr.bf16.mxu0 0
    %726 = vmatpush1.bf16.msra.mxu0 0
    %727 = vmatprep.subr.bf16.mxu0 0
    %728 = vmatpush1.bf16.msra.mxu0 0
    %729 = vmatprep.mubr.bf16.mxu0 0
    %730 = vmatmul.mubr.bf16.gmra.mrb[0].mxu0 %v463
    %v731 = vpop.f32.mrb[0].mxu0
    %v732 = vadd.f32 0.0, %v731
    %v733 = vpop.f32.mrb[0].mxu0
    %v734 = vadd.f32 0.0, %v733
    %v735 = vpop.f32.mrb[0].mxu0
    %v736 = vpop.f32.mrb[0].mxu0
    %737 = vdwg.mxu0
    %v738 = vadd.f32 %v459, %v691
    %v739 = vadd.f32 %v460, %v693
    %v740 = vadd.f32 %v461, %v732
    %v741 = vadd.f32 %v462, %v734
    %v742 = vxor.u32 %v738, 2147483648
    %v743 = vxor.u32 %v739, 2147483648
    %v744 = vxor.u32 %v740, 2147483648
    %v745 = vmul.f32 %v742, 1.442695
    %v746 = vpow.pop %v745
    %v747 = vmul.f32 %v743, 1.442695
    %v748 = vpow.pop %v747
    %v749 = vmul.f32 %v744, 1.442695
    %v750 = vpow.pop %v749
    %v751 = vadd.f32 %v746, 1.0
    %v752 = vadd.f32 %v748, 1.0
    %v753 = vadd.f32 %v750, 1.0
    %v754 = vrcp.pop %v751
    %v755 = vmul.f32 1.0, %v754
    %v756 = vrcp.pop %v752
    %v757 = vmul.f32 1.0, %v756
    %v758 = vrcp.pop %v753
    %v759 = vmul.f32 1.0, %v758
    %v760 = vtanh.pop %v741
    %v761 = vmul.f32 %v757, %v452
    %v762 = vmul.f32 %v755, %v760
    %v763 = vadd.f32 %v761, %v762
    %v764 = vtanh.pop %v763
    %v765 = vmul.f32 %v759, %v764
    %s766 = scalar_lea.vmem [#allocation2], 8
    %767 = vst [vmem:[%s766] sm:$0xff] %v765
    %s768 = smul.u32 2, 4
    %s769 = smul.addr %s768, 8
    %s770 = scalar_lea.vmem [#allocation5], %s769
    %v771 = vld [vmem:[%s770] sm:$0xff]
    %v772 = vld [vmem:[%s770 + $0x8] sm:$0xff]
    %v773 = vld [vmem:[%s770 + $0x10] sm:$0xff]
    %v774 = vld [vmem:[%s770 + $0x18] sm:$0xff]
    %v775 = vpack.c.bf16 %v765, %v765
    %v776 = vld [vmem:[#allocation8] sm:$0xff]
    %v777 = vld [vmem:[#allocation8 + $0x8] sm:$0xff]
    %v778 = vld [vmem:[#allocation8 + $0x10] sm:$0xff]
    %v779 = vld [vmem:[#allocation8 + $0x18] sm:$0xff]
    %v780 = vld [vmem:[#allocation8 + $0x20] sm:$0xff]
    %v781 = vld [vmem:[#allocation8 + $0x28] sm:$0xff]
    %v782 = vld [vmem:[#allocation8 + $0x30] sm:$0xff]
    %v783 = vld [vmem:[#allocation8 + $0x38] sm:$0xff]
    %v784 = vld [vmem:[#allocation8 + $0x40] sm:$0xff]
    %v785 = vld [vmem:[#allocation8 + $0x48] sm:$0xff]
    %v786 = vld [vmem:[#allocation8 + $0x50] sm:$0xff]
    %v787 = vld [vmem:[#allocation8 + $0x58] sm:$0xff]
    %v788 = vld [vmem:[#allocation8 + $0x60] sm:$0xff]
    %v789 = vld [vmem:[#allocation8 + $0x68] sm:$0xff]
    %v790 = vld [vmem:[#allocation8 + $0x70] sm:$0xff]
    %v791 = vld [vmem:[#allocation8 + $0x78] sm:$0xff]
    %v792 = vld [vmem:[#allocation8 + $0x80] sm:$0xff]
    %v793 = vld [vmem:[#allocation8 + $0x88] sm:$0xff]
    %v794 = vld [vmem:[#allocation8 + $0x90] sm:$0xff]
    %v795 = vld [vmem:[#allocation8 + $0x98] sm:$0xff]
    %v796 = vld [vmem:[#allocation8 + $0xa0] sm:$0xff]
    %v797 = vld [vmem:[#allocation8 + $0xa8] sm:$0xff]
    %v798 = vld [vmem:[#allocation8 + $0xb0] sm:$0xff]
    %v799 = vld [vmem:[#allocation8 + $0xb8] sm:$0xff]
    %v800 = vld [vmem:[#allocation8 + $0xc0] sm:$0xff]
    %v801 = vld [vmem:[#allocation8 + $0xc8] sm:$0xff]
    %v802 = vld [vmem:[#allocation8 + $0xd0] sm:$0xff]
    %v803 = vld [vmem:[#allocation8 + $0xd8] sm:$0xff]
    %v804 = vld [vmem:[#allocation8 + $0xe0] sm:$0xff]
    %v805 = vld [vmem:[#allocation8 + $0xe8] sm:$0xff]
    %v806 = vld [vmem:[#allocation8 + $0xf0] sm:$0xff]
    %v807 = vld [vmem:[#allocation8 + $0xf8] sm:$0xff]
    %v840 = vunpack.c.l.b16 %v776
    %v841 = vunpack.c.h.b16 %v776
    %v842 = vunpack.c.l.b16 %v777
    %v843 = vunpack.c.h.b16 %v777
    %v844 = vunpack.c.l.b16 %v778
    %v845 = vunpack.c.h.b16 %v778
    %v846 = vunpack.c.l.b16 %v779
    %v847 = vunpack.c.h.b16 %v779
    %v848 = vunpack.c.l.b16 %v780
    %v849 = vunpack.c.h.b16 %v780
    %v850 = vunpack.c.l.b16 %v781
    %v851 = vunpack.c.h.b16 %v781
    %v852 = vunpack.c.l.b16 %v782
    %v853 = vunpack.c.h.b16 %v782
    %v854 = vunpack.c.l.b16 %v783
    %v855 = vunpack.c.h.b16 %v783
    %v856 = vunpack.c.l.b16 %v784
    %v857 = vunpack.c.h.b16 %v784
    %v858 = vunpack.c.l.b16 %v785
    %v859 = vunpack.c.h.b16 %v785
    %v860 = vunpack.c.l.b16 %v786
    %v861 = vunpack.c.h.b16 %v786
    %v862 = vunpack.c.l.b16 %v787
    %v863 = vunpack.c.h.b16 %v787
    %v864 = vunpack.c.l.b16 %v788
    %v865 = vunpack.c.h.b16 %v788
    %v866 = vunpack.c.l.b16 %v789
    %v867 = vunpack.c.h.b16 %v789
    %v868 = vunpack.c.l.b16 %v790
    %v869 = vunpack.c.h.b16 %v790
    %v870 = vunpack.c.l.b16 %v791
    %v871 = vunpack.c.h.b16 %v791
    %v872 = vunpack.c.l.b16 %v792
    %v873 = vunpack.c.h.b16 %v792
    %v874 = vunpack.c.l.b16 %v793
    %v875 = vunpack.c.h.b16 %v793
    %v876 = vunpack.c.l.b16 %v794
    %v877 = vunpack.c.h.b16 %v794
    %v878 = vunpack.c.l.b16 %v795
    %v879 = vunpack.c.h.b16 %v795
    %v880 = vunpack.c.l.b16 %v796
    %v881 = vunpack.c.h.b16 %v796
    %v882 = vunpack.c.l.b16 %v797
    %v883 = vunpack.c.h.b16 %v797
    %v884 = vunpack.c.l.b16 %v798
    %v885 = vunpack.c.h.b16 %v798
    %v886 = vunpack.c.l.b16 %v799
    %v887 = vunpack.c.h.b16 %v799
    %v888 = vunpack.c.l.b16 %v800
    %v889 = vunpack.c.h.b16 %v800
    %v890 = vunpack.c.l.b16 %v801
    %v891 = vunpack.c.h.b16 %v801
    %v892 = vunpack.c.l.b16 %v802
    %v893 = vunpack.c.h.b16 %v802
    %v894 = vunpack.c.l.b16 %v803
    %v895 = vunpack.c.h.b16 %v803
    %v896 = vunpack.c.l.b16 %v804
    %v897 = vunpack.c.h.b16 %v804
    %v898 = vunpack.c.l.b16 %v805
    %v899 = vunpack.c.h.b16 %v805
    %v900 = vunpack.c.l.b16 %v806
    %v901 = vunpack.c.h.b16 %v806
    %v902 = vunpack.c.l.b16 %v807
    %v903 = vunpack.c.h.b16 %v807
    %v904 = vpack.c.b16 %v844, %v840
    %v905 = vpack.c.b16 %v845, %v841
    %v906 = vpack.c.b16 %v846, %v842
    %v907 = vpack.c.b16 %v847, %v843
    %v908 = vpack.c.b16 %v852, %v848
    %v909 = vpack.c.b16 %v853, %v849
    %v910 = vpack.c.b16 %v854, %v850
    %v911 = vpack.c.b16 %v855, %v851
    %v912 = vpack.c.b16 %v860, %v856
    %v913 = vpack.c.b16 %v861, %v857
    %v914 = vpack.c.b16 %v862, %v858
    %v915 = vpack.c.b16 %v863, %v859
    %v916 = vpack.c.b16 %v868, %v864
    %v917 = vpack.c.b16 %v869, %v865
    %v918 = vpack.c.b16 %v870, %v866
    %v919 = vpack.c.b16 %v871, %v867
    %v920 = vpack.c.b16 %v876, %v872
    %v921 = vpack.c.b16 %v877, %v873
    %v922 = vpack.c.b16 %v878, %v874
    %v923 = vpack.c.b16 %v879, %v875
    %v924 = vpack.c.b16 %v884, %v880
    %v925 = vpack.c.b16 %v885, %v881
    %v926 = vpack.c.b16 %v886, %v882
    %v927 = vpack.c.b16 %v887, %v883
    %v928 = vpack.c.b16 %v892, %v888
    %v929 = vpack.c.b16 %v893, %v889
    %v930 = vpack.c.b16 %v894, %v890
    %v931 = vpack.c.b16 %v895, %v891
    %v932 = vpack.c.b16 %v900, %v896
    %v933 = vpack.c.b16 %v901, %v897
    %v934 = vpack.c.b16 %v902, %v898
    %v935 = vpack.c.b16 %v903, %v899
    %968 = vmatprep.subr.bf16.mxu0 %v905
    %969 = vmatpush1.bf16.msra.mxu0 %v904
    %970 = vmatprep.subr.bf16.mxu0 %v909
    %971 = vmatpush1.bf16.msra.mxu0 %v908
    %972 = vmatprep.subr.bf16.mxu0 %v913
    %973 = vmatpush1.bf16.msra.mxu0 %v912
    %974 = vmatprep.subr.bf16.mxu0 %v917
    %975 = vmatpush1.bf16.msra.mxu0 %v916
    %976 = vmatprep.subr.bf16.mxu0 %v921
    %977 = vmatpush1.bf16.msra.mxu0 %v920
    %978 = vmatprep.subr.bf16.mxu0 %v925
    %979 = vmatpush1.bf16.msra.mxu0 %v924
    %980 = vmatprep.subr.bf16.mxu0 %v929
    %981 = vmatpush1.bf16.msra.mxu0 %v928
    %982 = vmatprep.subr.bf16.mxu0 %v933
    %983 = vmatpush1.bf16.msra.mxu0 %v932
    %984 = vmatprep.subr.bf16.mxu0 0
    %985 = vmatpush1.bf16.msra.mxu0 0
    %986 = vmatprep.subr.bf16.mxu0 0
    %987 = vmatpush1.bf16.msra.mxu0 0
    %988 = vmatprep.subr.bf16.mxu0 0
    %989 = vmatpush1.bf16.msra.mxu0 0
    %990 = vmatprep.subr.bf16.mxu0 0
    %991 = vmatpush1.bf16.msra.mxu0 0
    %992 = vmatprep.subr.bf16.mxu0 0
    %993 = vmatpush1.bf16.msra.mxu0 0
    %994 = vmatprep.subr.bf16.mxu0 0
    %995 = vmatpush1.bf16.msra.mxu0 0
    %996 = vmatprep.subr.bf16.mxu0 0
    %997 = vmatpush1.bf16.msra.mxu0 0
    %998 = vmatprep.subr.bf16.mxu0 0
    %999 = vmatpush1.bf16.msra.mxu0 0
    %1000 = vmatprep.mubr.bf16.mxu0 0
    %1001 = vmatmul.mubr.bf16.gmra.mrb[0].mxu0 %v775
    %v1002 = vpop.f32.mrb[0].mxu0
    %v1003 = vadd.f32 0.0, %v1002
    %v1004 = vpop.f32.mrb[0].mxu0
    %v1005 = vadd.f32 0.0, %v1004
    %v1006 = vpop.f32.mrb[0].mxu0
    %v1007 = vpop.f32.mrb[0].mxu0
    %1008 = vdwg.mxu0
    %1009 = vmatprep.subr.bf16.mxu0 %v907
    %1010 = vmatpush1.bf16.msra.mxu0 %v906
    %1011 = vmatprep.subr.bf16.mxu0 %v911
    %1012 = vmatpush1.bf16.msra.mxu0 %v910
    %1013 = vmatprep.subr.bf16.mxu0 %v915
    %1014 = vmatpush1.bf16.msra.mxu0 %v914
    %1015 = vmatprep.subr.bf16.mxu0 %v919
    %1016 = vmatpush1.bf16.msra.mxu0 %v918
    %1017 = vmatprep.subr.bf16.mxu0 %v923
    %1018 = vmatpush1.bf16.msra.mxu0 %v922
    %1019 = vmatprep.subr.bf16.mxu0 %v927
    %1020 = vmatpush1.bf16.msra.mxu0 %v926
    %1021 = vmatprep.subr.bf16.mxu0 %v931
    %1022 = vmatpush1.bf16.msra.mxu0 %v930
    %1023 = vmatprep.subr.bf16.mxu0 %v935
    %1024 = vmatpush1.bf16.msra.mxu0 %v934
    %1025 = vmatprep.subr.bf16.mxu0 0
    %1026 = vmatpush1.bf16.msra.mxu0 0
    %1027 = vmatprep.subr.bf16.mxu0 0
    %1028 = vmatpush1.bf16.msra.mxu0 0
    %1029 = vmatprep.subr.bf16.mxu0 0
    %1030 = vmatpush1.bf16.msra.mxu0 0
    %1031 = vmatprep.subr.bf16.mxu0 0
    %1032 = vmatpush1.bf16.msra.mxu0 0
    %1033 = vmatprep.subr.bf16.mxu0 0
    %1034 = vmatpush1.bf16.msra.mxu0 0
    %1035 = vmatprep.subr.bf16.mxu0 0
    %1036 = vmatpush1.bf16.msra.mxu0 0
    %1037 = vmatprep.subr.bf16.mxu0 0
    %1038 = vmatpush1.bf16.msra.mxu0 0
    %1039 = vmatprep.subr.bf16.mxu0 0
    %1040 = vmatpush1.bf16.msra.mxu0 0
    %1041 = vmatprep.mubr.bf16.mxu0 0
    %1042 = vmatmul.mubr.bf16.gmra.mrb[0].mxu0 %v775
    %v1043 = vpop.f32.mrb[0].mxu0
    %v1044 = vadd.f32 0.0, %v1043
    %v1045 = vpop.f32.mrb[0].mxu0
    %v1046 = vadd.f32 0.0, %v1045
    %v1047 = vpop.f32.mrb[0].mxu0
    %v1048 = vpop.f32.mrb[0].mxu0
    %1049 = vdwg.mxu0
    %v1050 = vadd.f32 %v771, %v1003
    %v1051 = vadd.f32 %v772, %v1005
    %v1052 = vadd.f32 %v773, %v1044
    %v1053 = vadd.f32 %v774, %v1046
    %v1054 = vxor.u32 %v1050, 2147483648
    %v1055 = vxor.u32 %v1051, 2147483648
    %v1056 = vxor.u32 %v1052, 2147483648
    %v1057 = vmul.f32 %v1054, 1.442695
    %v1058 = vpow.pop %v1057
    %v1059 = vmul.f32 %v1055, 1.442695
    %v1060 = vpow.pop %v1059
    %v1061 = vmul.f32 %v1056, 1.442695
    %v1062 = vpow.pop %v1061
    %v1063 = vadd.f32 %v1058, 1.0
    %v1064 = vadd.f32 %v1060, 1.0
    %v1065 = vadd.f32 %v1062, 1.0
    %v1066 = vrcp.pop %v1063
    %v1067 = vmul.f32 1.0, %v1066
    %v1068 = vrcp.pop %v1064
    %v1069 = vmul.f32 1.0, %v1068
    %v1070 = vrcp.pop %v1065
    %v1071 = vmul.f32 1.0, %v1070
    %v1072 = vtanh.pop %v1053
    %v1073 = vmul.f32 %v1069, %v763
    %v1074 = vmul.f32 %v1067, %v1072
    %v1075 = vadd.f32 %v1073, %v1074
    %v1076 = vtanh.pop %v1075
    %v1077 = vmul.f32 %v1071, %v1076
    %s1078 = scalar_lea.vmem [#allocation2], 16
    %1079 = vst [vmem:[%s1078] sm:$0xff] %v1077
    %s1080 = smul.u32 3, 4
    %s1081 = smul.addr %s1080, 8
    %s1082 = scalar_lea.vmem [#allocation5], %s1081
    %v1083 = vld [vmem:[%s1082] sm:$0xff]
    %v1084 = vld [vmem:[%s1082 + $0x8] sm:$0xff]
    %v1085 = vld [vmem:[%s1082 + $0x10] sm:$0xff]
    %v1086 = vld [vmem:[%s1082 + $0x18] sm:$0xff]
    %v1087 = vpack.c.bf16 %v1077, %v1077
    %v1088 = vld [vmem:[#allocation8] sm:$0xff]
    %v1089 = vld [vmem:[#allocation8 + $0x8] sm:$0xff]
    %v1090 = vld [vmem:[#allocation8 + $0x10] sm:$0xff]
    %v1091 = vld [vmem:[#allocation8 + $0x18] sm:$0xff]
    %v1092 = vld [vmem:[#allocation8 + $0x20] sm:$0xff]
    %v1093 = vld [vmem:[#allocation8 + $0x28] sm:$0xff]
    %v1094 = vld [vmem:[#allocation8 + $0x30] sm:$0xff]
    %v1095 = vld [vmem:[#allocation8 + $0x38] sm:$0xff]
    %v1096 = vld [vmem:[#allocation8 + $0x40] sm:$0xff]
    %v1097 = vld [vmem:[#allocation8 + $0x48] sm:$0xff]
    %v1098 = vld [vmem:[#allocation8 + $0x50] sm:$0xff]
    %v1099 = vld [vmem:[#allocation8 + $0x58] sm:$0xff]
    %v1100 = vld [vmem:[#allocation8 + $0x60] sm:$0xff]
    %v1101 = vld [vmem:[#allocation8 + $0x68] sm:$0xff]
    %v1102 = vld [vmem:[#allocation8 + $0x70] sm:$0xff]
    %v1103 = vld [vmem:[#allocation8 + $0x78] sm:$0xff]
    %v1104 = vld [vmem:[#allocation8 + $0x80] sm:$0xff]
    %v1105 = vld [vmem:[#allocation8 + $0x88] sm:$0xff]
    %v1106 = vld [vmem:[#allocation8 + $0x90] sm:$0xff]
    %v1107 = vld [vmem:[#allocation8 + $0x98] sm:$0xff]
    %v1108 = vld [vmem:[#allocation8 + $0xa0] sm:$0xff]
    %v1109 = vld [vmem:[#allocation8 + $0xa8] sm:$0xff]
    %v1110 = vld [vmem:[#allocation8 + $0xb0] sm:$0xff]
    %v1111 = vld [vmem:[#allocation8 + $0xb8] sm:$0xff]
    %v1112 = vld [vmem:[#allocation8 + $0xc0] sm:$0xff]
    %v1113 = vld [vmem:[#allocation8 + $0xc8] sm:$0xff]
    %v1114 = vld [vmem:[#allocation8 + $0xd0] sm:$0xff]
    %v1115 = vld [vmem:[#allocation8 + $0xd8] sm:$0xff]
    %v1116 = vld [vmem:[#allocation8 + $0xe0] sm:$0xff]
    %v1117 = vld [vmem:[#allocation8 + $0xe8] sm:$0xff]
    %v1118 = vld [vmem:[#allocation8 + $0xf0] sm:$0xff]
    %v1119 = vld [vmem:[#allocation8 + $0xf8] sm:$0xff]
    %v1152 = vunpack.c.l.b16 %v1088
    %v1153 = vunpack.c.h.b16 %v1088
    %v1154 = vunpack.c.l.b16 %v1089
    %v1155 = vunpack.c.h.b16 %v1089
    %v1156 = vunpack.c.l.b16 %v1090
    %v1157 = vunpack.c.h.b16 %v1090
    %v1158 = vunpack.c.l.b16 %v1091
    %v1159 = vunpack.c.h.b16 %v1091
    %v1160 = vunpack.c.l.b16 %v1092
    %v1161 = vunpack.c.h.b16 %v1092
    %v1162 = vunpack.c.l.b16 %v1093
    %v1163 = vunpack.c.h.b16 %v1093
    %v1164 = vunpack.c.l.b16 %v1094
    %v1165 = vunpack.c.h.b16 %v1094
    %v1166 = vunpack.c.l.b16 %v1095
    %v1167 = vunpack.c.h.b16 %v1095
    %v1168 = vunpack.c.l.b16 %v1096
    %v1169 = vunpack.c.h.b16 %v1096
    %v1170 = vunpack.c.l.b16 %v1097
    %v1171 = vunpack.c.h.b16 %v1097
    %v1172 = vunpack.c.l.b16 %v1098
    %v1173 = vunpack.c.h.b16 %v1098
    %v1174 = vunpack.c.l.b16 %v1099
    %v1175 = vunpack.c.h.b16 %v1099
    %v1176 = vunpack.c.l.b16 %v1100
    %v1177 = vunpack.c.h.b16 %v1100
    %v1178 = vunpack.c.l.b16 %v1101
    %v1179 = vunpack.c.h.b16 %v1101
    %v1180 = vunpack.c.l.b16 %v1102
    %v1181 = vunpack.c.h.b16 %v1102
    %v1182 = vunpack.c.l.b16 %v1103
    %v1183 = vunpack.c.h.b16 %v1103
    %v1184 = vunpack.c.l.b16 %v1104
    %v1185 = vunpack.c.h.b16 %v1104
    %v1186 = vunpack.c.l.b16 %v1105
    %v1187 = vunpack.c.h.b16 %v1105
    %v1188 = vunpack.c.l.b16 %v1106
    %v1189 = vunpack.c.h.b16 %v1106
    %v1190 = vunpack.c.l.b16 %v1107
    %v1191 = vunpack.c.h.b16 %v1107
    %v1192 = vunpack.c.l.b16 %v1108
    %v1193 = vunpack.c.h.b16 %v1108
    %v1194 = vunpack.c.l.b16 %v1109
    %v1195 = vunpack.c.h.b16 %v1109
    %v1196 = vunpack.c.l.b16 %v1110
    %v1197 = vunpack.c.h.b16 %v1110
    %v1198 = vunpack.c.l.b16 %v1111
    %v1199 = vunpack.c.h.b16 %v1111
    %v1200 = vunpack.c.l.b16 %v1112
    %v1201 = vunpack.c.h.b16 %v1112
    %v1202 = vunpack.c.l.b16 %v1113
    %v1203 = vunpack.c.h.b16 %v1113
    %v1204 = vunpack.c.l.b16 %v1114
    %v1205 = vunpack.c.h.b16 %v1114
    %v1206 = vunpack.c.l.b16 %v1115
    %v1207 = vunpack.c.h.b16 %v1115
    %v1208 = vunpack.c.l.b16 %v1116
    %v1209 = vunpack.c.h.b16 %v1116
    %v1210 = vunpack.c.l.b16 %v1117
    %v1211 = vunpack.c.h.b16 %v1117
    %v1212 = vunpack.c.l.b16 %v1118
    %v1213 = vunpack.c.h.b16 %v1118
    %v1214 = vunpack.c.l.b16 %v1119
    %v1215 = vunpack.c.h.b16 %v1119
    %v1216 = vpack.c.b16 %v1156, %v1152
    %v1217 = vpack.c.b16 %v1157, %v1153
    %v1218 = vpack.c.b16 %v1158, %v1154
    %v1219 = vpack.c.b16 %v1159, %v1155
    %v1220 = vpack.c.b16 %v1164, %v1160
    %v1221 = vpack.c.b16 %v1165, %v1161
    %v1222 = vpack.c.b16 %v1166, %v1162
    %v1223 = vpack.c.b16 %v1167, %v1163
    %v1224 = vpack.c.b16 %v1172, %v1168
    %v1225 = vpack.c.b16 %v1173, %v1169
    %v1226 = vpack.c.b16 %v1174, %v1170
    %v1227 = vpack.c.b16 %v1175, %v1171
    %v1228 = vpack.c.b16 %v1180, %v1176
    %v1229 = vpack.c.b16 %v1181, %v1177
    %v1230 = vpack.c.b16 %v1182, %v1178
    %v1231 = vpack.c.b16 %v1183, %v1179
    %v1232 = vpack.c.b16 %v1188, %v1184
    %v1233 = vpack.c.b16 %v1189, %v1185
    %v1234 = vpack.c.b16 %v1190, %v1186
    %v1235 = vpack.c.b16 %v1191, %v1187
    %v1236 = vpack.c.b16 %v1196, %v1192
    %v1237 = vpack.c.b16 %v1197, %v1193
    %v1238 = vpack.c.b16 %v1198, %v1194
    %v1239 = vpack.c.b16 %v1199, %v1195
    %v1240 = vpack.c.b16 %v1204, %v1200
    %v1241 = vpack.c.b16 %v1205, %v1201
    %v1242 = vpack.c.b16 %v1206, %v1202
    %v1243 = vpack.c.b16 %v1207, %v1203
    %v1244 = vpack.c.b16 %v1212, %v1208
    %v1245 = vpack.c.b16 %v1213, %v1209
    %v1246 = vpack.c.b16 %v1214, %v1210
    %v1247 = vpack.c.b16 %v1215, %v1211
    %1280 = vmatprep.subr.bf16.mxu0 %v1217
    %1281 = vmatpush1.bf16.msra.mxu0 %v1216
    %1282 = vmatprep.subr.bf16.mxu0 %v1221
    %1283 = vmatpush1.bf16.msra.mxu0 %v1220
    %1284 = vmatprep.subr.bf16.mxu0 %v1225
    %1285 = vmatpush1.bf16.msra.mxu0 %v1224
    %1286 = vmatprep.subr.bf16.mxu0 %v1229
    %1287 = vmatpush1.bf16.msra.mxu0 %v1228
    %1288 = vmatprep.subr.bf16.mxu0 %v1233
    %1289 = vmatpush1.bf16.msra.mxu0 %v1232
    %1290 = vmatprep.subr.bf16.mxu0 %v1237
    %1291 = vmatpush1.bf16.msra.mxu0 %v1236
    %1292 = vmatprep.subr.bf16.mxu0 %v1241
    %1293 = vmatpush1.bf16.msra.mxu0 %v1240
    %1294 = vmatprep.subr.bf16.mxu0 %v1245
    %1295 = vmatpush1.bf16.msra.mxu0 %v1244
    %1296 = vmatprep.subr.bf16.mxu0 0
    %1297 = vmatpush1.bf16.msra.mxu0 0
    %1298 = vmatprep.subr.bf16.mxu0 0
    %1299 = vmatpush1.bf16.msra.mxu0 0
    %1300 = vmatprep.subr.bf16.mxu0 0
    %1301 = vmatpush1.bf16.msra.mxu0 0
    %1302 = vmatprep.subr.bf16.mxu0 0
    %1303 = vmatpush1.bf16.msra.mxu0 0
    %1304 = vmatprep.subr.bf16.mxu0 0
    %1305 = vmatpush1.bf16.msra.mxu0 0
    %1306 = vmatprep.subr.bf16.mxu0 0
    %1307 = vmatpush1.bf16.msra.mxu0 0
    %1308 = vmatprep.subr.bf16.mxu0 0
    %1309 = vmatpush1.bf16.msra.mxu0 0
    %1310 = vmatprep.subr.bf16.mxu0 0
    %1311 = vmatpush1.bf16.msra.mxu0 0
    %1312 = vmatprep.mubr.bf16.mxu0 0
    %1313 = vmatmul.mubr.bf16.gmra.mrb[0].mxu0 %v1087
    %v1314 = vpop.f32.mrb[0].mxu0
    %v1315 = vadd.f32 0.0, %v1314
    %v1316 = vpop.f32.mrb[0].mxu0
    %v1317 = vadd.f32 0.0, %v1316
    %v1318 = vpop.f32.mrb[0].mxu0
    %v1319 = vpop.f32.mrb[0].mxu0
    %1320 = vdwg.mxu0
    %1321 = vmatprep.subr.bf16.mxu0 %v1219
    %1322 = vmatpush1.bf16.msra.mxu0 %v1218
    %1323 = vmatprep.subr.bf16.mxu0 %v1223
    %1324 = vmatpush1.bf16.msra.mxu0 %v1222
    %1325 = vmatprep.subr.bf16.mxu0 %v1227
    %1326 = vmatpush1.bf16.msra.mxu0 %v1226
    %1327 = vmatprep.subr.bf16.mxu0 %v1231
    %1328 = vmatpush1.bf16.msra.mxu0 %v1230
    %1329 = vmatprep.subr.bf16.mxu0 %v1235
    %1330 = vmatpush1.bf16.msra.mxu0 %v1234
    %1331 = vmatprep.subr.bf16.mxu0 %v1239
    %1332 = vmatpush1.bf16.msra.mxu0 %v1238
    %1333 = vmatprep.subr.bf16.mxu0 %v1243
    %1334 = vmatpush1.bf16.msra.mxu0 %v1242
    %1335 = vmatprep.subr.bf16.mxu0 %v1247
    %1336 = vmatpush1.bf16.msra.mxu0 %v1246
    %1337 = vmatprep.subr.bf16.mxu0 0
    %1338 = vmatpush1.bf16.msra.mxu0 0
    %1339 = vmatprep.subr.bf16.mxu0 0
    %1340 = vmatpush1.bf16.msra.mxu0 0
    %1341 = vmatprep.subr.bf16.mxu0 0
    %1342 = vmatpush1.bf16.msra.mxu0 0
    %1343 = vmatprep.subr.bf16.mxu0 0
    %1344 = vmatpush1.bf16.msra.mxu0 0
    %1345 = vmatprep.subr.bf16.mxu0 0
    %1346 = vmatpush1.bf16.msra.mxu0 0
    %1347 = vmatprep.subr.bf16.mxu0 0
    %1348 = vmatpush1.bf16.msra.mxu0 0
    %1349 = vmatprep.subr.bf16.mxu0 0
    %1350 = vmatpush1.bf16.msra.mxu0 0
    %1351 = vmatprep.subr.bf16.mxu0 0
    %1352 = vmatpush1.bf16.msra.mxu0 0
    %1353 = vmatprep.mubr.bf16.mxu0 0
    %1354 = vmatmul.mubr.bf16.gmra.mrb[0].mxu0 %v1087
    %v1355 = vpop.f32.mrb[0].mxu0
    %v1356 = vadd.f32 0.0, %v1355
    %v1357 = vpop.f32.mrb[0].mxu0
    %v1358 = vadd.f32 0.0, %v1357
    %v1359 = vpop.f32.mrb[0].mxu0
    %v1360 = vpop.f32.mrb[0].mxu0
    %1361 = vdwg.mxu0
    %v1362 = vadd.f32 %v1083, %v1315
    %v1363 = vadd.f32 %v1084, %v1317
    %v1364 = vadd.f32 %v1085, %v1356
    %v1365 = vadd.f32 %v1086, %v1358
    %v1366 = vxor.u32 %v1362, 2147483648
    %v1367 = vxor.u32 %v1363, 2147483648
    %v1368 = vxor.u32 %v1364, 2147483648
    %v1369 = vmul.f32 %v1366, 1.442695
    %v1370 = vpow.pop %v1369
    %v1371 = vmul.f32 %v1367, 1.442695
    %v1372 = vpow.pop %v1371
    %v1373 = vmul.f32 %v1368, 1.442695
    %v1374 = vpow.pop %v1373
    %v1375 = vadd.f32 %v1370, 1.0
    %v1376 = vadd.f32 %v1372, 1.0
    %v1377 = vadd.f32 %v1374, 1.0
    %v1378 = vrcp.pop %v1375
    %v1379 = vmul.f32 1.0, %v1378
    %v1380 = vrcp.pop %v1376
    %v1381 = vmul.f32 1.0, %v1380
    %v1382 = vrcp.pop %v1377
    %v1383 = vmul.f32 1.0, %v1382
    %v1384 = vtanh.pop %v1365
    %v1385 = vmul.f32 %v1381, %v1075
    %v1386 = vmul.f32 %v1379, %v1384
    %v1387 = vadd.f32 %v1385, %v1386
    %v1388 = vtanh.pop %v1387
    %v1389 = vmul.f32 %v1383, %v1388
    %s1390 = scalar_lea.vmem [#allocation2], 24
    %1391 = vst [vmem:[%s1390] sm:$0xff] %v1389
    %s1392 = smul.u32 4, 4
    %s1393 = smul.addr %s1392, 8
    %s1394 = scalar_lea.vmem [#allocation5], %s1393
    %v1395 = vld [vmem:[%s1394] sm:$0xff]
    %v1396 = vld [vmem:[%s1394 + $0x8] sm:$0xff]
    %v1397 = vld [vmem:[%s1394 + $0x10] sm:$0xff]
    %v1398 = vld [vmem:[%s1394 + $0x18] sm:$0xff]
    %v1399 = vpack.c.bf16 %v1389, %v1389
    %v1400 = vld [vmem:[#allocation8] sm:$0xff]
    %v1401 = vld [vmem:[#allocation8 + $0x8] sm:$0xff]
    %v1402 = vld [vmem:[#allocation8 + $0x10] sm:$0xff]
    %v1403 = vld [vmem:[#allocation8 + $0x18] sm:$0xff]
    %v1404 = vld [vmem:[#allocation8 + $0x20] sm:$0xff]
    %v1405 = vld [vmem:[#allocation8 + $0x28] sm:$0xff]
    %v1406 = vld [vmem:[#allocation8 + $0x30] sm:$0xff]
    %v1407 = vld [vmem:[#allocation8 + $0x38] sm:$0xff]
    %v1408 = vld [vmem:[#allocation8 + $0x40] sm:$0xff]
    %v1409 = vld [vmem:[#allocation8 + $0x48] sm:$0xff]
    %v1410 = vld [vmem:[#allocation8 + $0x50] sm:$0xff]
    %v1411 = vld [vmem:[#allocation8 + $0x58] sm:$0xff]
    %v1412 = vld [vmem:[#allocation8 + $0x60] sm:$0xff]
    %v1413 = vld [vmem:[#allocation8 + $0x68] sm:$0xff]
    %v1414 = vld [vmem:[#allocation8 + $0x70] sm:$0xff]
    %v1415 = vld [vmem:[#allocation8 + $0x78] sm:$0xff]
    %v1416 = vld [vmem:[#allocation8 + $0x80] sm:$0xff]
    %v1417 = vld [vmem:[#allocation8 + $0x88] sm:$0xff]
    %v1418 = vld [vmem:[#allocation8 + $0x90] sm:$0xff]
    %v1419 = vld [vmem:[#allocation8 + $0x98] sm:$0xff]
    %v1420 = vld [vmem:[#allocation8 + $0xa0] sm:$0xff]
    %v1421 = vld [vmem:[#allocation8 + $0xa8] sm:$0xff]
    %v1422 = vld [vmem:[#allocation8 + $0xb0] sm:$0xff]
    %v1423 = vld [vmem:[#allocation8 + $0xb8] sm:$0xff]
    %v1424 = vld [vmem:[#allocation8 + $0xc0] sm:$0xff]
    %v1425 = vld [vmem:[#allocation8 + $0xc8] sm:$0xff]
    %v1426 = vld [vmem:[#allocation8 + $0xd0] sm:$0xff]
    %v1427 = vld [vmem:[#allocation8 + $0xd8] sm:$0xff]
    %v1428 = vld [vmem:[#allocation8 + $0xe0] sm:$0xff]
    %v1429 = vld [vmem:[#allocation8 + $0xe8] sm:$0xff]
    %v1430 = vld [vmem:[#allocation8 + $0xf0] sm:$0xff]
    %v1431 = vld [vmem:[#allocation8 + $0xf8] sm:$0xff]
    %v1464 = vunpack.c.l.b16 %v1400
    %v1465 = vunpack.c.h.b16 %v1400
    %v1466 = vunpack.c.l.b16 %v1401
    %v1467 = vunpack.c.h.b16 %v1401
    %v1468 = vunpack.c.l.b16 %v1402
    %v1469 = vunpack.c.h.b16 %v1402
    %v1470 = vunpack.c.l.b16 %v1403
    %v1471 = vunpack.c.h.b16 %v1403
    %v1472 = vunpack.c.l.b16 %v1404
    %v1473 = vunpack.c.h.b16 %v1404
    %v1474 = vunpack.c.l.b16 %v1405
    %v1475 = vunpack.c.h.b16 %v1405
    %v1476 = vunpack.c.l.b16 %v1406
    %v1477 = vunpack.c.h.b16 %v1406
    %v1478 = vunpack.c.l.b16 %v1407
    %v1479 = vunpack.c.h.b16 %v1407
    %v1480 = vunpack.c.l.b16 %v1408
    %v1481 = vunpack.c.h.b16 %v1408
    %v1482 = vunpack.c.l.b16 %v1409
    %v1483 = vunpack.c.h.b16 %v1409
    %v1484 = vunpack.c.l.b16 %v1410
    %v1485 = vunpack.c.h.b16 %v1410
    %v1486 = vunpack.c.l.b16 %v1411
    %v1487 = vunpack.c.h.b16 %v1411
    %v1488 = vunpack.c.l.b16 %v1412
    %v1489 = vunpack.c.h.b16 %v1412
    %v1490 = vunpack.c.l.b16 %v1413
    %v1491 = vunpack.c.h.b16 %v1413
    %v1492 = vunpack.c.l.b16 %v1414
    %v1493 = vunpack.c.h.b16 %v1414
    %v1494 = vunpack.c.l.b16 %v1415
    %v1495 = vunpack.c.h.b16 %v1415
    %v1496 = vunpack.c.l.b16 %v1416
    %v1497 = vunpack.c.h.b16 %v1416
    %v1498 = vunpack.c.l.b16 %v1417
    %v1499 = vunpack.c.h.b16 %v1417
    %v1500 = vunpack.c.l.b16 %v1418
    %v1501 = vunpack.c.h.b16 %v1418
    %v1502 = vunpack.c.l.b16 %v1419
    %v1503 = vunpack.c.h.b16 %v1419
    %v1504 = vunpack.c.l.b16 %v1420
    %v1505 = vunpack.c.h.b16 %v1420
    %v1506 = vunpack.c.l.b16 %v1421
    %v1507 = vunpack.c.h.b16 %v1421
    %v1508 = vunpack.c.l.b16 %v1422
    %v1509 = vunpack.c.h.b16 %v1422
    %v1510 = vunpack.c.l.b16 %v1423
    %v1511 = vunpack.c.h.b16 %v1423
    %v1512 = vunpack.c.l.b16 %v1424
    %v1513 = vunpack.c.h.b16 %v1424
    %v1514 = vunpack.c.l.b16 %v1425
    %v1515 = vunpack.c.h.b16 %v1425
    %v1516 = vunpack.c.l.b16 %v1426
    %v1517 = vunpack.c.h.b16 %v1426
    %v1518 = vunpack.c.l.b16 %v1427
    %v1519 = vunpack.c.h.b16 %v1427
    %v1520 = vunpack.c.l.b16 %v1428
    %v1521 = vunpack.c.h.b16 %v1428
    %v1522 = vunpack.c.l.b16 %v1429
    %v1523 = vunpack.c.h.b16 %v1429
    %v1524 = vunpack.c.l.b16 %v1430
    %v1525 = vunpack.c.h.b16 %v1430
    %v1526 = vunpack.c.l.b16 %v1431
    %v1527 = vunpack.c.h.b16 %v1431
    %v1528 = vpack.c.b16 %v1468, %v1464
    %v1529 = vpack.c.b16 %v1469, %v1465
    %v1530 = vpack.c.b16 %v1470, %v1466
    %v1531 = vpack.c.b16 %v1471, %v1467
    %v1532 = vpack.c.b16 %v1476, %v1472
    %v1533 = vpack.c.b16 %v1477, %v1473
    %v1534 = vpack.c.b16 %v1478, %v1474
    %v1535 = vpack.c.b16 %v1479, %v1475
    %v1536 = vpack.c.b16 %v1484, %v1480
    %v1537 = vpack.c.b16 %v1485, %v1481
    %v1538 = vpack.c.b16 %v1486, %v1482
    %v1539 = vpack.c.b16 %v1487, %v1483
    %v1540 = vpack.c.b16 %v1492, %v1488
    %v1541 = vpack.c.b16 %v1493, %v1489
    %v1542 = vpack.c.b16 %v1494, %v1490
    %v1543 = vpack.c.b16 %v1495, %v1491
    %v1544 = vpack.c.b16 %v1500, %v1496
    %v1545 = vpack.c.b16 %v1501, %v1497
    %v1546 = vpack.c.b16 %v1502, %v1498
    %v1547 = vpack.c.b16 %v1503, %v1499
    %v1548 = vpack.c.b16 %v1508, %v1504
    %v1549 = vpack.c.b16 %v1509, %v1505
    %v1550 = vpack.c.b16 %v1510, %v1506
    %v1551 = vpack.c.b16 %v1511, %v1507
    %v1552 = vpack.c.b16 %v1516, %v1512
    %v1553 = vpack.c.b16 %v1517, %v1513
    %v1554 = vpack.c.b16 %v1518, %v1514
    %v1555 = vpack.c.b16 %v1519, %v1515
    %v1556 = vpack.c.b16 %v1524, %v1520
    %v1557 = vpack.c.b16 %v1525, %v1521
    %v1558 = vpack.c.b16 %v1526, %v1522
    %v1559 = vpack.c.b16 %v1527, %v1523
    %1592 = vmatprep.subr.bf16.mxu0 %v1529
    %1593 = vmatpush1.bf16.msra.mxu0 %v1528
    %1594 = vmatprep.subr.bf16.mxu0 %v1533
    %1595 = vmatpush1.bf16.msra.mxu0 %v1532
    %1596 = vmatprep.subr.bf16.mxu0 %v1537
    %1597 = vmatpush1.bf16.msra.mxu0 %v1536
    %1598 = vmatprep.subr.bf16.mxu0 %v1541
    %1599 = vmatpush1.bf16.msra.mxu0 %v1540
    %1600 = vmatprep.subr.bf16.mxu0 %v1545
    %1601 = vmatpush1.bf16.msra.mxu0 %v1544
    %1602 = vmatprep.subr.bf16.mxu0 %v1549
    %1603 = vmatpush1.bf16.msra.mxu0 %v1548
    %1604 = vmatprep.subr.bf16.mxu0 %v1553
    %1605 = vmatpush1.bf16.msra.mxu0 %v1552
    %1606 = vmatprep.subr.bf16.mxu0 %v1557
    %1607 = vmatpush1.bf16.msra.mxu0 %v1556
    %1608 = vmatprep.subr.bf16.mxu0 0
    %1609 = vmatpush1.bf16.msra.mxu0 0
    %1610 = vmatprep.subr.bf16.mxu0 0
    %1611 = vmatpush1.bf16.msra.mxu0 0
    %1612 = vmatprep.subr.bf16.mxu0 0
    %1613 = vmatpush1.bf16.msra.mxu0 0
    %1614 = vmatprep.subr.bf16.mxu0 0
    %1615 = vmatpush1.bf16.msra.mxu0 0
    %1616 = vmatprep.subr.bf16.mxu0 0
    %1617 = vmatpush1.bf16.msra.mxu0 0
    %1618 = vmatprep.subr.bf16.mxu0 0
    %1619 = vmatpush1.bf16.msra.mxu0 0
    %1620 = vmatprep.subr.bf16.mxu0 0
    %1621 = vmatpush1.bf16.msra.mxu0 0
    %1622 = vmatprep.subr.bf16.mxu0 0
    %1623 = vmatpush1.bf16.msra.mxu0 0
    %1624 = vmatprep.mubr.bf16.mxu0 0
    %1625 = vmatmul.mubr.bf16.gmra.mrb[0].mxu0 %v1399
    %v1626 = vpop.f32.mrb[0].mxu0
    %v1627 = vadd.f32 0.0, %v1626
    %v1628 = vpop.f32.mrb[0].mxu0
    %v1629 = vadd.f32 0.0, %v1628
    %v1630 = vpop.f32.mrb[0].mxu0
    %v1631 = vpop.f32.mrb[0].mxu0
    %1632 = vdwg.mxu0
    %1633 = vmatprep.subr.bf16.mxu0 %v1531
    %1634 = vmatpush1.bf16.msra.mxu0 %v1530
    %1635 = vmatprep.subr.bf16.mxu0 %v1535
    %1636 = vmatpush1.bf16.msra.mxu0 %v1534
    %1637 = vmatprep.subr.bf16.mxu0 %v1539
    %1638 = vmatpush1.bf16.msra.mxu0 %v1538
    %1639 = vmatprep.subr.bf16.mxu0 %v1543
    %1640 = vmatpush1.bf16.msra.mxu0 %v1542
    %1641 = vmatprep.subr.bf16.mxu0 %v1547
    %1642 = vmatpush1.bf16.msra.mxu0 %v1546
    %1643 = vmatprep.subr.bf16.mxu0 %v1551
    %1644 = vmatpush1.bf16.msra.mxu0 %v1550
    %1645 = vmatprep.subr.bf16.mxu0 %v1555
    %1646 = vmatpush1.bf16.msra.mxu0 %v1554
    %1647 = vmatprep.subr.bf16.mxu0 %v1559
    %1648 = vmatpush1.bf16.msra.mxu0 %v1558
    %1649 = vmatprep.subr.bf16.mxu0 0
    %1650 = vmatpush1.bf16.msra.mxu0 0
    %1651 = vmatprep.subr.bf16.mxu0 0
    %1652 = vmatpush1.bf16.msra.mxu0 0
    %1653 = vmatprep.subr.bf16.mxu0 0
    %1654 = vmatpush1.bf16.msra.mxu0 0
    %1655 = vmatprep.subr.bf16.mxu0 0
    %1656 = vmatpush1.bf16.msra.mxu0 0
    %1657 = vmatprep.subr.bf16.mxu0 0
    %1658 = vmatpush1.bf16.msra.mxu0 0
    %1659 = vmatprep.subr.bf16.mxu0 0
    %1660 = vmatpush1.bf16.msra.mxu0 0
    %1661 = vmatprep.subr.bf16.mxu0 0
    %1662 = vmatpush1.bf16.msra.mxu0 0
    %1663 = vmatprep.subr.bf16.mxu0 0
    %1664 = vmatpush1.bf16.msra.mxu0 0
    %1665 = vmatprep.mubr.bf16.mxu0 0
    %1666 = vmatmul.mubr.bf16.gmra.mrb[0].mxu0 %v1399
    %v1667 = vpop.f32.mrb[0].mxu0
    %v1668 = vadd.f32 0.0, %v1667
    %v1669 = vpop.f32.mrb[0].mxu0
    %v1670 = vadd.f32 0.0, %v1669
    %v1671 = vpop.f32.mrb[0].mxu0
    %v1672 = vpop.f32.mrb[0].mxu0
    %1673 = vdwg.mxu0
    %v1674 = vadd.f32 %v1395, %v1627
    %v1675 = vadd.f32 %v1396, %v1629
    %v1676 = vadd.f32 %v1397, %v1668
    %v1677 = vadd.f32 %v1398, %v1670
    %v1678 = vxor.u32 %v1674, 2147483648
    %v1679 = vxor.u32 %v1675, 2147483648
    %v1680 = vxor.u32 %v1676, 2147483648
    %v1681 = vmul.f32 %v1678, 1.442695
    %v1682 = vpow.pop %v1681
    %v1683 = vmul.f32 %v1679, 1.442695
    %v1684 = vpow.pop %v1683
    %v1685 = vmul.f32 %v1680, 1.442695
    %v1686 = vpow.pop %v1685
    %v1687 = vadd.f32 %v1682, 1.0
    %v1688 = vadd.f32 %v1684, 1.0
    %v1689 = vadd.f32 %v1686, 1.0
    %v1690 = vrcp.pop %v1687
    %v1691 = vmul.f32 1.0, %v1690
    %v1692 = vrcp.pop %v1688
    %v1693 = vmul.f32 1.0, %v1692
    %v1694 = vrcp.pop %v1689
    %v1695 = vmul.f32 1.0, %v1694
    %v1696 = vtanh.pop %v1677
    %v1697 = vmul.f32 %v1693, %v1387
    %v1698 = vmul.f32 %v1691, %v1696
    %v1699 = vadd.f32 %v1697, %v1698
    %v1700 = vtanh.pop %v1699
    %v1701 = vmul.f32 %v1695, %v1700
    %s1702 = scalar_lea.vmem [#allocation2], 32
    %1703 = vst [vmem:[%s1702] sm:$0xff] %v1701
    %s1704 = smul.u32 5, 4
    %s1705 = smul.addr %s1704, 8
    %s1706 = scalar_lea.vmem [#allocation5], %s1705
    %v1707 = vld [vmem:[%s1706] sm:$0xff]
    %v1708 = vld [vmem:[%s1706 + $0x8] sm:$0xff]
    %v1709 = vld [vmem:[%s1706 + $0x10] sm:$0xff]
    %v1710 = vld [vmem:[%s1706 + $0x18] sm:$0xff]
    %v1711 = vpack.c.bf16 %v1701, %v1701
    %v1712 = vld [vmem:[#allocation8] sm:$0xff]
    %v1713 = vld [vmem:[#allocation8 + $0x8] sm:$0xff]
    %v1714 = vld [vmem:[#allocation8 + $0x10] sm:$0xff]
    %v1715 = vld [vmem:[#allocation8 + $0x18] sm:$0xff]
    %v1716 = vld [vmem:[#allocation8 + $0x20] sm:$0xff]
    %v1717 = vld [vmem:[#allocation8 + $0x28] sm:$0xff]
    %v1718 = vld [vmem:[#allocation8 + $0x30] sm:$0xff]
    %v1719 = vld [vmem:[#allocation8 + $0x38] sm:$0xff]
    %v1720 = vld [vmem:[#allocation8 + $0x40] sm:$0xff]
    %v1721 = vld [vmem:[#allocation8 + $0x48] sm:$0xff]
    %v1722 = vld [vmem:[#allocation8 + $0x50] sm:$0xff]
    %v1723 = vld [vmem:[#allocation8 + $0x58] sm:$0xff]
    %v1724 = vld [vmem:[#allocation8 + $0x60] sm:$0xff]
    %v1725 = vld [vmem:[#allocation8 + $0x68] sm:$0xff]
    %v1726 = vld [vmem:[#allocation8 + $0x70] sm:$0xff]
    %v1727 = vld [vmem:[#allocation8 + $0x78] sm:$0xff]
    %v1728 = vld [vmem:[#allocation8 + $0x80] sm:$0xff]
    %v1729 = vld [vmem:[#allocation8 + $0x88] sm:$0xff]
    %v1730 = vld [vmem:[#allocation8 + $0x90] sm:$0xff]
    %v1731 = vld [vmem:[#allocation8 + $0x98] sm:$0xff]
    %v1732 = vld [vmem:[#allocation8 + $0xa0] sm:$0xff]
    %v1733 = vld [vmem:[#allocation8 + $0xa8] sm:$0xff]
    %v1734 = vld [vmem:[#allocation8 + $0xb0] sm:$0xff]
    %v1735 = vld [vmem:[#allocation8 + $0xb8] sm:$0xff]
    %v1736 = vld [vmem:[#allocation8 + $0xc0] sm:$0xff]
    %v1737 = vld [vmem:[#allocation8 + $0xc8] sm:$0xff]
    %v1738 = vld [vmem:[#allocation8 + $0xd0] sm:$0xff]
    %v1739 = vld [vmem:[#allocation8 + $0xd8] sm:$0xff]
    %v1740 = vld [vmem:[#allocation8 + $0xe0] sm:$0xff]
    %v1741 = vld [vmem:[#allocation8 + $0xe8] sm:$0xff]
    %v1742 = vld [vmem:[#allocation8 + $0xf0] sm:$0xff]
    %v1743 = vld [vmem:[#allocation8 + $0xf8] sm:$0xff]
    %v1776 = vunpack.c.l.b16 %v1712
    %v1777 = vunpack.c.h.b16 %v1712
    %v1778 = vunpack.c.l.b16 %v1713
    %v1779 = vunpack.c.h.b16 %v1713
    %v1780 = vunpack.c.l.b16 %v1714
    %v1781 = vunpack.c.h.b16 %v1714
    %v1782 = vunpack.c.l.b16 %v1715
    %v1783 = vunpack.c.h.b16 %v1715
    %v1784 = vunpack.c.l.b16 %v1716
    %v1785 = vunpack.c.h.b16 %v1716
    %v1786 = vunpack.c.l.b16 %v1717
    %v1787 = vunpack.c.h.b16 %v1717
    %v1788 = vunpack.c.l.b16 %v1718
    %v1789 = vunpack.c.h.b16 %v1718
    %v1790 = vunpack.c.l.b16 %v1719
    %v1791 = vunpack.c.h.b16 %v1719
    %v1792 = vunpack.c.l.b16 %v1720
    %v1793 = vunpack.c.h.b16 %v1720
    %v1794 = vunpack.c.l.b16 %v1721
    %v1795 = vunpack.c.h.b16 %v1721
    %v1796 = vunpack.c.l.b16 %v1722
    %v1797 = vunpack.c.h.b16 %v1722
    %v1798 = vunpack.c.l.b16 %v1723
    %v1799 = vunpack.c.h.b16 %v1723
    %v1800 = vunpack.c.l.b16 %v1724
    %v1801 = vunpack.c.h.b16 %v1724
    %v1802 = vunpack.c.l.b16 %v1725
    %v1803 = vunpack.c.h.b16 %v1725
    %v1804 = vunpack.c.l.b16 %v1726
    %v1805 = vunpack.c.h.b16 %v1726
    %v1806 = vunpack.c.l.b16 %v1727
    %v1807 = vunpack.c.h.b16 %v1727
    %v1808 = vunpack.c.l.b16 %v1728
    %v1809 = vunpack.c.h.b16 %v1728
    %v1810 = vunpack.c.l.b16 %v1729
    %v1811 = vunpack.c.h.b16 %v1729
    %v1812 = vunpack.c.l.b16 %v1730
    %v1813 = vunpack.c.h.b16 %v1730
    %v1814 = vunpack.c.l.b16 %v1731
    %v1815 = vunpack.c.h.b16 %v1731
    %v1816 = vunpack.c.l.b16 %v1732
    %v1817 = vunpack.c.h.b16 %v1732
    %v1818 = vunpack.c.l.b16 %v1733
    %v1819 = vunpack.c.h.b16 %v1733
    %v1820 = vunpack.c.l.b16 %v1734
    %v1821 = vunpack.c.h.b16 %v1734
    %v1822 = vunpack.c.l.b16 %v1735
    %v1823 = vunpack.c.h.b16 %v1735
    %v1824 = vunpack.c.l.b16 %v1736
    %v1825 = vunpack.c.h.b16 %v1736
    %v1826 = vunpack.c.l.b16 %v1737
    %v1827 = vunpack.c.h.b16 %v1737
    %v1828 = vunpack.c.l.b16 %v1738
    %v1829 = vunpack.c.h.b16 %v1738
    %v1830 = vunpack.c.l.b16 %v1739
    %v1831 = vunpack.c.h.b16 %v1739
    %v1832 = vunpack.c.l.b16 %v1740
    %v1833 = vunpack.c.h.b16 %v1740
    %v1834 = vunpack.c.l.b16 %v1741
    %v1835 = vunpack.c.h.b16 %v1741
    %v1836 = vunpack.c.l.b16 %v1742
    %v1837 = vunpack.c.h.b16 %v1742
    %v1838 = vunpack.c.l.b16 %v1743
    %v1839 = vunpack.c.h.b16 %v1743
    %v1840 = vpack.c.b16 %v1780, %v1776
    %v1841 = vpack.c.b16 %v1781, %v1777
    %v1842 = vpack.c.b16 %v1782, %v1778
    %v1843 = vpack.c.b16 %v1783, %v1779
    %v1844 = vpack.c.b16 %v1788, %v1784
    %v1845 = vpack.c.b16 %v1789, %v1785
    %v1846 = vpack.c.b16 %v1790, %v1786
    %v1847 = vpack.c.b16 %v1791, %v1787
    %v1848 = vpack.c.b16 %v1796, %v1792
    %v1849 = vpack.c.b16 %v1797, %v1793
    %v1850 = vpack.c.b16 %v1798, %v1794
    %v1851 = vpack.c.b16 %v1799, %v1795
    %v1852 = vpack.c.b16 %v1804, %v1800
    %v1853 = vpack.c.b16 %v1805, %v1801
    %v1854 = vpack.c.b16 %v1806, %v1802
    %v1855 = vpack.c.b16 %v1807, %v1803
    %v1856 = vpack.c.b16 %v1812, %v1808
    %v1857 = vpack.c.b16 %v1813, %v1809
    %v1858 = vpack.c.b16 %v1814, %v1810
    %v1859 = vpack.c.b16 %v1815, %v1811
    %v1860 = vpack.c.b16 %v1820, %v1816
    %v1861 = vpack.c.b16 %v1821, %v1817
    %v1862 = vpack.c.b16 %v1822, %v1818
    %v1863 = vpack.c.b16 %v1823, %v1819
    %v1864 = vpack.c.b16 %v1828, %v1824
    %v1865 = vpack.c.b16 %v1829, %v1825
    %v1866 = vpack.c.b16 %v1830, %v1826
    %v1867 = vpack.c.b16 %v1831, %v1827
    %v1868 = vpack.c.b16 %v1836, %v1832
    %v1869 = vpack.c.b16 %v1837, %v1833
    %v1870 = vpack.c.b16 %v1838, %v1834
    %v1871 = vpack.c.b16 %v1839, %v1835
    %1904 = vmatprep.subr.bf16.mxu0 %v1841
    %1905 = vmatpush1.bf16.msra.mxu0 %v1840
    %1906 = vmatprep.subr.bf16.mxu0 %v1845
    %1907 = vmatpush1.bf16.msra.mxu0 %v1844
    %1908 = vmatprep.subr.bf16.mxu0 %v1849
    %1909 = vmatpush1.bf16.msra.mxu0 %v1848
    %1910 = vmatprep.subr.bf16.mxu0 %v1853
    %1911 = vmatpush1.bf16.msra.mxu0 %v1852
    %1912 = vmatprep.subr.bf16.mxu0 %v1857
    %1913 = vmatpush1.bf16.msra.mxu0 %v1856
    %1914 = vmatprep.subr.bf16.mxu0 %v1861
    %1915 = vmatpush1.bf16.msra.mxu0 %v1860
    %1916 = vmatprep.subr.bf16.mxu0 %v1865
    %1917 = vmatpush1.bf16.msra.mxu0 %v1864
    %1918 = vmatprep.subr.bf16.mxu0 %v1869
    %1919 = vmatpush1.bf16.msra.mxu0 %v1868
    %1920 = vmatprep.subr.bf16.mxu0 0
    %1921 = vmatpush1.bf16.msra.mxu0 0
    %1922 = vmatprep.subr.bf16.mxu0 0
    %1923 = vmatpush1.bf16.msra.mxu0 0
    %1924 = vmatprep.subr.bf16.mxu0 0
    %1925 = vmatpush1.bf16.msra.mxu0 0
    %1926 = vmatprep.subr.bf16.mxu0 0
    %1927 = vmatpush1.bf16.msra.mxu0 0
    %1928 = vmatprep.subr.bf16.mxu0 0
    %1929 = vmatpush1.bf16.msra.mxu0 0
    %1930 = vmatprep.subr.bf16.mxu0 0
    %1931 = vmatpush1.bf16.msra.mxu0 0
    %1932 = vmatprep.subr.bf16.mxu0 0
    %1933 = vmatpush1.bf16.msra.mxu0 0
    %1934 = vmatprep.subr.bf16.mxu0 0
    %1935 = vmatpush1.bf16.msra.mxu0 0
    %1936 = vmatprep.mubr.bf16.mxu0 0
    %1937 = vmatmul.mubr.bf16.gmra.mrb[0].mxu0 %v1711
    %v1938 = vpop.f32.mrb[0].mxu0
    %v1939 = vadd.f32 0.0, %v1938
    %v1940 = vpop.f32.mrb[0].mxu0
    %v1941 = vadd.f32 0.0, %v1940
    %v1942 = vpop.f32.mrb[0].mxu0
    %v1943 = vpop.f32.mrb[0].mxu0
    %1944 = vdwg.mxu0
    %1945 = vmatprep.subr.bf16.mxu0 %v1843
    %1946 = vmatpush1.bf16.msra.mxu0 %v1842
    %1947 = vmatprep.subr.bf16.mxu0 %v1847
    %1948 = vmatpush1.bf16.msra.mxu0 %v1846
    %1949 = vmatprep.subr.bf16.mxu0 %v1851
    %1950 = vmatpush1.bf16.msra.mxu0 %v1850
    %1951 = vmatprep.subr.bf16.mxu0 %v1855
    %1952 = vmatpush1.bf16.msra.mxu0 %v1854
    %1953 = vmatprep.subr.bf16.mxu0 %v1859
    %1954 = vmatpush1.bf16.msra.mxu0 %v1858
    %1955 = vmatprep.subr.bf16.mxu0 %v1863
    %1956 = vmatpush1.bf16.msra.mxu0 %v1862
    %1957 = vmatprep.subr.bf16.mxu0 %v1867
    %1958 = vmatpush1.bf16.msra.mxu0 %v1866
    %1959 = vmatprep.subr.bf16.mxu0 %v1871
    %1960 = vmatpush1.bf16.msra.mxu0 %v1870
    %1961 = vmatprep.subr.bf16.mxu0 0
    %1962 = vmatpush1.bf16.msra.mxu0 0
    %1963 = vmatprep.subr.bf16.mxu0 0
    %1964 = vmatpush1.bf16.msra.mxu0 0
    %1965 = vmatprep.subr.bf16.mxu0 0
    %1966 = vmatpush1.bf16.msra.mxu0 0
    %1967 = vmatprep.subr.bf16.mxu0 0
    %1968 = vmatpush1.bf16.msra.mxu0 0
    %1969 = vmatprep.subr.bf16.mxu0 0
    %1970 = vmatpush1.bf16.msra.mxu0 0
    %1971 = vmatprep.subr.bf16.mxu0 0
    %1972 = vmatpush1.bf16.msra.mxu0 0
    %1973 = vmatprep.subr.bf16.mxu0 0
    %1974 = vmatpush1.bf16.msra.mxu0 0
    %1975 = vmatprep.subr.bf16.mxu0 0
    %1976 = vmatpush1.bf16.msra.mxu0 0
    %1977 = vmatprep.mubr.bf16.mxu0 0
    %1978 = vmatmul.mubr.bf16.gmra.mrb[0].mxu0 %v1711
    %v1979 = vpop.f32.mrb[0].mxu0
    %v1980 = vadd.f32 0.0, %v1979
    %v1981 = vpop.f32.mrb[0].mxu0
    %v1982 = vadd.f32 0.0, %v1981
    %v1983 = vpop.f32.mrb[0].mxu0
    %v1984 = vpop.f32.mrb[0].mxu0
    %1985 = vdwg.mxu0
    %v1986 = vadd.f32 %v1707, %v1939
    %v1987 = vadd.f32 %v1708, %v1941
    %v1988 = vadd.f32 %v1709, %v1980
    %v1989 = vadd.f32 %v1710, %v1982
    %v1990 = vxor.u32 %v1986, 2147483648
    %v1991 = vxor.u32 %v1987, 2147483648
    %v1992 = vxor.u32 %v1988, 2147483648
    %v1993 = vmul.f32 %v1990, 1.442695
    %v1994 = vpow.pop %v1993
    %v1995 = vmul.f32 %v1991, 1.442695
    %v1996 = vpow.pop %v1995
    %v1997 = vmul.f32 %v1992, 1.442695
    %v1998 = vpow.pop %v1997
    %v1999 = vadd.f32 %v1994, 1.0
    %v2000 = vadd.f32 %v1996, 1.0
    %v2001 = vadd.f32 %v1998, 1.0
    %v2002 = vrcp.pop %v1999
    %v2003 = vmul.f32 1.0, %v2002
    %v2004 = vrcp.pop %v2000
    %v2005 = vmul.f32 1.0, %v2004
    %v2006 = vrcp.pop %v2001
    %v2007 = vmul.f32 1.0, %v2006
    %v2008 = vtanh.pop %v1989
    %v2009 = vmul.f32 %v2005, %v1699
    %v2010 = vmul.f32 %v2003, %v2008
    %v2011 = vadd.f32 %v2009, %v2010
    %v2012 = vtanh.pop %v2011
    %v2013 = vmul.f32 %v2007, %v2012
    %s2014 = scalar_lea.vmem [#allocation2], 40
    %2015 = vst [vmem:[%s2014] sm:$0xff] %v2013
    %s2016 = smul.u32 6, 4
    %s2017 = smul.addr %s2016, 8
    %s2018 = scalar_lea.vmem [#allocation5], %s2017
    %v2019 = vld [vmem:[%s2018] sm:$0xff]
    %v2020 = vld [vmem:[%s2018 + $0x8] sm:$0xff]
    %v2021 = vld [vmem:[%s2018 + $0x10] sm:$0xff]
    %v2022 = vld [vmem:[%s2018 + $0x18] sm:$0xff]
    %v2023 = vpack.c.bf16 %v2013, %v2013
    %v2024 = vld [vmem:[#allocation8] sm:$0xff]
    %v2025 = vld [vmem:[#allocation8 + $0x8] sm:$0xff]
    %v2026 = vld [vmem:[#allocation8 + $0x10] sm:$0xff]
    %v2027 = vld [vmem:[#allocation8 + $0x18] sm:$0xff]
    %v2028 = vld [vmem:[#allocation8 + $0x20] sm:$0xff]
    %v2029 = vld [vmem:[#allocation8 + $0x28] sm:$0xff]
    %v2030 = vld [vmem:[#allocation8 + $0x30] sm:$0xff]
    %v2031 = vld [vmem:[#allocation8 + $0x38] sm:$0xff]
    %v2032 = vld [vmem:[#allocation8 + $0x40] sm:$0xff]
    %v2033 = vld [vmem:[#allocation8 + $0x48] sm:$0xff]
    %v2034 = vld [vmem:[#allocation8 + $0x50] sm:$0xff]
    %v2035 = vld [vmem:[#allocation8 + $0x58] sm:$0xff]
    %v2036 = vld [vmem:[#allocation8 + $0x60] sm:$0xff]
    %v2037 = vld [vmem:[#allocation8 + $0x68] sm:$0xff]
    %v2038 = vld [vmem:[#allocation8 + $0x70] sm:$0xff]
    %v2039 = vld [vmem:[#allocation8 + $0x78] sm:$0xff]
    %v2040 = vld [vmem:[#allocation8 + $0x80] sm:$0xff]
    %v2041 = vld [vmem:[#allocation8 + $0x88] sm:$0xff]
    %v2042 = vld [vmem:[#allocation8 + $0x90] sm:$0xff]
    %v2043 = vld [vmem:[#allocation8 + $0x98] sm:$0xff]
    %v2044 = vld [vmem:[#allocation8 + $0xa0] sm:$0xff]
    %v2045 = vld [vmem:[#allocation8 + $0xa8] sm:$0xff]
    %v2046 = vld [vmem:[#allocation8 + $0xb0] sm:$0xff]
    %v2047 = vld [vmem:[#allocation8 + $0xb8] sm:$0xff]
    %v2048 = vld [vmem:[#allocation8 + $0xc0] sm:$0xff]
    %v2049 = vld [vmem:[#allocation8 + $0xc8] sm:$0xff]
    %v2050 = vld [vmem:[#allocation8 + $0xd0] sm:$0xff]
    %v2051 = vld [vmem:[#allocation8 + $0xd8] sm:$0xff]
    %v2052 = vld [vmem:[#allocation8 + $0xe0] sm:$0xff]
    %v2053 = vld [vmem:[#allocation8 + $0xe8] sm:$0xff]
    %v2054 = vld [vmem:[#allocation8 + $0xf0] sm:$0xff]
    %v2055 = vld [vmem:[#allocation8 + $0xf8] sm:$0xff]
    %v2088 = vunpack.c.l.b16 %v2024
    %v2089 = vunpack.c.h.b16 %v2024
    %v2090 = vunpack.c.l.b16 %v2025
    %v2091 = vunpack.c.h.b16 %v2025
    %v2092 = vunpack.c.l.b16 %v2026
    %v2093 = vunpack.c.h.b16 %v2026
    %v2094 = vunpack.c.l.b16 %v2027
    %v2095 = vunpack.c.h.b16 %v2027
    %v2096 = vunpack.c.l.b16 %v2028
    %v2097 = vunpack.c.h.b16 %v2028
    %v2098 = vunpack.c.l.b16 %v2029
    %v2099 = vunpack.c.h.b16 %v2029
    %v2100 = vunpack.c.l.b16 %v2030
    %v2101 = vunpack.c.h.b16 %v2030
    %v2102 = vunpack.c.l.b16 %v2031
    %v2103 = vunpack.c.h.b16 %v2031
    %v2104 = vunpack.c.l.b16 %v2032
    %v2105 = vunpack.c.h.b16 %v2032
    %v2106 = vunpack.c.l.b16 %v2033
    %v2107 = vunpack.c.h.b16 %v2033
    %v2108 = vunpack.c.l.b16 %v2034
    %v2109 = vunpack.c.h.b16 %v2034
    %v2110 = vunpack.c.l.b16 %v2035
    %v2111 = vunpack.c.h.b16 %v2035
    %v2112 = vunpack.c.l.b16 %v2036
    %v2113 = vunpack.c.h.b16 %v2036
    %v2114 = vunpack.c.l.b16 %v2037
    %v2115 = vunpack.c.h.b16 %v2037
    %v2116 = vunpack.c.l.b16 %v2038
    %v2117 = vunpack.c.h.b16 %v2038
    %v2118 = vunpack.c.l.b16 %v2039
    %v2119 = vunpack.c.h.b16 %v2039
    %v2120 = vunpack.c.l.b16 %v2040
    %v2121 = vunpack.c.h.b16 %v2040
    %v2122 = vunpack.c.l.b16 %v2041
    %v2123 = vunpack.c.h.b16 %v2041
    %v2124 = vunpack.c.l.b16 %v2042
    %v2125 = vunpack.c.h.b16 %v2042
    %v2126 = vunpack.c.l.b16 %v2043
    %v2127 = vunpack.c.h.b16 %v2043
    %v2128 = vunpack.c.l.b16 %v2044
    %v2129 = vunpack.c.h.b16 %v2044
    %v2130 = vunpack.c.l.b16 %v2045
    %v2131 = vunpack.c.h.b16 %v2045
    %v2132 = vunpack.c.l.b16 %v2046
    %v2133 = vunpack.c.h.b16 %v2046
    %v2134 = vunpack.c.l.b16 %v2047
    %v2135 = vunpack.c.h.b16 %v2047
    %v2136 = vunpack.c.l.b16 %v2048
    %v2137 = vunpack.c.h.b16 %v2048
    %v2138 = vunpack.c.l.b16 %v2049
    %v2139 = vunpack.c.h.b16 %v2049
    %v2140 = vunpack.c.l.b16 %v2050
    %v2141 = vunpack.c.h.b16 %v2050
    %v2142 = vunpack.c.l.b16 %v2051
    %v2143 = vunpack.c.h.b16 %v2051
    %v2144 = vunpack.c.l.b16 %v2052
    %v2145 = vunpack.c.h.b16 %v2052
    %v2146 = vunpack.c.l.b16 %v2053
    %v2147 = vunpack.c.h.b16 %v2053
    %v2148 = vunpack.c.l.b16 %v2054
    %v2149 = vunpack.c.h.b16 %v2054
    %v2150 = vunpack.c.l.b16 %v2055
    %v2151 = vunpack.c.h.b16 %v2055
    %v2152 = vpack.c.b16 %v2092, %v2088
    %v2153 = vpack.c.b16 %v2093, %v2089
    %v2154 = vpack.c.b16 %v2094, %v2090
    %v2155 = vpack.c.b16 %v2095, %v2091
    %v2156 = vpack.c.b16 %v2100, %v2096
    %v2157 = vpack.c.b16 %v2101, %v2097
    %v2158 = vpack.c.b16 %v2102, %v2098
    %v2159 = vpack.c.b16 %v2103, %v2099
    %v2160 = vpack.c.b16 %v2108, %v2104
    %v2161 = vpack.c.b16 %v2109, %v2105
    %v2162 = vpack.c.b16 %v2110, %v2106
    %v2163 = vpack.c.b16 %v2111, %v2107
    %v2164 = vpack.c.b16 %v2116, %v2112
    %v2165 = vpack.c.b16 %v2117, %v2113
    %v2166 = vpack.c.b16 %v2118, %v2114
    %v2167 = vpack.c.b16 %v2119, %v2115
    %v2168 = vpack.c.b16 %v2124, %v2120
    %v2169 = vpack.c.b16 %v2125, %v2121
    %v2170 = vpack.c.b16 %v2126, %v2122
    %v2171 = vpack.c.b16 %v2127, %v2123
    %v2172 = vpack.c.b16 %v2132, %v2128
    %v2173 = vpack.c.b16 %v2133, %v2129
    %v2174 = vpack.c.b16 %v2134, %v2130
    %v2175 = vpack.c.b16 %v2135, %v2131
    %v2176 = vpack.c.b16 %v2140, %v2136
    %v2177 = vpack.c.b16 %v2141, %v2137
    %v2178 = vpack.c.b16 %v2142, %v2138
    %v2179 = vpack.c.b16 %v2143, %v2139
    %v2180 = vpack.c.b16 %v2148, %v2144
    %v2181 = vpack.c.b16 %v2149, %v2145
    %v2182 = vpack.c.b16 %v2150, %v2146
    %v2183 = vpack.c.b16 %v2151, %v2147
    %2216 = vmatprep.subr.bf16.mxu0 %v2153
    %2217 = vmatpush1.bf16.msra.mxu0 %v2152
    %2218 = vmatprep.subr.bf16.mxu0 %v2157
    %2219 = vmatpush1.bf16.msra.mxu0 %v2156
    %2220 = vmatprep.subr.bf16.mxu0 %v2161
    %2221 = vmatpush1.bf16.msra.mxu0 %v2160
    %2222 = vmatprep.subr.bf16.mxu0 %v2165
    %2223 = vmatpush1.bf16.msra.mxu0 %v2164
    %2224 = vmatprep.subr.bf16.mxu0 %v2169
    %2225 = vmatpush1.bf16.msra.mxu0 %v2168
    %2226 = vmatprep.subr.bf16.mxu0 %v2173
    %2227 = vmatpush1.bf16.msra.mxu0 %v2172
    %2228 = vmatprep.subr.bf16.mxu0 %v2177
    %2229 = vmatpush1.bf16.msra.mxu0 %v2176
    %2230 = vmatprep.subr.bf16.mxu0 %v2181
    %2231 = vmatpush1.bf16.msra.mxu0 %v2180
    %2232 = vmatprep.subr.bf16.mxu0 0
    %2233 = vmatpush1.bf16.msra.mxu0 0
    %2234 = vmatprep.subr.bf16.mxu0 0
    %2235 = vmatpush1.bf16.msra.mxu0 0
    %2236 = vmatprep.subr.bf16.mxu0 0
    %2237 = vmatpush1.bf16.msra.mxu0 0
    %2238 = vmatprep.subr.bf16.mxu0 0
    %2239 = vmatpush1.bf16.msra.mxu0 0
    %2240 = vmatprep.subr.bf16.mxu0 0
    %2241 = vmatpush1.bf16.msra.mxu0 0
    %2242 = vmatprep.subr.bf16.mxu0 0
    %2243 = vmatpush1.bf16.msra.mxu0 0
    %2244 = vmatprep.subr.bf16.mxu0 0
    %2245 = vmatpush1.bf16.msra.mxu0 0
    %2246 = vmatprep.subr.bf16.mxu0 0
    %2247 = vmatpush1.bf16.msra.mxu0 0
    %2248 = vmatprep.mubr.bf16.mxu0 0
    %2249 = vmatmul.mubr.bf16.gmra.mrb[0].mxu0 %v2023
    %v2250 = vpop.f32.mrb[0].mxu0
    %v2251 = vadd.f32 0.0, %v2250
    %v2252 = vpop.f32.mrb[0].mxu0
    %v2253 = vadd.f32 0.0, %v2252
    %v2254 = vpop.f32.mrb[0].mxu0
    %v2255 = vpop.f32.mrb[0].mxu0
    %2256 = vdwg.mxu0
    %2257 = vmatprep.subr.bf16.mxu0 %v2155
    %2258 = vmatpush1.bf16.msra.mxu0 %v2154
    %2259 = vmatprep.subr.bf16.mxu0 %v2159
    %2260 = vmatpush1.bf16.msra.mxu0 %v2158
    %2261 = vmatprep.subr.bf16.mxu0 %v2163
    %2262 = vmatpush1.bf16.msra.mxu0 %v2162
    %2263 = vmatprep.subr.bf16.mxu0 %v2167
    %2264 = vmatpush1.bf16.msra.mxu0 %v2166
    %2265 = vmatprep.subr.bf16.mxu0 %v2171
    %2266 = vmatpush1.bf16.msra.mxu0 %v2170
    %2267 = vmatprep.subr.bf16.mxu0 %v2175
    %2268 = vmatpush1.bf16.msra.mxu0 %v2174
    %2269 = vmatprep.subr.bf16.mxu0 %v2179
    %2270 = vmatpush1.bf16.msra.mxu0 %v2178
    %2271 = vmatprep.subr.bf16.mxu0 %v2183
    %2272 = vmatpush1.bf16.msra.mxu0 %v2182
    %2273 = vmatprep.subr.bf16.mxu0 0
    %2274 = vmatpush1.bf16.msra.mxu0 0
    %2275 = vmatprep.subr.bf16.mxu0 0
    %2276 = vmatpush1.bf16.msra.mxu0 0
    %2277 = vmatprep.subr.bf16.mxu0 0
    %2278 = vmatpush1.bf16.msra.mxu0 0
    %2279 = vmatprep.subr.bf16.mxu0 0
    %2280 = vmatpush1.bf16.msra.mxu0 0
    %2281 = vmatprep.subr.bf16.mxu0 0
    %2282 = vmatpush1.bf16.msra.mxu0 0
    %2283 = vmatprep.subr.bf16.mxu0 0
    %2284 = vmatpush1.bf16.msra.mxu0 0
    %2285 = vmatprep.subr.bf16.mxu0 0
    %2286 = vmatpush1.bf16.msra.mxu0 0
    %2287 = vmatprep.subr.bf16.mxu0 0
    %2288 = vmatpush1.bf16.msra.mxu0 0
    %2289 = vmatprep.mubr.bf16.mxu0 0
    %2290 = vmatmul.mubr.bf16.gmra.mrb[0].mxu0 %v2023
    %v2291 = vpop.f32.mrb[0].mxu0
    %v2292 = vadd.f32 0.0, %v2291
    %v2293 = vpop.f32.mrb[0].mxu0
    %v2294 = vadd.f32 0.0, %v2293
    %v2295 = vpop.f32.mrb[0].mxu0
    %v2296 = vpop.f32.mrb[0].mxu0
    %2297 = vdwg.mxu0
    %v2298 = vadd.f32 %v2019, %v2251
    %v2299 = vadd.f32 %v2020, %v2253
    %v2300 = vadd.f32 %v2021, %v2292
    %v2301 = vadd.f32 %v2022, %v2294
    %v2302 = vxor.u32 %v2298, 2147483648
    %v2303 = vxor.u32 %v2299, 2147483648
    %v2304 = vxor.u32 %v2300, 2147483648
    %v2305 = vmul.f32 %v2302, 1.442695
    %v2306 = vpow.pop %v2305
    %v2307 = vmul.f32 %v2303, 1.442695
    %v2308 = vpow.pop %v2307
    %v2309 = vmul.f32 %v2304, 1.442695
    %v2310 = vpow.pop %v2309
    %v2311 = vadd.f32 %v2306, 1.0
    %v2312 = vadd.f32 %v2308, 1.0
    %v2313 = vadd.f32 %v2310, 1.0
    %v2314 = vrcp.pop %v2311
    %v2315 = vmul.f32 1.0, %v2314
    %v2316 = vrcp.pop %v2312
    %v2317 = vmul.f32 1.0, %v2316
    %v2318 = vrcp.pop %v2313
    %v2319 = vmul.f32 1.0, %v2318
    %v2320 = vtanh.pop %v2301
    %v2321 = vmul.f32 %v2317, %v2011
    %v2322 = vmul.f32 %v2315, %v2320
    %v2323 = vadd.f32 %v2321, %v2322
    %v2324 = vtanh.pop %v2323
    %v2325 = vmul.f32 %v2319, %v2324
    %s2326 = scalar_lea.vmem [#allocation2], 48
    %2327 = vst [vmem:[%s2326] sm:$0xff] %v2325
    %s2328 = smul.u32 7, 4
    %s2329 = smul.addr %s2328, 8
    %s2330 = scalar_lea.vmem [#allocation5], %s2329
    %v2331 = vld [vmem:[%s2330] sm:$0xff]
    %v2332 = vld [vmem:[%s2330 + $0x8] sm:$0xff]
    %v2333 = vld [vmem:[%s2330 + $0x10] sm:$0xff]
    %v2334 = vld [vmem:[%s2330 + $0x18] sm:$0xff]
    %v2335 = vpack.c.bf16 %v2325, %v2325
    %v2336 = vld [vmem:[#allocation8] sm:$0xff]
    %v2337 = vld [vmem:[#allocation8 + $0x8] sm:$0xff]
    %v2338 = vld [vmem:[#allocation8 + $0x10] sm:$0xff]
    %v2339 = vld [vmem:[#allocation8 + $0x18] sm:$0xff]
    %v2340 = vld [vmem:[#allocation8 + $0x20] sm:$0xff]
    %v2341 = vld [vmem:[#allocation8 + $0x28] sm:$0xff]
    %v2342 = vld [vmem:[#allocation8 + $0x30] sm:$0xff]
    %v2343 = vld [vmem:[#allocation8 + $0x38] sm:$0xff]
    %v2344 = vld [vmem:[#allocation8 + $0x40] sm:$0xff]
    %v2345 = vld [vmem:[#allocation8 + $0x48] sm:$0xff]
    %v2346 = vld [vmem:[#allocation8 + $0x50] sm:$0xff]
    %v2347 = vld [vmem:[#allocation8 + $0x58] sm:$0xff]
    %v2348 = vld [vmem:[#allocation8 + $0x60] sm:$0xff]
    %v2349 = vld [vmem:[#allocation8 + $0x68] sm:$0xff]
    %v2350 = vld [vmem:[#allocation8 + $0x70] sm:$0xff]
    %v2351 = vld [vmem:[#allocation8 + $0x78] sm:$0xff]
    %v2352 = vld [vmem:[#allocation8 + $0x80] sm:$0xff]
    %v2353 = vld [vmem:[#allocation8 + $0x88] sm:$0xff]
    %v2354 = vld [vmem:[#allocation8 + $0x90] sm:$0xff]
    %v2355 = vld [vmem:[#allocation8 + $0x98] sm:$0xff]
    %v2356 = vld [vmem:[#allocation8 + $0xa0] sm:$0xff]
    %v2357 = vld [vmem:[#allocation8 + $0xa8] sm:$0xff]
    %v2358 = vld [vmem:[#allocation8 + $0xb0] sm:$0xff]
    %v2359 = vld [vmem:[#allocation8 + $0xb8] sm:$0xff]
    %v2360 = vld [vmem:[#allocation8 + $0xc0] sm:$0xff]
    %v2361 = vld [vmem:[#allocation8 + $0xc8] sm:$0xff]
    %v2362 = vld [vmem:[#allocation8 + $0xd0] sm:$0xff]
    %v2363 = vld [vmem:[#allocation8 + $0xd8] sm:$0xff]
    %v2364 = vld [vmem:[#allocation8 + $0xe0] sm:$0xff]
    %v2365 = vld [vmem:[#allocation8 + $0xe8] sm:$0xff]
    %v2366 = vld [vmem:[#allocation8 + $0xf0] sm:$0xff]
    %v2367 = vld [vmem:[#allocation8 + $0xf8] sm:$0xff]
    %v2400 = vunpack.c.l.b16 %v2336
    %v2401 = vunpack.c.h.b16 %v2336
    %v2402 = vunpack.c.l.b16 %v2337
    %v2403 = vunpack.c.h.b16 %v2337
    %v2404 = vunpack.c.l.b16 %v2338
    %v2405 = vunpack.c.h.b16 %v2338
    %v2406 = vunpack.c.l.b16 %v2339
    %v2407 = vunpack.c.h.b16 %v2339
    %v2408 = vunpack.c.l.b16 %v2340
    %v2409 = vunpack.c.h.b16 %v2340
    %v2410 = vunpack.c.l.b16 %v2341
    %v2411 = vunpack.c.h.b16 %v2341
    %v2412 = vunpack.c.l.b16 %v2342
    %v2413 = vunpack.c.h.b16 %v2342
    %v2414 = vunpack.c.l.b16 %v2343
    %v2415 = vunpack.c.h.b16 %v2343
    %v2416 = vunpack.c.l.b16 %v2344
    %v2417 = vunpack.c.h.b16 %v2344
    %v2418 = vunpack.c.l.b16 %v2345
    %v2419 = vunpack.c.h.b16 %v2345
    %v2420 = vunpack.c.l.b16 %v2346
    %v2421 = vunpack.c.h.b16 %v2346
    %v2422 = vunpack.c.l.b16 %v2347
    %v2423 = vunpack.c.h.b16 %v2347
    %v2424 = vunpack.c.l.b16 %v2348
    %v2425 = vunpack.c.h.b16 %v2348
    %v2426 = vunpack.c.l.b16 %v2349
    %v2427 = vunpack.c.h.b16 %v2349
    %v2428 = vunpack.c.l.b16 %v2350
    %v2429 = vunpack.c.h.b16 %v2350
    %v2430 = vunpack.c.l.b16 %v2351
    %v2431 = vunpack.c.h.b16 %v2351
    %v2432 = vunpack.c.l.b16 %v2352
    %v2433 = vunpack.c.h.b16 %v2352
    %v2434 = vunpack.c.l.b16 %v2353
    %v2435 = vunpack.c.h.b16 %v2353
    %v2436 = vunpack.c.l.b16 %v2354
    %v2437 = vunpack.c.h.b16 %v2354
    %v2438 = vunpack.c.l.b16 %v2355
    %v2439 = vunpack.c.h.b16 %v2355
    %v2440 = vunpack.c.l.b16 %v2356
    %v2441 = vunpack.c.h.b16 %v2356
    %v2442 = vunpack.c.l.b16 %v2357
    %v2443 = vunpack.c.h.b16 %v2357
    %v2444 = vunpack.c.l.b16 %v2358
    %v2445 = vunpack.c.h.b16 %v2358
    %v2446 = vunpack.c.l.b16 %v2359
    %v2447 = vunpack.c.h.b16 %v2359
    %v2448 = vunpack.c.l.b16 %v2360
    %v2449 = vunpack.c.h.b16 %v2360
    %v2450 = vunpack.c.l.b16 %v2361
    %v2451 = vunpack.c.h.b16 %v2361
    %v2452 = vunpack.c.l.b16 %v2362
    %v2453 = vunpack.c.h.b16 %v2362
    %v2454 = vunpack.c.l.b16 %v2363
    %v2455 = vunpack.c.h.b16 %v2363
    %v2456 = vunpack.c.l.b16 %v2364
    %v2457 = vunpack.c.h.b16 %v2364
    %v2458 = vunpack.c.l.b16 %v2365
    %v2459 = vunpack.c.h.b16 %v2365
    %v2460 = vunpack.c.l.b16 %v2366
    %v2461 = vunpack.c.h.b16 %v2366
    %v2462 = vunpack.c.l.b16 %v2367
    %v2463 = vunpack.c.h.b16 %v2367
    %v2464 = vpack.c.b16 %v2404, %v2400
    %v2465 = vpack.c.b16 %v2405, %v2401
    %v2466 = vpack.c.b16 %v2406, %v2402
    %v2467 = vpack.c.b16 %v2407, %v2403
    %v2468 = vpack.c.b16 %v2412, %v2408
    %v2469 = vpack.c.b16 %v2413, %v2409
    %v2470 = vpack.c.b16 %v2414, %v2410
    %v2471 = vpack.c.b16 %v2415, %v2411
    %v2472 = vpack.c.b16 %v2420, %v2416
    %v2473 = vpack.c.b16 %v2421, %v2417
    %v2474 = vpack.c.b16 %v2422, %v2418
    %v2475 = vpack.c.b16 %v2423, %v2419
    %v2476 = vpack.c.b16 %v2428, %v2424
    %v2477 = vpack.c.b16 %v2429, %v2425
    %v2478 = vpack.c.b16 %v2430, %v2426
    %v2479 = vpack.c.b16 %v2431, %v2427
    %v2480 = vpack.c.b16 %v2436, %v2432
    %v2481 = vpack.c.b16 %v2437, %v2433
    %v2482 = vpack.c.b16 %v2438, %v2434
    %v2483 = vpack.c.b16 %v2439, %v2435
    %v2484 = vpack.c.b16 %v2444, %v2440
    %v2485 = vpack.c.b16 %v2445, %v2441
    %v2486 = vpack.c.b16 %v2446, %v2442
    %v2487 = vpack.c.b16 %v2447, %v2443
    %v2488 = vpack.c.b16 %v2452, %v2448
    %v2489 = vpack.c.b16 %v2453, %v2449
    %v2490 = vpack.c.b16 %v2454, %v2450
    %v2491 = vpack.c.b16 %v2455, %v2451
    %v2492 = vpack.c.b16 %v2460, %v2456
    %v2493 = vpack.c.b16 %v2461, %v2457
    %v2494 = vpack.c.b16 %v2462, %v2458
    %v2495 = vpack.c.b16 %v2463, %v2459
    %2528 = vmatprep.subr.bf16.mxu0 %v2465
    %2529 = vmatpush1.bf16.msra.mxu0 %v2464
    %2530 = vmatprep.subr.bf16.mxu0 %v2469
    %2531 = vmatpush1.bf16.msra.mxu0 %v2468
    %2532 = vmatprep.subr.bf16.mxu0 %v2473
    %2533 = vmatpush1.bf16.msra.mxu0 %v2472
    %2534 = vmatprep.subr.bf16.mxu0 %v2477
    %2535 = vmatpush1.bf16.msra.mxu0 %v2476
    %2536 = vmatprep.subr.bf16.mxu0 %v2481
    %2537 = vmatpush1.bf16.msra.mxu0 %v2480
    %2538 = vmatprep.subr.bf16.mxu0 %v2485
    %2539 = vmatpush1.bf16.msra.mxu0 %v2484
    %2540 = vmatprep.subr.bf16.mxu0 %v2489
    %2541 = vmatpush1.bf16.msra.mxu0 %v2488
    %2542 = vmatprep.subr.bf16.mxu0 %v2493
    %2543 = vmatpush1.bf16.msra.mxu0 %v2492
    %2544 = vmatprep.subr.bf16.mxu0 0
    %2545 = vmatpush1.bf16.msra.mxu0 0
    %2546 = vmatprep.subr.bf16.mxu0 0
    %2547 = vmatpush1.bf16.msra.mxu0 0
    %2548 = vmatprep.subr.bf16.mxu0 0
    %2549 = vmatpush1.bf16.msra.mxu0 0
    %2550 = vmatprep.subr.bf16.mxu0 0
    %2551 = vmatpush1.bf16.msra.mxu0 0
    %2552 = vmatprep.subr.bf16.mxu0 0
    %2553 = vmatpush1.bf16.msra.mxu0 0
    %2554 = vmatprep.subr.bf16.mxu0 0
    %2555 = vmatpush1.bf16.msra.mxu0 0
    %2556 = vmatprep.subr.bf16.mxu0 0
    %2557 = vmatpush1.bf16.msra.mxu0 0
    %2558 = vmatprep.subr.bf16.mxu0 0
    %2559 = vmatpush1.bf16.msra.mxu0 0
    %2560 = vmatprep.mubr.bf16.mxu0 0
    %2561 = vmatmul.mubr.bf16.gmra.mrb[0].mxu0 %v2335
    %v2562 = vpop.f32.mrb[0].mxu0
    %v2563 = vadd.f32 0.0, %v2562
    %v2564 = vpop.f32.mrb[0].mxu0
    %v2565 = vadd.f32 0.0, %v2564
    %v2566 = vpop.f32.mrb[0].mxu0
    %v2567 = vpop.f32.mrb[0].mxu0
    %2568 = vdwg.mxu0
    %2569 = vmatprep.subr.bf16.mxu0 %v2467
    %2570 = vmatpush1.bf16.msra.mxu0 %v2466
    %2571 = vmatprep.subr.bf16.mxu0 %v2471
    %2572 = vmatpush1.bf16.msra.mxu0 %v2470
    %2573 = vmatprep.subr.bf16.mxu0 %v2475
    %2574 = vmatpush1.bf16.msra.mxu0 %v2474
    %2575 = vmatprep.subr.bf16.mxu0 %v2479
    %2576 = vmatpush1.bf16.msra.mxu0 %v2478
    %2577 = vmatprep.subr.bf16.mxu0 %v2483
    %2578 = vmatpush1.bf16.msra.mxu0 %v2482
    %2579 = vmatprep.subr.bf16.mxu0 %v2487
    %2580 = vmatpush1.bf16.msra.mxu0 %v2486
    %2581 = vmatprep.subr.bf16.mxu0 %v2491
    %2582 = vmatpush1.bf16.msra.mxu0 %v2490
    %2583 = vmatprep.subr.bf16.mxu0 %v2495
    %2584 = vmatpush1.bf16.msra.mxu0 %v2494
    %2585 = vmatprep.subr.bf16.mxu0 0
    %2586 = vmatpush1.bf16.msra.mxu0 0
    %2587 = vmatprep.subr.bf16.mxu0 0
    %2588 = vmatpush1.bf16.msra.mxu0 0
    %2589 = vmatprep.subr.bf16.mxu0 0
    %2590 = vmatpush1.bf16.msra.mxu0 0
    %2591 = vmatprep.subr.bf16.mxu0 0
    %2592 = vmatpush1.bf16.msra.mxu0 0
    %2593 = vmatprep.subr.bf16.mxu0 0
    %2594 = vmatpush1.bf16.msra.mxu0 0
    %2595 = vmatprep.subr.bf16.mxu0 0
    %2596 = vmatpush1.bf16.msra.mxu0 0
    %2597 = vmatprep.subr.bf16.mxu0 0
    %2598 = vmatpush1.bf16.msra.mxu0 0
    %2599 = vmatprep.subr.bf16.mxu0 0
    %2600 = vmatpush1.bf16.msra.mxu0 0
    %2601 = vmatprep.mubr.bf16.mxu0 0
    %2602 = vmatmul.mubr.bf16.gmra.mrb[0].mxu0 %v2335
    %v2603 = vpop.f32.mrb[0].mxu0
    %v2604 = vadd.f32 0.0, %v2603
    %v2605 = vpop.f32.mrb[0].mxu0
    %v2606 = vadd.f32 0.0, %v2605
    %v2607 = vpop.f32.mrb[0].mxu0
    %v2608 = vpop.f32.mrb[0].mxu0
    %2609 = vdwg.mxu0
    %v2610 = vadd.f32 %v2331, %v2563
    %v2611 = vadd.f32 %v2332, %v2565
    %v2612 = vadd.f32 %v2333, %v2604
    %v2613 = vadd.f32 %v2334, %v2606
    %v2614 = vxor.u32 %v2610, 2147483648
    %v2615 = vxor.u32 %v2611, 2147483648
    %v2616 = vxor.u32 %v2612, 2147483648
    %v2617 = vmul.f32 %v2614, 1.442695
    %v2618 = vpow.pop %v2617
    %v2619 = vmul.f32 %v2615, 1.442695
    %v2620 = vpow.pop %v2619
    %v2621 = vmul.f32 %v2616, 1.442695
    %v2622 = vpow.pop %v2621
    %v2623 = vadd.f32 %v2618, 1.0
    %v2624 = vadd.f32 %v2620, 1.0
    %v2625 = vadd.f32 %v2622, 1.0
    %v2626 = vrcp.pop %v2623
    %v2627 = vmul.f32 1.0, %v2626
    %v2628 = vrcp.pop %v2624
    %v2629 = vmul.f32 1.0, %v2628
    %v2630 = vrcp.pop %v2625
    %v2631 = vmul.f32 1.0, %v2630
    %v2632 = vtanh.pop %v2613
    %v2633 = vmul.f32 %v2629, %v2323
    %v2634 = vmul.f32 %v2627, %v2632
    %v2635 = vadd.f32 %v2633, %v2634
    %v2636 = vtanh.pop %v2635
    %v2637 = vmul.f32 %v2631, %v2636
    %s2638 = scalar_lea.vmem [#allocation2], 56
    %2639 = vst [vmem:[%s2638] sm:$0xff] %v2637
    %2640 = vst [vmem:[#allocation3] sm:$0xff] %v2637
    %2641 = vst [vmem:[#allocation4] sm:$0xff] %v2635
    %v2642 = vld [vmem:[#allocation2] sm:$0xff]
    %v2643 = vld [vmem:[#allocation2 + $0x8] sm:$0xff]
    %v2644 = vld [vmem:[#allocation2 + $0x10] sm:$0xff]
    %v2645 = vld [vmem:[#allocation2 + $0x18] sm:$0xff]
    %v2646 = vld [vmem:[#allocation2 + $0x20] sm:$0xff]
    %v2647 = vld [vmem:[#allocation2 + $0x28] sm:$0xff]
    %v2648 = vld [vmem:[#allocation2 + $0x30] sm:$0xff]
    %v2649 = vld [vmem:[#allocation2 + $0x38] sm:$0xff]
    %v2650 = vpack.c.bf16 %v2643, %v2642
    %v2651 = vpack.c.bf16 %v2645, %v2644
    %v2652 = vpack.c.bf16 %v2647, %v2646
    %v2653 = vpack.c.bf16 %v2649, %v2648
    %v2654 = vld [vmem:[#allocation10] sm:$0xff]
    %v2655 = vld [vmem:[#allocation10 + $0x8] sm:$0xff]
    %v2656 = vld [vmem:[#allocation10 + $0x10] sm:$0xff]
    %v2657 = vld [vmem:[#allocation10 + $0x18] sm:$0xff]
    %v2658 = vld [vmem:[#allocation10 + $0x20] sm:$0xff]
    %v2659 = vld [vmem:[#allocation10 + $0x28] sm:$0xff]
    %v2660 = vld [vmem:[#allocation10 + $0x30] sm:$0xff]
    %v2661 = vld [vmem:[#allocation10 + $0x38] sm:$0xff]
    %v2662 = vld [vmem:[#allocation10 + $0x40] sm:$0xff]
    %v2663 = vld [vmem:[#allocation10 + $0x48] sm:$0xff]
    %v2664 = vld [vmem:[#allocation10 + $0x50] sm:$0xff]
    %v2665 = vld [vmem:[#allocation10 + $0x58] sm:$0xff]
    %v2666 = vld [vmem:[#allocation10 + $0x60] sm:$0xff]
    %v2667 = vld [vmem:[#allocation10 + $0x68] sm:$0xff]
    %v2668 = vld [vmem:[#allocation10 + $0x70] sm:$0xff]
    %v2669 = vld [vmem:[#allocation10 + $0x78] sm:$0xff]
    %v2670 = vld [vmem:[#allocation11] sm:$0x3]
    %v2672 = vlaneseq
    %v2673 = vshrl.u32 %v2672, 7
    %v2674 = vsub.s32 0, %v2673
    %v2675 = vrot.slane %v2670, %v2674
    %v2676 = vlaneseq
    %v2677 = vshrl.u32 %v2676, 7
    %v2678 = vsub.s32 1, %v2677
    %v2679 = vrot.slane %v2670, %v2678
    %v2698 = vunpack.c.l.b16 %v2654
    %v2699 = vunpack.c.h.b16 %v2654
    %v2700 = vunpack.c.l.b16 %v2655
    %v2701 = vunpack.c.h.b16 %v2655
    %v2702 = vunpack.c.l.b16 %v2656
    %v2703 = vunpack.c.h.b16 %v2656
    %v2704 = vunpack.c.l.b16 %v2657
    %v2705 = vunpack.c.h.b16 %v2657
    %v2706 = vunpack.c.l.b16 %v2658
    %v2707 = vunpack.c.h.b16 %v2658
    %v2708 = vunpack.c.l.b16 %v2659
    %v2709 = vunpack.c.h.b16 %v2659
    %v2710 = vunpack.c.l.b16 %v2660
    %v2711 = vunpack.c.h.b16 %v2660
    %v2712 = vunpack.c.l.b16 %v2661
    %v2713 = vunpack.c.h.b16 %v2661
    %v2714 = vunpack.c.l.b16 %v2662
    %v2715 = vunpack.c.h.b16 %v2662
    %v2716 = vunpack.c.l.b16 %v2663
    %v2717 = vunpack.c.h.b16 %v2663
    %v2718 = vunpack.c.l.b16 %v2664
    %v2719 = vunpack.c.h.b16 %v2664
    %v2720 = vunpack.c.l.b16 %v2665
    %v2721 = vunpack.c.h.b16 %v2665
    %v2722 = vunpack.c.l.b16 %v2666
    %v2723 = vunpack.c.h.b16 %v2666
    %v2724 = vunpack.c.l.b16 %v2667
    %v2725 = vunpack.c.h.b16 %v2667
    %v2726 = vunpack.c.l.b16 %v2668
    %v2727 = vunpack.c.h.b16 %v2668
    %v2728 = vunpack.c.l.b16 %v2669
    %v2729 = vunpack.c.h.b16 %v2669
    %v2730 = vpack.c.b16 %v2700, %v2698
    %v2731 = vpack.c.b16 %v2701, %v2699
    %v2732 = vpack.c.b16 %v2704, %v2702
    %v2733 = vpack.c.b16 %v2705, %v2703
    %v2734 = vpack.c.b16 %v2708, %v2706
    %v2735 = vpack.c.b16 %v2709, %v2707
    %v2736 = vpack.c.b16 %v2712, %v2710
    %v2737 = vpack.c.b16 %v2713, %v2711
    %v2738 = vpack.c.b16 %v2716, %v2714
    %v2739 = vpack.c.b16 %v2717, %v2715
    %v2740 = vpack.c.b16 %v2720, %v2718
    %v2741 = vpack.c.b16 %v2721, %v2719
    %v2742 = vpack.c.b16 %v2724, %v2722
    %v2743 = vpack.c.b16 %v2725, %v2723
    %v2744 = vpack.c.b16 %v2728, %v2726
    %v2745 = vpack.c.b16 %v2729, %v2727
    %2762 = vmatprep.subr.bf16.mxu0 %v2731
    %2763 = vmatpush1.bf16.msra.mxu0 %v2730
    %2764 = vmatprep.subr.bf16.mxu0 %v2733
    %2765 = vmatpush1.bf16.msra.mxu0 %v2732
    %2766 = vmatprep.subr.bf16.mxu0 %v2735
    %2767 = vmatpush1.bf16.msra.mxu0 %v2734
    %2768 = vmatprep.subr.bf16.mxu0 %v2737
    %2769 = vmatpush1.bf16.msra.mxu0 %v2736
    %2770 = vmatprep.subr.bf16.mxu0 %v2739
    %2771 = vmatpush1.bf16.msra.mxu0 %v2738
    %2772 = vmatprep.subr.bf16.mxu0 %v2741
    %2773 = vmatpush1.bf16.msra.mxu0 %v2740
    %2774 = vmatprep.subr.bf16.mxu0 %v2743
    %2775 = vmatpush1.bf16.msra.mxu0 %v2742
    %2776 = vmatprep.subr.bf16.mxu0 %v2745
    %2777 = vmatpush1.bf16.msra.mxu0 %v2744
    %2778 = vmatprep.subr.bf16.mxu0 0
    %2779 = vmatpush1.bf16.msra.mxu0 0
    %2780 = vmatprep.subr.bf16.mxu0 0
    %2781 = vmatpush1.bf16.msra.mxu0 0
    %2782 = vmatprep.subr.bf16.mxu0 0
    %2783 = vmatpush1.bf16.msra.mxu0 0
    %2784 = vmatprep.subr.bf16.mxu0 0
    %2785 = vmatpush1.bf16.msra.mxu0 0
    %2786 = vmatprep.subr.bf16.mxu0 0
    %2787 = vmatpush1.bf16.msra.mxu0 0
    %2788 = vmatprep.subr.bf16.mxu0 0
    %2789 = vmatpush1.bf16.msra.mxu0 0
    %2790 = vmatprep.subr.bf16.mxu0 0
    %2791 = vmatpush1.bf16.msra.mxu0 0
    %2792 = vmatprep.subr.bf16.mxu0 0
    %2793 = vmatpush1.bf16.msra.mxu0 0
    %2794 = vmatprep.mubr.bf16.mxu0 0
    %2795 = vmatmul.mubr.bf16.gmra.mrb[0].mxu0 %v2650
    %v2796 = vpop.f32.mrb[0].mxu0
    %v2797 = vadd.f32 %v2675, %v2796
    %v2798 = vpop.f32.mrb[0].mxu0
    %v2799 = vadd.f32 %v2679, %v2798
    %v2800 = vpop.f32.mrb[0].mxu0
    %v2801 = vadd.f32 %v2675, %v2800
    %v2802 = vpop.f32.mrb[0].mxu0
    %v2803 = vadd.f32 %v2679, %v2802
    %2804 = vmatprep.mubr.bf16.mxu0 0
    %2805 = vmatmul.mubr.bf16.gmra.mrb[0].mxu0 %v2651
    %v2806 = vpop.f32.mrb[0].mxu0
    %v2807 = vadd.f32 %v2675, %v2806
    %v2808 = vpop.f32.mrb[0].mxu0
    %v2809 = vadd.f32 %v2679, %v2808
    %v2810 = vpop.f32.mrb[0].mxu0
    %v2811 = vadd.f32 %v2675, %v2810
    %v2812 = vpop.f32.mrb[0].mxu0
    %v2813 = vadd.f32 %v2679, %v2812
    %2814 = vmatprep.mubr.bf16.mxu0 0
    %2815 = vmatmul.mubr.bf16.gmra.mrb[0].mxu0 %v2652
    %v2816 = vpop.f32.mrb[0].mxu0
    %v2817 = vadd.f32 %v2675, %v2816
    %v2818 = vpop.f32.mrb[0].mxu0
    %v2819 = vadd.f32 %v2679, %v2818
    %v2820 = vpop.f32.mrb[0].mxu0
    %v2821 = vadd.f32 %v2675, %v2820
    %v2822 = vpop.f32.mrb[0].mxu0
    %v2823 = vadd.f32 %v2679, %v2822
    %2824 = vmatprep.mubr.bf16.mxu0 0
    %2825 = vmatmul.mubr.bf16.gmra.mrb[0].mxu0 %v2653
    %v2826 = vpop.f32.mrb[0].mxu0
    %v2827 = vadd.f32 %v2675, %v2826
    %v2828 = vpop.f32.mrb[0].mxu0
    %v2829 = vadd.f32 %v2679, %v2828
    %v2830 = vpop.f32.mrb[0].mxu0
    %v2831 = vadd.f32 %v2675, %v2830
    %v2832 = vpop.f32.mrb[0].mxu0
    %v2833 = vadd.f32 %v2679, %v2832
    %2834 = vdwg.mxu0
    %vm2835 = vcmp.gt.f32.partialorder %v2797, 0.0
    %vm2836 = vcmp.gt.f32.partialorder %v2801, 0.0
    %vm2837 = vcmp.gt.f32.partialorder %v2807, 0.0
    %vm2838 = vcmp.gt.f32.partialorder %v2811, 0.0
    %vm2839 = vcmp.gt.f32.partialorder %v2817, 0.0
    %vm2840 = vcmp.gt.f32.partialorder %v2821, 0.0
    %vm2841 = vcmp.gt.f32.partialorder %v2827, 0.0
    %vm2842 = vcmp.gt.f32.partialorder %v2831, 0.0
    %v2843 = vmul.f32 %v2797, 1.442695
    %v2844 = vpow.pop %v2843
    %v2845 = vmul.f32 %v2801, 1.442695
    %v2846 = vpow.pop %v2845
    %v2847 = vmul.f32 %v2807, 1.442695
    %v2848 = vpow.pop %v2847
    %v2849 = vmul.f32 %v2811, 1.442695
    %v2850 = vpow.pop %v2849
    %v2851 = vmul.f32 %v2817, 1.442695
    %v2852 = vpow.pop %v2851
    %v2853 = vmul.f32 %v2821, 1.442695
    %v2854 = vpow.pop %v2853
    %v2855 = vmul.f32 %v2827, 1.442695
    %v2856 = vpow.pop %v2855
    %v2857 = vmul.f32 %v2831, 1.442695
    %v2858 = vpow.pop %v2857
    %v2859 = vsub.f32 %v2844, 1.0
    %v2860 = vsub.f32 %v2846, 1.0
    %v2861 = vsub.f32 %v2848, 1.0
    %v2862 = vsub.f32 %v2850, 1.0
    %v2863 = vsub.f32 %v2852, 1.0
    %v2864 = vsub.f32 %v2854, 1.0
    %v2865 = vsub.f32 %v2856, 1.0
    %v2866 = vsub.f32 %v2858, 1.0
    %v2867 = vmul.f32 %v2859, 1.6732632
    %v2868 = vmul.f32 %v2860, 1.6732632
    %v2869 = vmul.f32 %v2861, 1.6732632
    %v2870 = vmul.f32 %v2862, 1.6732632
    %v2871 = vmul.f32 %v2863, 1.6732632
    %v2872 = vmul.f32 %v2864, 1.6732632
    %v2873 = vmul.f32 %v2865, 1.6732632
    %v2874 = vmul.f32 %v2866, 1.6732632
    %v2875 = vsel %vm2835, %v2797, %v2867
    %v2876 = vsel %vm2836, %v2801, %v2868
    %v2877 = vsel %vm2837, %v2807, %v2869
    %v2878 = vsel %vm2838, %v2811, %v2870
    %v2879 = vsel %vm2839, %v2817, %v2871
    %v2880 = vsel %vm2840, %v2821, %v2872
    %v2881 = vsel %vm2841, %v2827, %v2873
    %v2882 = vsel %vm2842, %v2831, %v2874
    %v2883 = vmul.f32 %v2875, 1.050701
    %v2884 = vmul.f32 %v2876, 1.050701
    %v2885 = vmul.f32 %v2877, 1.050701
    %v2886 = vmul.f32 %v2878, 1.050701
    %v2887 = vmul.f32 %v2879, 1.050701
    %v2888 = vmul.f32 %v2880, 1.050701
    %v2889 = vmul.f32 %v2881, 1.050701
    %v2890 = vmul.f32 %v2882, 1.050701
    %v2891 = vmax.f32 %v2799, 0.0
    %v2892 = vmax.f32 %v2803, 0.0
    %v2893 = vmax.f32 %v2809, 0.0
    %v2894 = vmax.f32 %v2813, 0.0
    %v2895 = vmax.f32 %v2819, 0.0
    %v2896 = vmax.f32 %v2823, 0.0
    %v2897 = vmax.f32 %v2829, 0.0
    %v2898 = vmax.f32 %v2833, 0.0
    %v2899 = vpack.c.bf16 %v2884, %v2883
    %v2900 = vpack.c.bf16 %v2892, %v2891
    %v2901 = vpack.c.bf16 %v2886, %v2885
    %v2902 = vpack.c.bf16 %v2894, %v2893
    %v2903 = vpack.c.bf16 %v2888, %v2887
    %v2904 = vpack.c.bf16 %v2896, %v2895
    %v2905 = vpack.c.bf16 %v2890, %v2889
    %v2906 = vpack.c.bf16 %v2898, %v2897
    %v2907 = vld [vmem:[#allocation13] sm:$0xff]
    %v2908 = vld [vmem:[#allocation13 + $0x8] sm:$0xff]
    %v2909 = vld [vmem:[#allocation13 + $0x10] sm:$0xff]
    %v2910 = vld [vmem:[#allocation13 + $0x18] sm:$0xff]
    %v2911 = vld [vmem:[#allocation13 + $0x20] sm:$0xff]
    %v2912 = vld [vmem:[#allocation13 + $0x28] sm:$0xff]
    %v2913 = vld [vmem:[#allocation13 + $0x30] sm:$0xff]
    %v2914 = vld [vmem:[#allocation13 + $0x38] sm:$0xff]
    %v2915 = vld [vmem:[#allocation13 + $0x40] sm:$0xff]
    %v2916 = vld [vmem:[#allocation13 + $0x48] sm:$0xff]
    %v2917 = vld [vmem:[#allocation13 + $0x50] sm:$0xff]
    %v2918 = vld [vmem:[#allocation13 + $0x58] sm:$0xff]
    %v2919 = vld [vmem:[#allocation13 + $0x60] sm:$0xff]
    %v2920 = vld [vmem:[#allocation13 + $0x68] sm:$0xff]
    %v2921 = vld [vmem:[#allocation13 + $0x70] sm:$0xff]
    %v2922 = vld [vmem:[#allocation13 + $0x78] sm:$0xff]
    %v2923 = vld [vmem:[#allocation13 + $0x80] sm:$0xff]
    %v2924 = vld [vmem:[#allocation13 + $0x88] sm:$0xff]
    %v2925 = vld [vmem:[#allocation13 + $0x90] sm:$0xff]
    %v2926 = vld [vmem:[#allocation13 + $0x98] sm:$0xff]
    %v2927 = vld [vmem:[#allocation13 + $0xa0] sm:$0xff]
    %v2928 = vld [vmem:[#allocation13 + $0xa8] sm:$0xff]
    %v2929 = vld [vmem:[#allocation13 + $0xb0] sm:$0xff]
    %v2930 = vld [vmem:[#allocation13 + $0xb8] sm:$0xff]
    %v2931 = vld [vmem:[#allocation13 + $0xc0] sm:$0xff]
    %v2932 = vld [vmem:[#allocation13 + $0xc8] sm:$0xff]
    %v2933 = vld [vmem:[#allocation13 + $0xd0] sm:$0xff]
    %v2934 = vld [vmem:[#allocation13 + $0xd8] sm:$0xff]
    %v2935 = vld [vmem:[#allocation13 + $0xe0] sm:$0xff]
    %v2936 = vld [vmem:[#allocation13 + $0xe8] sm:$0xff]
    %v2937 = vld [vmem:[#allocation13 + $0xf0] sm:$0xff]
    %v2938 = vld [vmem:[#allocation13 + $0xf8] sm:$0xff]
    %v2939 = vld [vmem:[#allocation14] sm:$0x3]
    %v2941 = vlaneseq
    %v2942 = vshrl.u32 %v2941, 7
    %v2943 = vsub.s32 0, %v2942
    %v2944 = vrot.slane %v2939, %v2943
    %v2945 = vlaneseq
    %v2946 = vshrl.u32 %v2945, 7
    %v2947 = vsub.s32 1, %v2946
    %v2948 = vrot.slane %v2939, %v2947
    %v2983 = vunpack.c.l.b16 %v2907
    %v2984 = vunpack.c.h.b16 %v2907
    %v2985 = vunpack.c.l.b16 %v2908
    %v2986 = vunpack.c.h.b16 %v2908
    %v2987 = vunpack.c.l.b16 %v2909
    %v2988 = vunpack.c.h.b16 %v2909
    %v2989 = vunpack.c.l.b16 %v2910
    %v2990 = vunpack.c.h.b16 %v2910
    %v2991 = vunpack.c.l.b16 %v2911
    %v2992 = vunpack.c.h.b16 %v2911
    %v2993 = vunpack.c.l.b16 %v2912
    %v2994 = vunpack.c.h.b16 %v2912
    %v2995 = vunpack.c.l.b16 %v2913
    %v2996 = vunpack.c.h.b16 %v2913
    %v2997 = vunpack.c.l.b16 %v2914
    %v2998 = vunpack.c.h.b16 %v2914
    %v2999 = vunpack.c.l.b16 %v2915
    %v3000 = vunpack.c.h.b16 %v2915
    %v3001 = vunpack.c.l.b16 %v2916
    %v3002 = vunpack.c.h.b16 %v2916
    %v3003 = vunpack.c.l.b16 %v2917
    %v3004 = vunpack.c.h.b16 %v2917
    %v3005 = vunpack.c.l.b16 %v2918
    %v3006 = vunpack.c.h.b16 %v2918
    %v3007 = vunpack.c.l.b16 %v2919
    %v3008 = vunpack.c.h.b16 %v2919
    %v3009 = vunpack.c.l.b16 %v2920
    %v3010 = vunpack.c.h.b16 %v2920
    %v3011 = vunpack.c.l.b16 %v2921
    %v3012 = vunpack.c.h.b16 %v2921
    %v3013 = vunpack.c.l.b16 %v2922
    %v3014 = vunpack.c.h.b16 %v2922
    %v3015 = vunpack.c.l.b16 %v2923
    %v3016 = vunpack.c.h.b16 %v2923
    %v3017 = vunpack.c.l.b16 %v2924
    %v3018 = vunpack.c.h.b16 %v2924
    %v3019 = vunpack.c.l.b16 %v2925
    %v3020 = vunpack.c.h.b16 %v2925
    %v3021 = vunpack.c.l.b16 %v2926
    %v3022 = vunpack.c.h.b16 %v2926
    %v3023 = vunpack.c.l.b16 %v2927
    %v3024 = vunpack.c.h.b16 %v2927
    %v3025 = vunpack.c.l.b16 %v2928
    %v3026 = vunpack.c.h.b16 %v2928
    %v3027 = vunpack.c.l.b16 %v2929
    %v3028 = vunpack.c.h.b16 %v2929
    %v3029 = vunpack.c.l.b16 %v2930
    %v3030 = vunpack.c.h.b16 %v2930
    %v3031 = vunpack.c.l.b16 %v2931
    %v3032 = vunpack.c.h.b16 %v2931
    %v3033 = vunpack.c.l.b16 %v2932
    %v3034 = vunpack.c.h.b16 %v2932
    %v3035 = vunpack.c.l.b16 %v2933
    %v3036 = vunpack.c.h.b16 %v2933
    %v3037 = vunpack.c.l.b16 %v2934
    %v3038 = vunpack.c.h.b16 %v2934
    %v3039 = vunpack.c.l.b16 %v2935
    %v3040 = vunpack.c.h.b16 %v2935
    %v3041 = vunpack.c.l.b16 %v2936
    %v3042 = vunpack.c.h.b16 %v2936
    %v3043 = vunpack.c.l.b16 %v2937
    %v3044 = vunpack.c.h.b16 %v2937
    %v3045 = vunpack.c.l.b16 %v2938
    %v3046 = vunpack.c.h.b16 %v2938
    %v3047 = vpack.c.b16 %v2985, %v2983
    %v3048 = vpack.c.b16 %v2986, %v2984
    %v3049 = vpack.c.b16 %v2989, %v2987
    %v3050 = vpack.c.b16 %v2990, %v2988
    %v3051 = vpack.c.b16 %v2993, %v2991
    %v3052 = vpack.c.b16 %v2994, %v2992
    %v3053 = vpack.c.b16 %v2997, %v2995
    %v3054 = vpack.c.b16 %v2998, %v2996
    %v3055 = vpack.c.b16 %v3001, %v2999
    %v3056 = vpack.c.b16 %v3002, %v3000
    %v3057 = vpack.c.b16 %v3005, %v3003
    %v3058 = vpack.c.b16 %v3006, %v3004
    %v3059 = vpack.c.b16 %v3009, %v3007
    %v3060 = vpack.c.b16 %v3010, %v3008
    %v3061 = vpack.c.b16 %v3013, %v3011
    %v3062 = vpack.c.b16 %v3014, %v3012
    %v3063 = vpack.c.b16 %v3017, %v3015
    %v3064 = vpack.c.b16 %v3018, %v3016
    %v3065 = vpack.c.b16 %v3021, %v3019
    %v3066 = vpack.c.b16 %v3022, %v3020
    %v3067 = vpack.c.b16 %v3025, %v3023
    %v3068 = vpack.c.b16 %v3026, %v3024
    %v3069 = vpack.c.b16 %v3029, %v3027
    %v3070 = vpack.c.b16 %v3030, %v3028
    %v3071 = vpack.c.b16 %v3033, %v3031
    %v3072 = vpack.c.b16 %v3034, %v3032
    %v3073 = vpack.c.b16 %v3037, %v3035
    %v3074 = vpack.c.b16 %v3038, %v3036
    %v3075 = vpack.c.b16 %v3041, %v3039
    %v3076 = vpack.c.b16 %v3042, %v3040
    %v3077 = vpack.c.b16 %v3045, %v3043
    %v3078 = vpack.c.b16 %v3046, %v3044
    %3111 = vmatprep.subr.bf16.mxu0 %v3048
    %3112 = vmatpush1.bf16.msra.mxu0 %v3047
    %3113 = vmatprep.subr.bf16.mxu0 %v3050
    %3114 = vmatpush1.bf16.msra.mxu0 %v3049
    %3115 = vmatprep.subr.bf16.mxu0 %v3052
    %3116 = vmatpush1.bf16.msra.mxu0 %v3051
    %3117 = vmatprep.subr.bf16.mxu0 %v3054
    %3118 = vmatpush1.bf16.msra.mxu0 %v3053
    %3119 = vmatprep.subr.bf16.mxu0 %v3056
    %3120 = vmatpush1.bf16.msra.mxu0 %v3055
    %3121 = vmatprep.subr.bf16.mxu0 %v3058
    %3122 = vmatpush1.bf16.msra.mxu0 %v3057
    %3123 = vmatprep.subr.bf16.mxu0 %v3060
    %3124 = vmatpush1.bf16.msra.mxu0 %v3059
    %3125 = vmatprep.subr.bf16.mxu0 %v3062
    %3126 = vmatpush1.bf16.msra.mxu0 %v3061
    %3127 = vmatprep.subr.bf16.mxu0 %v3064
    %3128 = vmatpush1.bf16.msra.mxu0 %v3063
    %3129 = vmatprep.subr.bf16.mxu0 %v3066
    %3130 = vmatpush1.bf16.msra.mxu0 %v3065
    %3131 = vmatprep.subr.bf16.mxu0 %v3068
    %3132 = vmatpush1.bf16.msra.mxu0 %v3067
    %3133 = vmatprep.subr.bf16.mxu0 %v3070
    %3134 = vmatpush1.bf16.msra.mxu0 %v3069
    %3135 = vmatprep.subr.bf16.mxu0 %v3072
    %3136 = vmatpush1.bf16.msra.mxu0 %v3071
    %3137 = vmatprep.subr.bf16.mxu0 %v3074
    %3138 = vmatpush1.bf16.msra.mxu0 %v3073
    %3139 = vmatprep.subr.bf16.mxu0 %v3076
    %3140 = vmatpush1.bf16.msra.mxu0 %v3075
    %3141 = vmatprep.subr.bf16.mxu0 %v3078
    %3142 = vmatpush1.bf16.msra.mxu0 %v3077
    %3143 = vmatprep.mubr.bf16.mxu0 %v2900
    %3144 = vmatmul.mubr.bf16.gmra.mrb[0].mxu0 %v2899
    %v3145 = vpop.f32.mrb[0].mxu0
    %v3146 = vadd.f32 %v2944, %v3145
    %v3147 = vpop.f32.mrb[0].mxu0
    %v3148 = vadd.f32 %v2948, %v3147
    %v3149 = vpop.f32.mrb[0].mxu0
    %v3150 = vadd.f32 %v2944, %v3149
    %v3151 = vpop.f32.mrb[0].mxu0
    %v3152 = vadd.f32 %v2948, %v3151
    %3153 = vmatprep.mubr.bf16.mxu0 %v2902
    %3154 = vmatmul.mubr.bf16.gmra.mrb[0].mxu0 %v2901
    %v3155 = vpop.f32.mrb[0].mxu0
    %v3156 = vadd.f32 %v2944, %v3155
    %v3157 = vpop.f32.mrb[0].mxu0
    %v3158 = vadd.f32 %v2948, %v3157
    %v3159 = vpop.f32.mrb[0].mxu0
    %v3160 = vadd.f32 %v2944, %v3159
    %v3161 = vpop.f32.mrb[0].mxu0
    %v3162 = vadd.f32 %v2948, %v3161
    %3163 = vmatprep.mubr.bf16.mxu0 %v2904
    %3164 = vmatmul.mubr.bf16.gmra.mrb[0].mxu0 %v2903
    %v3165 = vpop.f32.mrb[0].mxu0
    %v3166 = vadd.f32 %v2944, %v3165
    %v3167 = vpop.f32.mrb[0].mxu0
    %v3168 = vadd.f32 %v2948, %v3167
    %v3169 = vpop.f32.mrb[0].mxu0
    %v3170 = vadd.f32 %v2944, %v3169
    %v3171 = vpop.f32.mrb[0].mxu0
    %v3172 = vadd.f32 %v2948, %v3171
    %3173 = vmatprep.mubr.bf16.mxu0 %v2906
    %3174 = vmatmul.mubr.bf16.gmra.mrb[0].mxu0 %v2905
    %v3175 = vpop.f32.mrb[0].mxu0
    %v3176 = vadd.f32 %v2944, %v3175
    %v3177 = vpop.f32.mrb[0].mxu0
    %v3178 = vadd.f32 %v2948, %v3177
    %v3179 = vpop.f32.mrb[0].mxu0
    %v3180 = vadd.f32 %v2944, %v3179
    %v3181 = vpop.f32.mrb[0].mxu0
    %v3182 = vadd.f32 %v2948, %v3181
    %3183 = vdwg.mxu0
    %vm3184 = vcmp.gt.f32.partialorder %v3146, 0.0
    %vm3185 = vcmp.gt.f32.partialorder %v3150, 0.0
    %vm3186 = vcmp.gt.f32.partialorder %v3156, 0.0
    %vm3187 = vcmp.gt.f32.partialorder %v3160, 0.0
    %vm3188 = vcmp.gt.f32.partialorder %v3166, 0.0
    %vm3189 = vcmp.gt.f32.partialorder %v3170, 0.0
    %vm3190 = vcmp.gt.f32.partialorder %v3176, 0.0
    %vm3191 = vcmp.gt.f32.partialorder %v3180, 0.0
    %v3192 = vmul.f32 %v3146, 1.442695
    %v3193 = vpow.pop %v3192
    %v3194 = vmul.f32 %v3150, 1.442695
    %v3195 = vpow.pop %v3194
    %v3196 = vmul.f32 %v3156, 1.442695
    %v3197 = vpow.pop %v3196
    %v3198 = vmul.f32 %v3160, 1.442695
    %v3199 = vpow.pop %v3198
    %v3200 = vmul.f32 %v3166, 1.442695
    %v3201 = vpow.pop %v3200
    %v3202 = vmul.f32 %v3170, 1.442695
    %v3203 = vpow.pop %v3202
    %v3204 = vmul.f32 %v3176, 1.442695
    %v3205 = vpow.pop %v3204
    %v3206 = vmul.f32 %v3180, 1.442695
    %v3207 = vpow.pop %v3206
    %v3208 = vsub.f32 %v3193, 1.0
    %v3209 = vsub.f32 %v3195, 1.0
    %v3210 = vsub.f32 %v3197, 1.0
    %v3211 = vsub.f32 %v3199, 1.0
    %v3212 = vsub.f32 %v3201, 1.0
    %v3213 = vsub.f32 %v3203, 1.0
    %v3214 = vsub.f32 %v3205, 1.0
    %v3215 = vsub.f32 %v3207, 1.0
    %v3216 = vmul.f32 %v3208, 1.6732632
    %v3217 = vmul.f32 %v3209, 1.6732632
    %v3218 = vmul.f32 %v3210, 1.6732632
    %v3219 = vmul.f32 %v3211, 1.6732632
    %v3220 = vmul.f32 %v3212, 1.6732632
    %v3221 = vmul.f32 %v3213, 1.6732632
    %v3222 = vmul.f32 %v3214, 1.6732632
    %v3223 = vmul.f32 %v3215, 1.6732632
    %v3224 = vsel %vm3184, %v3146, %v3216
    %v3225 = vsel %vm3185, %v3150, %v3217
    %v3226 = vsel %vm3186, %v3156, %v3218
    %v3227 = vsel %vm3187, %v3160, %v3219
    %v3228 = vsel %vm3188, %v3166, %v3220
    %v3229 = vsel %vm3189, %v3170, %v3221
    %v3230 = vsel %vm3190, %v3176, %v3222
    %v3231 = vsel %vm3191, %v3180, %v3223
    %v3232 = vmul.f32 %v3224, 1.050701
    %v3233 = vmul.f32 %v3225, 1.050701
    %v3234 = vmul.f32 %v3226, 1.050701
    %v3235 = vmul.f32 %v3227, 1.050701
    %v3236 = vmul.f32 %v3228, 1.050701
    %v3237 = vmul.f32 %v3229, 1.050701
    %v3238 = vmul.f32 %v3230, 1.050701
    %v3239 = vmul.f32 %v3231, 1.050701
    %v3240 = vmax.f32 %v3148, 0.0
    %v3241 = vmax.f32 %v3152, 0.0
    %v3242 = vmax.f32 %v3158, 0.0
    %v3243 = vmax.f32 %v3162, 0.0
    %v3244 = vmax.f32 %v3168, 0.0
    %v3245 = vmax.f32 %v3172, 0.0
    %v3246 = vmax.f32 %v3178, 0.0
    %v3247 = vmax.f32 %v3182, 0.0
    %v3248 = vpack.c.bf16 %v3233, %v3232
    %v3249 = vpack.c.bf16 %v3241, %v3240
    %v3250 = vpack.c.bf16 %v3235, %v3234
    %v3251 = vpack.c.bf16 %v3243, %v3242
    %v3252 = vpack.c.bf16 %v3237, %v3236
    %v3253 = vpack.c.bf16 %v3245, %v3244
    %v3254 = vpack.c.bf16 %v3239, %v3238
    %v3255 = vpack.c.bf16 %v3247, %v3246
    %v3256 = vld [vmem:[#allocation16] sm:$0xff]
    %v3257 = vld [vmem:[#allocation16 + $0x8] sm:$0xff]
    %v3258 = vld [vmem:[#allocation16 + $0x10] sm:$0xff]
    %v3259 = vld [vmem:[#allocation16 + $0x18] sm:$0xff]
    %v3260 = vld [vmem:[#allocation16 + $0x20] sm:$0xff]
    %v3261 = vld [vmem:[#allocation16 + $0x28] sm:$0xff]
    %v3262 = vld [vmem:[#allocation16 + $0x30] sm:$0xff]
    %v3263 = vld [vmem:[#allocation16 + $0x38] sm:$0xff]
    %v3264 = vld [vmem:[#allocation16 + $0x40] sm:$0xff]
    %v3265 = vld [vmem:[#allocation16 + $0x48] sm:$0xff]
    %v3266 = vld [vmem:[#allocation16 + $0x50] sm:$0xff]
    %v3267 = vld [vmem:[#allocation16 + $0x58] sm:$0xff]
    %v3268 = vld [vmem:[#allocation16 + $0x60] sm:$0xff]
    %v3269 = vld [vmem:[#allocation16 + $0x68] sm:$0xff]
    %v3270 = vld [vmem:[#allocation16 + $0x70] sm:$0xff]
    %v3271 = vld [vmem:[#allocation16 + $0x78] sm:$0xff]
    %v3272 = vld [vmem:[#allocation16 + $0x80] sm:$0xff]
    %v3273 = vld [vmem:[#allocation16 + $0x88] sm:$0xff]
    %v3274 = vld [vmem:[#allocation16 + $0x90] sm:$0xff]
    %v3275 = vld [vmem:[#allocation16 + $0x98] sm:$0xff]
    %v3276 = vld [vmem:[#allocation16 + $0xa0] sm:$0xff]
    %v3277 = vld [vmem:[#allocation16 + $0xa8] sm:$0xff]
    %v3278 = vld [vmem:[#allocation16 + $0xb0] sm:$0xff]
    %v3279 = vld [vmem:[#allocation16 + $0xb8] sm:$0xff]
    %v3280 = vld [vmem:[#allocation16 + $0xc0] sm:$0xff]
    %v3281 = vld [vmem:[#allocation16 + $0xc8] sm:$0xff]
    %v3282 = vld [vmem:[#allocation16 + $0xd0] sm:$0xff]
    %v3283 = vld [vmem:[#allocation16 + $0xd8] sm:$0xff]
    %v3284 = vld [vmem:[#allocation16 + $0xe0] sm:$0xff]
    %v3285 = vld [vmem:[#allocation16 + $0xe8] sm:$0xff]
    %v3286 = vld [vmem:[#allocation16 + $0xf0] sm:$0xff]
    %v3287 = vld [vmem:[#allocation16 + $0xf8] sm:$0xff]
    %v3288 = vld [vmem:[#allocation17] sm:$0x3]
    %v3290 = vlaneseq
    %v3291 = vshrl.u32 %v3290, 7
    %v3292 = vsub.s32 0, %v3291
    %v3293 = vrot.slane %v3288, %v3292
    %v3294 = vlaneseq
    %v3295 = vshrl.u32 %v3294, 7
    %v3296 = vsub.s32 1, %v3295
    %v3297 = vrot.slane %v3288, %v3296
    %v3332 = vunpack.c.l.b16 %v3256
    %v3333 = vunpack.c.h.b16 %v3256
    %v3334 = vunpack.c.l.b16 %v3257
    %v3335 = vunpack.c.h.b16 %v3257
    %v3336 = vunpack.c.l.b16 %v3258
    %v3337 = vunpack.c.h.b16 %v3258
    %v3338 = vunpack.c.l.b16 %v3259
    %v3339 = vunpack.c.h.b16 %v3259
    %v3340 = vunpack.c.l.b16 %v3260
    %v3341 = vunpack.c.h.b16 %v3260
    %v3342 = vunpack.c.l.b16 %v3261
    %v3343 = vunpack.c.h.b16 %v3261
    %v3344 = vunpack.c.l.b16 %v3262
    %v3345 = vunpack.c.h.b16 %v3262
    %v3346 = vunpack.c.l.b16 %v3263
    %v3347 = vunpack.c.h.b16 %v3263
    %v3348 = vunpack.c.l.b16 %v3264
    %v3349 = vunpack.c.h.b16 %v3264
    %v3350 = vunpack.c.l.b16 %v3265
    %v3351 = vunpack.c.h.b16 %v3265
    %v3352 = vunpack.c.l.b16 %v3266
    %v3353 = vunpack.c.h.b16 %v3266
    %v3354 = vunpack.c.l.b16 %v3267
    %v3355 = vunpack.c.h.b16 %v3267
    %v3356 = vunpack.c.l.b16 %v3268
    %v3357 = vunpack.c.h.b16 %v3268
    %v3358 = vunpack.c.l.b16 %v3269
    %v3359 = vunpack.c.h.b16 %v3269
    %v3360 = vunpack.c.l.b16 %v3270
    %v3361 = vunpack.c.h.b16 %v3270
    %v3362 = vunpack.c.l.b16 %v3271
    %v3363 = vunpack.c.h.b16 %v3271
    %v3364 = vunpack.c.l.b16 %v3272
    %v3365 = vunpack.c.h.b16 %v3272
    %v3366 = vunpack.c.l.b16 %v3273
    %v3367 = vunpack.c.h.b16 %v3273
    %v3368 = vunpack.c.l.b16 %v3274
    %v3369 = vunpack.c.h.b16 %v3274
    %v3370 = vunpack.c.l.b16 %v3275
    %v3371 = vunpack.c.h.b16 %v3275
    %v3372 = vunpack.c.l.b16 %v3276
    %v3373 = vunpack.c.h.b16 %v3276
    %v3374 = vunpack.c.l.b16 %v3277
    %v3375 = vunpack.c.h.b16 %v3277
    %v3376 = vunpack.c.l.b16 %v3278
    %v3377 = vunpack.c.h.b16 %v3278
    %v3378 = vunpack.c.l.b16 %v3279
    %v3379 = vunpack.c.h.b16 %v3279
    %v3380 = vunpack.c.l.b16 %v3280
    %v3381 = vunpack.c.h.b16 %v3280
    %v3382 = vunpack.c.l.b16 %v3281
    %v3383 = vunpack.c.h.b16 %v3281
    %v3384 = vunpack.c.l.b16 %v3282
    %v3385 = vunpack.c.h.b16 %v3282
    %v3386 = vunpack.c.l.b16 %v3283
    %v3387 = vunpack.c.h.b16 %v3283
    %v3388 = vunpack.c.l.b16 %v3284
    %v3389 = vunpack.c.h.b16 %v3284
    %v3390 = vunpack.c.l.b16 %v3285
    %v3391 = vunpack.c.h.b16 %v3285
    %v3392 = vunpack.c.l.b16 %v3286
    %v3393 = vunpack.c.h.b16 %v3286
    %v3394 = vunpack.c.l.b16 %v3287
    %v3395 = vunpack.c.h.b16 %v3287
    %v3396 = vpack.c.b16 %v3334, %v3332
    %v3397 = vpack.c.b16 %v3335, %v3333
    %v3398 = vpack.c.b16 %v3338, %v3336
    %v3399 = vpack.c.b16 %v3339, %v3337
    %v3400 = vpack.c.b16 %v3342, %v3340
    %v3401 = vpack.c.b16 %v3343, %v3341
    %v3402 = vpack.c.b16 %v3346, %v3344
    %v3403 = vpack.c.b16 %v3347, %v3345
    %v3404 = vpack.c.b16 %v3350, %v3348
    %v3405 = vpack.c.b16 %v3351, %v3349
    %v3406 = vpack.c.b16 %v3354, %v3352
    %v3407 = vpack.c.b16 %v3355, %v3353
    %v3408 = vpack.c.b16 %v3358, %v3356
    %v3409 = vpack.c.b16 %v3359, %v3357
    %v3410 = vpack.c.b16 %v3362, %v3360
    %v3411 = vpack.c.b16 %v3363, %v3361
    %v3412 = vpack.c.b16 %v3366, %v3364
    %v3413 = vpack.c.b16 %v3367, %v3365
    %v3414 = vpack.c.b16 %v3370, %v3368
    %v3415 = vpack.c.b16 %v3371, %v3369
    %v3416 = vpack.c.b16 %v3374, %v3372
    %v3417 = vpack.c.b16 %v3375, %v3373
    %v3418 = vpack.c.b16 %v3378, %v3376
    %v3419 = vpack.c.b16 %v3379, %v3377
    %v3420 = vpack.c.b16 %v3382, %v3380
    %v3421 = vpack.c.b16 %v3383, %v3381
    %v3422 = vpack.c.b16 %v3386, %v3384
    %v3423 = vpack.c.b16 %v3387, %v3385
    %v3424 = vpack.c.b16 %v3390, %v3388
    %v3425 = vpack.c.b16 %v3391, %v3389
    %v3426 = vpack.c.b16 %v3394, %v3392
    %v3427 = vpack.c.b16 %v3395, %v3393
    %3460 = vmatprep.subr.bf16.mxu0 %v3397
    %3461 = vmatpush1.bf16.msra.mxu0 %v3396
    %3462 = vmatprep.subr.bf16.mxu0 %v3399
    %3463 = vmatpush1.bf16.msra.mxu0 %v3398
    %3464 = vmatprep.subr.bf16.mxu0 %v3401
    %3465 = vmatpush1.bf16.msra.mxu0 %v3400
    %3466 = vmatprep.subr.bf16.mxu0 %v3403
    %3467 = vmatpush1.bf16.msra.mxu0 %v3402
    %3468 = vmatprep.subr.bf16.mxu0 %v3405
    %3469 = vmatpush1.bf16.msra.mxu0 %v3404
    %3470 = vmatprep.subr.bf16.mxu0 %v3407
    %3471 = vmatpush1.bf16.msra.mxu0 %v3406
    %3472 = vmatprep.subr.bf16.mxu0 %v3409
    %3473 = vmatpush1.bf16.msra.mxu0 %v3408
    %3474 = vmatprep.subr.bf16.mxu0 %v3411
    %3475 = vmatpush1.bf16.msra.mxu0 %v3410
    %3476 = vmatprep.subr.bf16.mxu0 %v3413
    %3477 = vmatpush1.bf16.msra.mxu0 %v3412
    %3478 = vmatprep.subr.bf16.mxu0 %v3415
    %3479 = vmatpush1.bf16.msra.mxu0 %v3414
    %3480 = vmatprep.subr.bf16.mxu0 %v3417
    %3481 = vmatpush1.bf16.msra.mxu0 %v3416
    %3482 = vmatprep.subr.bf16.mxu0 %v3419
    %3483 = vmatpush1.bf16.msra.mxu0 %v3418
    %3484 = vmatprep.subr.bf16.mxu0 %v3421
    %3485 = vmatpush1.bf16.msra.mxu0 %v3420
    %3486 = vmatprep.subr.bf16.mxu0 %v3423
    %3487 = vmatpush1.bf16.msra.mxu0 %v3422
    %3488 = vmatprep.subr.bf16.mxu0 %v3425
    %3489 = vmatpush1.bf16.msra.mxu0 %v3424
    %3490 = vmatprep.subr.bf16.mxu0 %v3427
    %3491 = vmatpush1.bf16.msra.mxu0 %v3426
    %3492 = vmatprep.mubr.bf16.mxu0 %v3249
    %3493 = vmatmul.mubr.bf16.gmra.mrb[0].mxu0 %v3248
    %v3494 = vpop.f32.mrb[0].mxu0
    %v3495 = vadd.f32 %v3293, %v3494
    %v3496 = vpop.f32.mrb[0].mxu0
    %v3497 = vadd.f32 %v3297, %v3496
    %v3498 = vpop.f32.mrb[0].mxu0
    %v3499 = vadd.f32 %v3293, %v3498
    %v3500 = vpop.f32.mrb[0].mxu0
    %v3501 = vadd.f32 %v3297, %v3500
    %3502 = vmatprep.mubr.bf16.mxu0 %v3251
    %3503 = vmatmul.mubr.bf16.gmra.mrb[0].mxu0 %v3250
    %v3504 = vpop.f32.mrb[0].mxu0
    %v3505 = vadd.f32 %v3293, %v3504
    %v3506 = vpop.f32.mrb[0].mxu0
    %v3507 = vadd.f32 %v3297, %v3506
    %v3508 = vpop.f32.mrb[0].mxu0
    %v3509 = vadd.f32 %v3293, %v3508
    %v3510 = vpop.f32.mrb[0].mxu0
    %v3511 = vadd.f32 %v3297, %v3510
    %3512 = vmatprep.mubr.bf16.mxu0 %v3253
    %3513 = vmatmul.mubr.bf16.gmra.mrb[0].mxu0 %v3252
    %v3514 = vpop.f32.mrb[0].mxu0
    %v3515 = vadd.f32 %v3293, %v3514
    %v3516 = vpop.f32.mrb[0].mxu0
    %v3517 = vadd.f32 %v3297, %v3516
    %v3518 = vpop.f32.mrb[0].mxu0
    %v3519 = vadd.f32 %v3293, %v3518
    %v3520 = vpop.f32.mrb[0].mxu0
    %v3521 = vadd.f32 %v3297, %v3520
    %3522 = vmatprep.mubr.bf16.mxu0 %v3255
    %3523 = vmatmul.mubr.bf16.gmra.mrb[0].mxu0 %v3254
    %v3524 = vpop.f32.mrb[0].mxu0
    %v3525 = vadd.f32 %v3293, %v3524
    %v3526 = vpop.f32.mrb[0].mxu0
    %v3527 = vadd.f32 %v3297, %v3526
    %v3528 = vpop.f32.mrb[0].mxu0
    %v3529 = vadd.f32 %v3293, %v3528
    %v3530 = vpop.f32.mrb[0].mxu0
    %v3531 = vadd.f32 %v3297, %v3530
    %3532 = vdwg.mxu0
    %3533 = vmax.xlane.f32.xlu0 %v3495
    %v3534 = vpop.xlane.xlu0 %3533
    %3535 = vmax.xlane.f32.xlu0 %v3499
    %v3536 = vpop.xlane.xlu0 %3535
    %3537 = vmax.xlane.f32.xlu0 %v3505
    %v3538 = vpop.xlane.xlu0 %3537
    %3539 = vmax.xlane.f32.xlu0 %v3509
    %v3540 = vpop.xlane.xlu0 %3539
    %3541 = vmax.xlane.f32.xlu0 %v3515
    %v3542 = vpop.xlane.xlu0 %3541
    %3543 = vmax.xlane.f32.xlu0 %v3519
    %v3544 = vpop.xlane.xlu0 %3543
    %3545 = vmax.xlane.f32.xlu0 %v3525
    %v3546 = vpop.xlane.xlu0 %3545
    %3547 = vmax.xlane.f32.xlu0 %v3529
    %v3548 = vpop.xlane.xlu0 %3547
    %v3549 = vsub.f32 %v3495, %v3534
    %v3550 = vsub.f32 %v3499, %v3536
    %v3551 = vsub.f32 %v3505, %v3538
    %v3552 = vsub.f32 %v3509, %v3540
    %v3553 = vsub.f32 %v3515, %v3542
    %v3554 = vsub.f32 %v3519, %v3544
    %v3555 = vsub.f32 %v3525, %v3546
    %v3556 = vsub.f32 %v3529, %v3548
    %v3557 = vmul.f32 %v3549, 1.442695
    %v3558 = vpow.pop %v3557
    %v3559 = vmul.f32 %v3550, 1.442695
    %v3560 = vpow.pop %v3559
    %v3561 = vmul.f32 %v3551, 1.442695
    %v3562 = vpow.pop %v3561
    %v3563 = vmul.f32 %v3552, 1.442695
    %v3564 = vpow.pop %v3563
    %v3565 = vmul.f32 %v3553, 1.442695
    %v3566 = vpow.pop %v3565
    %v3567 = vmul.f32 %v3554, 1.442695
    %v3568 = vpow.pop %v3567
    %v3569 = vmul.f32 %v3555, 1.442695
    %v3570 = vpow.pop %v3569
    %v3571 = vmul.f32 %v3556, 1.442695
    %v3572 = vpow.pop %v3571
    %3573 = vadd.xlane.f32.xlu0 %v3558
    %v3574 = vpop.xlane.xlu0 %3573
    %3575 = vadd.xlane.f32.xlu0 %v3560
    %v3576 = vpop.xlane.xlu0 %3575
    %3577 = vadd.xlane.f32.xlu0 %v3562
    %v3578 = vpop.xlane.xlu0 %3577
    %3579 = vadd.xlane.f32.xlu0 %v3564
    %v3580 = vpop.xlane.xlu0 %3579
    %3581 = vadd.xlane.f32.xlu0 %v3566
    %v3582 = vpop.xlane.xlu0 %3581
    %3583 = vadd.xlane.f32.xlu0 %v3568
    %v3584 = vpop.xlane.xlu0 %3583
    %3585 = vadd.xlane.f32.xlu0 %v3570
    %v3586 = vpop.xlane.xlu0 %3585
    %3587 = vadd.xlane.f32.xlu0 %v3572
    %v3588 = vpop.xlane.xlu0 %3587
    %v3589 = vrcp.pop %v3574
    %v3590 = vmul.f32 %v3558, %v3589
    %v3591 = vrcp.pop %v3576
    %v3592 = vmul.f32 %v3560, %v3591
    %v3593 = vrcp.pop %v3578
    %v3594 = vmul.f32 %v3562, %v3593
    %v3595 = vrcp.pop %v3580
    %v3596 = vmul.f32 %v3564, %v3595
    %v3597 = vrcp.pop %v3582
    %v3598 = vmul.f32 %v3566, %v3597
    %v3599 = vrcp.pop %v3584
    %v3600 = vmul.f32 %v3568, %v3599
    %v3601 = vrcp.pop %v3586
    %v3602 = vmul.f32 %v3570, %v3601
    %v3603 = vrcp.pop %v3588
    %v3604 = vmul.f32 %v3572, %v3603
    %3605 = vst [vmem:[#allocation19] sm:$0xff] %v3590
    %3606 = vst [vmem:[#allocation19 + $0x8] sm:$0xff] %v3592
    %3607 = vst [vmem:[#allocation19 + $0x10] sm:$0xff] %v3594
    %3608 = vst [vmem:[#allocation19 + $0x18] sm:$0xff] %v3596
    %3609 = vst [vmem:[#allocation19 + $0x20] sm:$0xff] %v3598
    %3610 = vst [vmem:[#allocation19 + $0x28] sm:$0xff] %v3600
    %3611 = vst [vmem:[#allocation19 + $0x30] sm:$0xff] %v3602
    %3612 = vst [vmem:[#allocation19 + $0x38] sm:$0xff] %v3604
    %v3613 = vmul.f32 %v3497, 1.442695
    %v3614 = vpow.pop %v3613
    %v3615 = vmul.f32 %v3501, 1.442695
    %v3616 = vpow.pop %v3615
    %v3617 = vmul.f32 %v3507, 1.442695
    %v3618 = vpow.pop %v3617
    %v3619 = vmul.f32 %v3511, 1.442695
    %v3620 = vpow.pop %v3619
    %v3621 = vmul.f32 %v3517, 1.442695
    %v3622 = vpow.pop %v3621
    %v3623 = vmul.f32 %v3521, 1.442695
    %v3624 = vpow.pop %v3623
    %v3625 = vmul.f32 %v3527, 1.442695
    %v3626 = vpow.pop %v3625
    %v3627 = vmul.f32 %v3531, 1.442695
    %v3628 = vpow.pop %v3627
    %3629 = vst [vmem:[#allocation20] sm:$0xff] %v3614
    %3630 = vst [vmem:[#allocation20 + $0x8] sm:$0xff] %v3616
    %3631 = vst [vmem:[#allocation20 + $0x10] sm:$0xff] %v3618
    %3632 = vst [vmem:[#allocation20 + $0x18] sm:$0xff] %v3620
    %3633 = vst [vmem:[#allocation20 + $0x20] sm:$0xff] %v3622
    %3634 = vst [vmem:[#allocation20 + $0x28] sm:$0xff] %v3624
    %3635 = vst [vmem:[#allocation20 + $0x30] sm:$0xff] %v3626
    %3636 = vst [vmem:[#allocation20 + $0x38] sm:$0xff] %v3628
    // Predicated region
    $region70: #{_lambda_.1} parent=1 // pred_check
      _
    $region71: #{_lambda_.1} parent=1 // pred_check_branch
      %3638 = sbr.rel (0) target = $region73
    $region72: #{_lambda_.1} parent=1 // pred_region
      %s3640 = ssub.s32 1024, 1024
      %3641 = vsyncadd [#allocation7], %s3640
      %s3642 = sshll.u32 [#allocation19], 4
      %s3643 = int_to_ptr.vmem [resolvable:$true] %s3642
      %3648 = dma.vmem_to_hbm [thread:$0]  %s3643, 1024, %s8, [#allocation7], 128, 128, 8
    $region73: #{_lambda_.1} parent=1 // pred_fallthru
      _
    // Predicated region
    $region74: #{_lambda_.1} parent=1 // pred_check
      _
    $region75: #{_lambda_.1} parent=1 // pred_check_branch
      %3650 = sbr.rel (0) target = $region77
    $region76: #{_lambda_.1} parent=1 // pred_region
      %s3652 = ssub.s32 1024, 1024
      %3653 = vsyncadd [#allocation21], %s3652
      %s3654 = sshll.u32 [#allocation20], 4
      %s3655 = int_to_ptr.vmem [resolvable:$true] %s3654
      %3660 = dma.vmem_to_hbm [thread:$0]  %s3655, 1024, %s9, [#allocation21], 128, 128, 8
    $region77: #{_lambda_.1} parent=1 // pred_fallthru
      _
    // Predicated region
    $region78: #{_lambda_.1} parent=1 // pred_check
      _
    $region79: #{_lambda_.1} parent=1 // pred_check_branch
      %3662 = sbr.rel (0) target = $region81
    $region80: #{_lambda_.1} parent=1 // pred_region
      %3663 = dma.done [#allocation7], 1024
    $region81: #{_lambda_.1} parent=1 // pred_fallthru
      _
    // Predicated region
    $region82: #{_lambda_.1} parent=1 // pred_check
      _
    $region83: #{_lambda_.1} parent=1 // pred_check_branch
      %3665 = sbr.rel (0) target = $region85
    $region84: #{_lambda_.1} parent=1 // pred_region
      %3666 = dma.done [#allocation21], 1024
    $region85: #{_lambda_.1} parent=1 // pred_fallthru
      _
    %3667 = vsyncpa [#allocation6], 1
    %3668 = vsyncpa [#allocation9], 1
    %3669 = vsyncpa [#allocation12], 1
    %3670 = vsyncpa [#allocation15], 1
    %3671 = vsyncpa [#allocation18], 1
    %3672 = vsyncpa [#allocation7], 1
    %3673 = vsyncpa [#allocation21], 1

</llo_original>
